<compile_context>
chip_gen: v5e
topology: v5e:2x2
jax: 0.10.0
libtpu: 0.0.40
codegen_flags: <defaults>
</compile_context>

<pallas_src>
import functools
import numpy as np
import jax
import jax.numpy as jnp
from jax import lax
from jax.experimental import pallas as pl
from jax.experimental.pallas import tpu as pltpu


def _resblock_kernel(x_ref, s2a_ref, b2a_ref, wf_ref, b2b1_ref, w2b1c_ref,
                     b2b2_ref, w2b2_ref, *outs_and_scratch,
                     H, W, dilation, Cout, emit_xbr):
    if emit_xbr:
        out_ref, xbr_ref, pad_ref = outs_and_scratch
    else:
        out_ref, pad_ref = outs_and_scratch
        xbr_ref = None

    d = dilation
    Cm1p = pad_ref.shape[-1]            # lane-padded bottleneck channels (%128==0)

    x = x_ref[0].astype(jnp.float32)                       # (H*W, Cin)

    # bn_branch2a (folded eval BN) + ReLU -- f32 VPU path (v5e-safe).
    t = jnp.maximum(x * s2a_ref[...] + b2a_ref[...], 0.0)
    if emit_xbr:
        xbr_ref[...] = t.reshape(1, H * W, -1).astype(xbr_ref.dtype)

    # Fused MXU pass: [conv_branch1 | conv_branch2a (bn_branch2b1 scale folded,
    # output lane-padded to Cm1p)]; bf16 operands, f32 accumulation.
    fused = jnp.dot(t.astype(jnp.bfloat16), wf_ref[...],
                    preferred_element_type=jnp.float32)    # (H*W, Cout + Cm1p)
    branch1 = fused[:, :Cout]            # wider slice first -> lane-aligned
    # BN shift + ReLU; padding lanes have zero weight & zero shift -> exact 0.
    a = jnp.maximum(fused[:, Cout:] + b2b1_ref[...], 0.0)  # (H*W, Cm1p)
    # dropout_2b1: p = 0.0 -> identity.

    # conv_branch2b1: 3x3 dilated conv (padding == dilation) as one im2col
    # matmul on a zero-bordered bf16 scratch.  Interior (all Cm1p lanes) is
    # fully rewritten every step; only the four thin border strips need
    # zeroing.  Re-zeroed per step (NOT under pl.when(pid==0)) -- see header:
    # the batch axis is "parallel" and scratch is per-core on multi-TC chips.
    zb = jnp.zeros((d, W + 2 * d, Cm1p), pad_ref.dtype)
    pad_ref[0:d, :, :] = zb
    pad_ref[d + H:d + H + d, :, :] = zb
    zs = jnp.zeros((H, d, Cm1p), pad_ref.dtype)
    pad_ref[d:d + H, 0:d, :] = zs
    pad_ref[d:d + H, d + W:d + W + d, :] = zs
    pad_ref[d:d + H, d:d + W, :] = a.astype(jnp.bfloat16).reshape(H, W, Cm1p)

    # 128-lane slices: the concat is whole-(8,128)-tile stacking (no lane
    # packing), and the big col buffer is already bf16 (no cast).
    cols = [pad_ref[kh * d:kh * d + H, kw * d:kw * d + W, :]
            for kh in range(3) for kw in range(3)]
    col = jnp.concatenate(cols, axis=-1).reshape(H * W, 9 * Cm1p)
    c = jnp.dot(col, w2b1c_ref[...],
                preferred_element_type=jnp.float32)        # (H*W, Cm2), s2b2 folded

    # bn_branch2b2 shift + ReLU (dropout p=0 == id), then conv_branch2b2 (1x1).
    b = jnp.maximum(c + b2b2_ref[...], 0.0)
    branch2 = jnp.dot(b.astype(jnp.bfloat16), w2b2_ref[...],
                      preferred_element_type=jnp.float32)

    out = branch1 + branch2
    out_ref[...] = out.reshape(1, H * W, Cout).astype(out_ref.dtype)


def resblock_bottle_forward(x_nhwc, params, *, dilation=1, get_x_bn_relu=False):
    N, H, W, Cin = x_nhwc.shape
    s2a, b2a, w1, w2a, s2b1, b2b1, w2b1, s2b2, b2b2, w2b2 = params
    Cm1 = w2a.shape[-1]
    Cm2 = w2b2.shape[0]
    Cout = w2b2.shape[-1]
    d = dilation

    # Explicit guards for the implemented configuration (silent misuse fails
    # loudly).  forward() unconditionally calls conv_branch1, so same_shape
    # (in_channels == out_channels, stride 1, no branch1) is not supported.
    assert d >= 1, "dilation must be >= 1"
    assert Cin != Cout, "same_shape / identity-branch path not implemented"
    assert w2b1.shape == (3, 3, Cm1, Cm2), "3x3 HWIO weight expected"
    assert w1.shape == (Cin, Cout) and w2a.shape == (Cin, Cm1)
    # stride == 1 only (see TODO in header); im2col assumes padding == dilation.

    # Lane-pad the bottleneck channel axis to a multiple of 128 so every
    # im2col slice is a whole (8,128) tile.  Padding lanes carry exact zeros
    # end to end (zero weight columns, zero BN shift, zero im2col weight rows).
    Cm1p = max(128, ((Cm1 + 127) // 128) * 128)

    # Trace-time weight prep (free at runtime):
    #  - fuse conv_branch1 with conv_branch2a along the output dim (Cout
    #    first so in-kernel slices stay lane-aligned),
    #  - fold bn_branch2b1 / bn_branch2b2 scales into the conv weights,
    #  - lane-pad the bottleneck channel to Cm1p,
    #  - flatten the 3x3 HWIO weight for the im2col matmul,
    #  - cast matmul weights to bf16 (f32 accumulation in-kernel).
    w2a_s = jnp.pad(w2a * s2b1, ((0, 0), (0, Cm1p - Cm1)))
    w_fused = jnp.concatenate([w1, w2a_s], axis=1).astype(jnp.bfloat16)
    b2b1_p = jnp.pad(b2b1, ((0, 0), (0, Cm1p - Cm1)))
    w2b1_s = jnp.pad(w2b1 * s2b2.reshape(1, 1, 1, Cm2),
                     ((0, 0), (0, 0), (0, Cm1p - Cm1), (0, 0)))
    w2b1_col = w2b1_s.reshape(9 * Cm1p, Cm2).astype(jnp.bfloat16)
    w2b2_b = w2b2.astype(jnp.bfloat16)

    x_flat = x_nhwc.reshape(N, H * W, Cin)

    kernel = functools.partial(_resblock_kernel, H=H, W=W, dilation=d,
                               Cout=Cout, emit_xbr=get_x_bn_relu)

    def full(shape):
        return pl.BlockSpec(shape, lambda n, _r=len(shape): (0,) * _r)

    in_specs = [
        pl.BlockSpec((1, H * W, Cin), lambda n: (n, 0, 0)),
        full(s2a.shape), full(b2a.shape),
        full(w_fused.shape),
        full(b2b1_p.shape), full(w2b1_col.shape),
        full(b2b2.shape), full(w2b2_b.shape),
    ]
    out_specs = [pl.BlockSpec((1, H * W, Cout), lambda n: (n, 0, 0))]
    out_shape = [jax.ShapeDtypeStruct((N, H * W, Cout), x_nhwc.dtype)]
    if get_x_bn_relu:
        out_specs.append(pl.BlockSpec((1, H * W, Cin), lambda n: (n, 0, 0)))
        out_shape.append(jax.ShapeDtypeStruct((N, H * W, Cin), x_nhwc.dtype))

    results = pl.pallas_call(
        kernel,
        grid_spec=pltpu.PrefetchScalarGridSpec(
            num_scalar_prefetch=0,
            grid=(N,),
            in_specs=in_specs,
            out_specs=out_specs,
            scratch_shapes=[
                pltpu.VMEM((H + 2 * d, W + 2 * d, Cm1p), jnp.bfloat16)],
        ),
        out_shape=out_shape,
        compiler_params=pltpu.CompilerParams(
            dimension_semantics=("parallel",),
            vmem_limit_bytes=32 * 1024 * 1024,
        ),
    )(x_flat, s2a, b2a, w_fused, b2b1_p, w2b1_col, b2b2, w2b2_b)

    out = results[0].reshape(N, H, W, Cout)
    if get_x_bn_relu:
        return out, results[1].reshape(N, H, W, Cin)
    return out


def init_params(key, in_channels, out_channels, eps=1e-5):
    """Deterministic synthetic parameters (BN folded to scale/shift)."""
    assert in_channels != out_channels, "same_shape path not implemented"
    Cm1 = out_channels // 4
    Cm2 = out_channels // 2
    keys = jax.random.split(key, 7)

    def bn(k, c):
        kg, kb, km, kv = jax.random.split(k, 4)
        gamma = 1.0 + 0.1 * jax.random.normal(kg, (c,), jnp.float32)
        beta = 0.1 * jax.random.normal(kb, (c,), jnp.float32)
        mean = 0.1 * jax.random.normal(km, (c,), jnp.float32)
        var = jnp.abs(1.0 + 0.1 * jax.random.normal(kv, (c,), jnp.float32))
        scale = gamma / jnp.sqrt(var + eps)
        shift = beta - mean * scale
        return scale.reshape(1, c), shift.reshape(1, c)

    s2a, b2a = bn(keys[0], in_channels)
    s2b1, b2b1 = bn(keys[1], Cm1)
    s2b2, b2b2 = bn(keys[2], Cm2)
    w1 = 0.1 * jax.random.normal(keys[3], (in_channels, out_channels), jnp.float32)
    w2a = 0.1 * jax.random.normal(keys[4], (in_channels, Cm1), jnp.float32)
    w2b1 = 0.1 * jax.random.normal(keys[5], (3, 3, Cm1, Cm2), jnp.float32)  # HWIO
    w2b2 = 0.1 * jax.random.normal(keys[6], (Cm2, out_channels), jnp.float32)
    return (s2a, b2a, w1, w2a, s2b1, b2b1, w2b1, s2b2, b2b2, w2b2)


def ref_forward(x_nhwc, params, dilation=1):
    """Pure-JAX f32 reference of the PyTorch forward (eval BN, dropout p=0)."""
    s2a, b2a, w1, w2a, s2b1, b2b1, w2b1, s2b2, b2b2, w2b2 = params
    d = dilation
    aff = lambda v: v.reshape(1, 1, 1, -1)
    t = jnp.maximum(x_nhwc * aff(s2a) + aff(b2a), 0.0)
    branch1 = jnp.einsum('nhwc,co->nhwo', t, w1)
    a = jnp.einsum('nhwc,co->nhwo', t, w2a)
    a = jnp.maximum(a * aff(s2b1) + aff(b2b1), 0.0)
    c = lax.conv_general_dilated(a, w2b1, window_strides=(1, 1),
                                 padding=[(d, d), (d, d)], rhs_dilation=(d, d),
                                 dimension_numbers=('NHWC', 'HWIO', 'NHWC'))
    b = jnp.maximum(c * aff(s2b2) + aff(b2b2), 0.0)
    branch2 = jnp.einsum('nhwc,co->nhwo', b, w2b2)
    return branch1 + branch2


if __name__ == "__main__":
    N, Cin, H, W = 2, 64, 16, 16
    Cout = 128        # != Cin so conv_branch1 exists; lane-dense (128) output
    dilation = 1

    key = jax.random.PRNGKey(0)
    kx, kp = jax.random.split(key)
    x_nchw = jax.random.normal(kx, (N, Cin, H, W), jnp.float32)   # PyTorch NCHW
    x_nhwc = jnp.transpose(x_nchw, (0, 2, 3, 1))                  # kernel layout
    params = init_params(kp, Cin, Cout)

    out, xbr = resblock_bottle_forward(x_nhwc, params, dilation=dilation,
                                       get_x_bn_relu=True)
    out = jax.block_until_ready(out)

    ref = ref_forward(x_nhwc, params, dilation=dilation)
    s2a, b2a = params[0], params[1]
    xbr_ref = jnp.maximum(
        x_nhwc * s2a.reshape(1, 1, 1, -1) + b2a.reshape(1, 1, 1, -1), 0.0)

    # bf16 MXU operands with f32 accumulation -> loose tolerance vs f32 reference.
    assert np.allclose(np.asarray(out), np.asarray(ref), rtol=3e-2, atol=3e-2), \
        float(jnp.max(jnp.abs(out - ref)))
    assert np.allclose(np.asarray(xbr), np.asarray(xbr_ref), rtol=1e-5, atol=1e-5), \
        float(jnp.max(jnp.abs(xbr - xbr_ref)))

    # Default path: x_bn_relu neither computed nor DMA'd.
    out2 = resblock_bottle_forward(x_nhwc, params, dilation=dilation)
    out2 = jax.block_until_ready(out2)
    assert np.allclose(np.asarray(out2), np.asarray(ref), rtol=3e-2, atol=3e-2), \
        float(jnp.max(jnp.abs(out2 - ref)))

    print("KERNEL_OK")
</pallas_src>

<mosaic_0001>
module attributes {stable_mosaic.version = 11 : i64} {
  func.func @_resblock_kernel(%arg0: i32, %arg1: memref<1x256x64xf32, #tpu.memory_space<vmem>>, %arg2: memref<1x64xf32, #tpu.memory_space<vmem>>, %arg3: memref<1x64xf32, #tpu.memory_space<vmem>>, %arg4: memref<64x256xbf16, #tpu.memory_space<vmem>>, %arg5: memref<1x128xf32, #tpu.memory_space<vmem>>, %arg6: memref<1152x64xbf16, #tpu.memory_space<vmem>>, %arg7: memref<1x64xf32, #tpu.memory_space<vmem>>, %arg8: memref<64x128xbf16, #tpu.memory_space<vmem>>, %arg9: memref<1x256x128xf32, #tpu.memory_space<vmem>>, %arg10: memref<1x256x64xf32, #tpu.memory_space<vmem>>, %arg11: memref<18x18x128xbf16, #tpu.memory_space<vmem>>) attributes {dimension_semantics = [#tpu.dimension_semantics<parallel>], iteration_bounds = array<i64: 2>, scalar_prefetch = 0 : i64, scratch_operands = 1 : i64, tpu.core_type = #tpu.core_type<tc>, window_params = [{transform_indices = @transform_0, window_bounds = array<i64: 1, 256, 64>}, {pipeline_mode = #tpu.pipeline_mode<synchronous>, transform_indices = @transform_1, window_bounds = array<i64: 1, 64>}, {pipeline_mode = #tpu.pipeline_mode<synchronous>, transform_indices = @transform_2, window_bounds = array<i64: 1, 64>}, {pipeline_mode = #tpu.pipeline_mode<synchronous>, transform_indices = @transform_3, window_bounds = array<i64: 64, 256>}, {pipeline_mode = #tpu.pipeline_mode<synchronous>, transform_indices = @transform_4, window_bounds = array<i64: 1, 128>}, {pipeline_mode = #tpu.pipeline_mode<synchronous>, transform_indices = @transform_5, window_bounds = array<i64: 1152, 64>}, {pipeline_mode = #tpu.pipeline_mode<synchronous>, transform_indices = @transform_6, window_bounds = array<i64: 1, 64>}, {pipeline_mode = #tpu.pipeline_mode<synchronous>, transform_indices = @transform_7, window_bounds = array<i64: 64, 128>}, {transform_indices = @transform_8, window_bounds = array<i64: 1, 256, 128>}, {transform_indices = @transform_9, window_bounds = array<i64: 1, 256, 64>}]} {
    %c0 = arith.constant 0 : index
    %c0_0 = arith.constant 0 : index
    %c0_1 = arith.constant 0 : index
    %0 = vector.load %arg1[%c0, %c0_0, %c0_1] : memref<1x256x64xf32, #tpu.memory_space<vmem>>, vector<1x256x64xf32>
    %1 = vector.shape_cast %0 : vector<1x256x64xf32> to vector<256x64xf32>
    %c0_2 = arith.constant 0 : index
    %c0_3 = arith.constant 0 : index
    %2 = vector.load %arg2[%c0_2, %c0_3] : memref<1x64xf32, #tpu.memory_space<vmem>>, vector<1x64xf32>
    %3 = vector.broadcast %2 : vector<1x64xf32> to vector<256x64xf32>
    %4 = arith.mulf %1, %3 : vector<256x64xf32>
    %c0_4 = arith.constant 0 : index
    %c0_5 = arith.constant 0 : index
    %5 = vector.load %arg3[%c0_4, %c0_5] : memref<1x64xf32, #tpu.memory_space<vmem>>, vector<1x64xf32>
    %6 = vector.broadcast %5 : vector<1x64xf32> to vector<256x64xf32>
    %7 = arith.addf %4, %6 : vector<256x64xf32>
    %cst = arith.constant 0.000000e+00 : f32
    %8 = vector.broadcast %cst : f32 to vector<256x64xf32>
    %9 = arith.maximumf %7, %8 : vector<256x64xf32>
    %10 = vector.shape_cast %9 : vector<256x64xf32> to vector<1x256x64xf32>
    %c0_6 = arith.constant 0 : index
    %c0_7 = arith.constant 0 : index
    %c0_8 = arith.constant 0 : index
    %11 = vector.load %arg10[%c0_6, %c0_7, %c0_8] : memref<1x256x64xf32, #tpu.memory_space<vmem>>, vector<1x256x64xf32>
    tpu.vector_store %arg10[%c0_6, %c0_7, %c0_8], %10 {strides = array<i32>} : memref<1x256x64xf32, #tpu.memory_space<vmem>>, vector<1x256x64xf32>,
    %12 = arith.truncf %9 : vector<256x64xf32> to vector<256x64xbf16>
    %c0_9 = arith.constant 0 : index
    %c0_10 = arith.constant 0 : index
    %13 = vector.load %arg4[%c0_9, %c0_10] : memref<64x256xbf16, #tpu.memory_space<vmem>>, vector<64x256xbf16>
    %cst_11 = arith.constant dense<0.000000e+00> : vector<256x256xf32>
    %14 = tpu.matmul %12, %13, %cst_11 {dimension_numbers = #tpu.dot_dimension_numbers<[1], [0], [0], [1], [0, 0, 1, 1], [], []>} : vector<256x64xbf16>, vector<64x256xbf16>, vector<256x256xf32> -> vector<256x256xf32>
    %15 = vector.extract_strided_slice %14 {offsets = [0, 0], sizes = [256, 128], strides = [1, 1]} : vector<256x256xf32> to vector<256x128xf32>
    %16 = vector.extract_strided_slice %14 {offsets = [0, 128], sizes = [256, 128], strides = [1, 1]} : vector<256x256xf32> to vector<256x128xf32>
    %c0_12 = arith.constant 0 : index
    %c0_13 = arith.constant 0 : index
    %17 = vector.load %arg5[%c0_12, %c0_13] : memref<1x128xf32, #tpu.memory_space<vmem>>, vector<1x128xf32>
    %18 = vector.broadcast %17 : vector<1x128xf32> to vector<256x128xf32>
    %19 = arith.addf %16, %18 : vector<256x128xf32>
    %cst_14 = arith.constant 0.000000e+00 : f32
    %20 = vector.broadcast %cst_14 : f32 to vector<256x128xf32>
    %21 = arith.maximumf %19, %20 : vector<256x128xf32>
    %cst_15 = arith.constant 0.000000e+00 : bf16
    %22 = vector.broadcast %cst_15 : bf16 to vector<1x18x128xbf16>
    %c0_16 = arith.constant 0 : index
    %c0_17 = arith.constant 0 : index
    %c0_18 = arith.constant 0 : index
    %23 = vector.load %arg11[%c0_16, %c0_17, %c0_18] : memref<18x18x128xbf16, #tpu.memory_space<vmem>>, vector<1x18x128xbf16>
    tpu.vector_store %arg11[%c0_16, %c0_17, %c0_18], %22 {strides = array<i32>} : memref<18x18x128xbf16, #tpu.memory_space<vmem>>, vector<1x18x128xbf16>,
    %c17 = arith.constant 17 : index
    %c0_19 = arith.constant 0 : index
    %c0_20 = arith.constant 0 : index
    %24 = vector.load %arg11[%c17, %c0_19, %c0_20] : memref<18x18x128xbf16, #tpu.memory_space<vmem>>, vector<1x18x128xbf16>
    tpu.vector_store %arg11[%c17, %c0_19, %c0_20], %22 {strides = array<i32>} : memref<18x18x128xbf16, #tpu.memory_space<vmem>>, vector<1x18x128xbf16>,
    %cst_21 = arith.constant 0.000000e+00 : bf16
    %25 = vector.broadcast %cst_21 : bf16 to vector<16x1x128xbf16>
    %c1 = arith.constant 1 : index
    %c0_22 = arith.constant 0 : index
    %c0_23 = arith.constant 0 : index
    %26 = vector.load %arg11[%c1, %c0_22, %c0_23] : memref<18x18x128xbf16, #tpu.memory_space<vmem>>, vector<16x1x128xbf16>
    tpu.vector_store %arg11[%c1, %c0_22, %c0_23], %25 {strides = array<i32>} : memref<18x18x128xbf16, #tpu.memory_space<vmem>>, vector<16x1x128xbf16>,
    %c1_24 = arith.constant 1 : index
    %c17_25 = arith.constant 17 : index
    %c0_26 = arith.constant 0 : index
    %27 = vector.load %arg11[%c1_24, %c17_25, %c0_26] : memref<18x18x128xbf16, #tpu.memory_space<vmem>>, vector<16x1x128xbf16>
    tpu.vector_store %arg11[%c1_24, %c17_25, %c0_26], %25 {strides = array<i32>} : memref<18x18x128xbf16, #tpu.memory_space<vmem>>, vector<16x1x128xbf16>,
    %28 = arith.truncf %21 : vector<256x128xf32> to vector<256x128xbf16>
    %29 = vector.shape_cast %28 : vector<256x128xbf16> to vector<16x16x128xbf16>
    %c1_27 = arith.constant 1 : index
    %c1_28 = arith.constant 1 : index
    %c0_29 = arith.constant 0 : index
    %30 = vector.load %arg11[%c1_27, %c1_28, %c0_29] : memref<18x18x128xbf16, #tpu.memory_space<vmem>>, vector<16x16x128xbf16>
    tpu.vector_store %arg11[%c1_27, %c1_28, %c0_29], %29 {strides = array<i32>} : memref<18x18x128xbf16, #tpu.memory_space<vmem>>, vector<16x16x128xbf16>,
    %c0_30 = arith.constant 0 : index
    %c0_31 = arith.constant 0 : index
    %c0_32 = arith.constant 0 : index
    %31 = vector.load %arg11[%c0_30, %c0_31, %c0_32] : memref<18x18x128xbf16, #tpu.memory_space<vmem>>, vector<16x16x128xbf16>
    %c0_33 = arith.constant 0 : index
    %c1_34 = arith.constant 1 : index
    %c0_35 = arith.constant 0 : index
    %32 = vector.load %arg11[%c0_33, %c1_34, %c0_35] : memref<18x18x128xbf16, #tpu.memory_space<vmem>>, vector<16x16x128xbf16>
    %c0_36 = arith.constant 0 : index
    %c2 = arith.constant 2 : index
    %c0_37 = arith.constant 0 : index
    %33 = vector.load %arg11[%c0_36, %c2, %c0_37] : memref<18x18x128xbf16, #tpu.memory_space<vmem>>, vector<16x16x128xbf16>
    %c1_38 = arith.constant 1 : index
    %c0_39 = arith.constant 0 : index
    %c0_40 = arith.constant 0 : index
    %34 = vector.load %arg11[%c1_38, %c0_39, %c0_40] : memref<18x18x128xbf16, #tpu.memory_space<vmem>>, vector<16x16x128xbf16>
    %c1_41 = arith.constant 1 : index
    %c1_42 = arith.constant 1 : index
    %c0_43 = arith.constant 0 : index
    %35 = vector.load %arg11[%c1_41, %c1_42, %c0_43] : memref<18x18x128xbf16, #tpu.memory_space<vmem>>, vector<16x16x128xbf16>
    %c1_44 = arith.constant 1 : index
    %c2_45 = arith.constant 2 : index
    %c0_46 = arith.constant 0 : index
    %36 = vector.load %arg11[%c1_44, %c2_45, %c0_46] : memref<18x18x128xbf16, #tpu.memory_space<vmem>>, vector<16x16x128xbf16>
    %c2_47 = arith.constant 2 : index
    %c0_48 = arith.constant 0 : index
    %c0_49 = arith.constant 0 : index
    %37 = vector.load %arg11[%c2_47, %c0_48, %c0_49] : memref<18x18x128xbf16, #tpu.memory_space<vmem>>, vector<16x16x128xbf16>
    %c2_50 = arith.constant 2 : index
    %c1_51 = arith.constant 1 : index
    %c0_52 = arith.constant 0 : index
    %38 = vector.load %arg11[%c2_50, %c1_51, %c0_52] : memref<18x18x128xbf16, #tpu.memory_space<vmem>>, vector<16x16x128xbf16>
    %c2_53 = arith.constant 2 : index
    %c2_54 = arith.constant 2 : index
    %c0_55 = arith.constant 0 : index
    %39 = vector.load %arg11[%c2_53, %c2_54, %c0_55] : memref<18x18x128xbf16, #tpu.memory_space<vmem>>, vector<16x16x128xbf16>
    %40 = tpu.concatenate %31, %32, %33, %34, %35, %36, %37, %38, %39 in 2 : vector<16x16x128xbf16>, vector<16x16x128xbf16>, vector<16x16x128xbf16>, vector<16x16x128xbf16>, vector<16x16x128xbf16>, vector<16x16x128xbf16>, vector<16x16x128xbf16>, vector<16x16x128xbf16>, vector<16x16x128xbf16> -> vector<16x16x1152xbf16>
    %41 = vector.shape_cast %40 : vector<16x16x1152xbf16> to vector<256x1152xbf16>
    %c0_56 = arith.constant 0 : index
    %c0_57 = arith.constant 0 : index
    %42 = vector.load %arg6[%c0_56, %c0_57] : memref<1152x64xbf16, #tpu.memory_space<vmem>>, vector<1152x64xbf16>
    %cst_58 = arith.constant dense<0.000000e+00> : vector<256x64xf32>
    %43 = tpu.matmul %41, %42, %cst_58 {dimension_numbers = #tpu.dot_dimension_numbers<[1], [0], [0], [1], [0, 0, 1, 1], [], []>} : vector<256x1152xbf16>, vector<1152x64xbf16>, vector<256x64xf32> -> vector<256x64xf32>
    %c0_59 = arith.constant 0 : index
    %c0_60 = arith.constant 0 : index
    %44 = vector.load %arg7[%c0_59, %c0_60] : memref<1x64xf32, #tpu.memory_space<vmem>>, vector<1x64xf32>
    %45 = vector.broadcast %44 : vector<1x64xf32> to vector<256x64xf32>
    %46 = arith.addf %43, %45 : vector<256x64xf32>
    %cst_61 = arith.constant 0.000000e+00 : f32
    %47 = vector.broadcast %cst_61 : f32 to vector<256x64xf32>
    %48 = arith.maximumf %46, %47 : vector<256x64xf32>
    %49 = arith.truncf %48 : vector<256x64xf32> to vector<256x64xbf16>
    %c0_62 = arith.constant 0 : index
    %c0_63 = arith.constant 0 : index
    %50 = vector.load %arg8[%c0_62, %c0_63] : memref<64x128xbf16, #tpu.memory_space<vmem>>, vector<64x128xbf16>
    %cst_64 = arith.constant dense<0.000000e+00> : vector<256x128xf32>
    %51 = tpu.matmul %49, %50, %cst_64 {dimension_numbers = #tpu.dot_dimension_numbers<[1], [0], [0], [1], [0, 0, 1, 1], [], []>} : vector<256x64xbf16>, vector<64x128xbf16>, vector<256x128xf32> -> vector<256x128xf32>
    %52 = arith.addf %15, %51 : vector<256x128xf32>
    %53 = vector.shape_cast %52 : vector<256x128xf32> to vector<1x256x128xf32>
    %c0_65 = arith.constant 0 : index
    %c0_66 = arith.constant 0 : index
    %c0_67 = arith.constant 0 : index
    %54 = vector.load %arg9[%c0_65, %c0_66, %c0_67] : memref<1x256x128xf32, #tpu.memory_space<vmem>>, vector<1x256x128xf32>
    tpu.vector_store %arg9[%c0_65, %c0_66, %c0_67], %53 {strides = array<i32>} : memref<1x256x128xf32, #tpu.memory_space<vmem>>, vector<1x256x128xf32>,
    return
  }
  func.func @transform_0(%arg0: i32) -> (i32, i32, i32) {
    %c0_i32 = arith.constant 0 : i32
    %c0_i32_0 = arith.constant 0 : i32
    %c0_i32_1 = arith.constant 0 : i32
    return %arg0, %c0_i32, %c0_i32_0 : i32, i32, i32
  }
  func.func @transform_1(%arg0: i32) -> (i32, i32) {
    %c0_i32 = arith.constant 0 : i32
    %c0_i32_0 = arith.constant 0 : i32
    %c0_i32_1 = arith.constant 0 : i32
    return %c0_i32, %c0_i32_0 : i32, i32
  }
  func.func @transform_2(%arg0: i32) -> (i32, i32) {
    %c0_i32 = arith.constant 0 : i32
    %c0_i32_0 = arith.constant 0 : i32
    %c0_i32_1 = arith.constant 0 : i32
    return %c0_i32, %c0_i32_0 : i32, i32
  }
  func.func @transform_3(%arg0: i32) -> (i32, i32) {
    %c0_i32 = arith.constant 0 : i32
    %c0_i32_0 = arith.constant 0 : i32
    %c0_i32_1 = arith.constant 0 : i32
    return %c0_i32, %c0_i32_0 : i32, i32
  }
  func.func @transform_4(%arg0: i32) -> (i32, i32) {
    %c0_i32 = arith.constant 0 : i32
    %c0_i32_0 = arith.constant 0 : i32
    %c0_i32_1 = arith.constant 0 : i32
    return %c0_i32, %c0_i32_0 : i32, i32
  }
  func.func @transform_5(%arg0: i32) -> (i32, i32) {
    %c0_i32 = arith.constant 0 : i32
    %c0_i32_0 = arith.constant 0 : i32
    %c0_i32_1 = arith.constant 0 : i32
    return %c0_i32, %c0_i32_0 : i32, i32
  }
  func.func @transform_6(%arg0: i32) -> (i32, i32) {
    %c0_i32 = arith.constant 0 : i32
    %c0_i32_0 = arith.constant 0 : i32
    %c0_i32_1 = arith.constant 0 : i32
    return %c0_i32, %c0_i32_0 : i32, i32
  }
  func.func @transform_7(%arg0: i32) -> (i32, i32) {
    %c0_i32 = arith.constant 0 : i32
    %c0_i32_0 = arith.constant 0 : i32
    %c0_i32_1 = arith.constant 0 : i32
    return %c0_i32, %c0_i32_0 : i32, i32
  }
  func.func @transform_8(%arg0: i32) -> (i32, i32, i32) {
    %c0_i32 = arith.constant 0 : i32
    %c0_i32_0 = arith.constant 0 : i32
    %c0_i32_1 = arith.constant 0 : i32
    return %arg0, %c0_i32, %c0_i32_0 : i32, i32, i32
  }
  func.func @transform_9(%arg0: i32) -> (i32, i32, i32) {
    %c0_i32 = arith.constant 0 : i32
    %c0_i32_0 = arith.constant 0 : i32
    %c0_i32_1 = arith.constant 0 : i32
    return %arg0, %c0_i32, %c0_i32_0 : i32, i32, i32
  }
}

</mosaic_0001>

<llo_original>
// kernel: tpu_custom_call.1
$region0: #{tpu_custom_call.1}
  #allocation0 [shape = 'u32[]', space=smem, size = 0x4, offset = 0x4, fixed_abs, tag = 'smem constant byte address 0x4 - core index']
  #allocation1 [shape = 'u32[72,128]{1,0:T(1,128)}', space=vmem, size = 0x9000, scoped, tag = 'internal scratch']
  #allocation2 [shape = 'bf16[18,18,128]{2,1,0:T(8,128)(2,1)}', space=vmem, size = 0x1b000, scoped, tag = 'scratch operand']
  %s0 = inlined_call_operand.vmem [shape: f32[2,256,64], index: 0, kind: input, shape index: {}]
  %s1 = inlined_call_operand.vmem [shape: f32[1,64], index: 1, kind: input, shape index: {}]
  %s2 = inlined_call_operand.vmem [shape: f32[1,64], index: 2, kind: input, shape index: {}]
  %s3 = inlined_call_operand.vmem [shape: bf16[64,256], index: 3, kind: input, shape index: {}]
  %s4 = inlined_call_operand.vmem [shape: f32[1,128], index: 4, kind: input, shape index: {}]
  %s5 = inlined_call_operand.vmem [shape: bf16[1152,64], index: 5, kind: input, shape index: {}]
  %s6 = inlined_call_operand.vmem [shape: f32[1,64], index: 6, kind: input, shape index: {}]
  %s7 = inlined_call_operand.vmem [shape: bf16[64,128], index: 7, kind: input, shape index: {}]
  %s8 = inlined_call_operand.hbm [shape: f32[2,256,128], index: 8, kind: output, shape index: {0}]
  %s9 = inlined_call_operand.vmem [shape: f32[2,256,64], index: 9, kind: output, shape index: {1}]
  %10 = xla_tuple %s8, %s9
  %s11 = sld [smem:[#allocation0]]
  $region73: #{tpu_custom_call.1} parent=0
    _
  %s13 = ssub.s32 1, %s11
  %s14 = scalar_select 0, %s13, %s11
  $region1: #{tpu_custom_call.1} parent=0
    #allocation3 [shape = 'u8[262144]{0}', space=vmem, size = 0x40000, scoped, tag = 'output window, operand 0']
    #allocation4 [shape = 's32[2]{0}', space=sflag, size = 0x8, scoped, tag = 'scoped memory for tpu_custom_call.1']
    %15 = vsyncpa [#allocation4], 0
    %s16 = scalar_lea.sflag [#allocation4], 1
    %17 = vsyncpa %s16, 0
    loop: start=0, step=1, limit=4
    $region2: #{tpu_custom_call.1} parent=1 // loop_pre_header
      _
    $region3: #{tpu_custom_call.1} parent=1 // loop_header
      %s19 = sphi 0, %s23
      %p20 = scmp.ge.s32.totalorder %s19, 4
      %s29 = sphi 0, %s31
      %s32 = sphi 0, %s29
      %s33 = sphi 0, %s32
      %s49 = sphi 0, %s33
      %s53 = sphi 0, %s53
      %s55 = sphi 0, %s53
      %s56 = sphi 0, %s55
      %s70 = sphi 0, %s56
      %s74 = sphi 0, %s74
      %s76 = sphi 0, %s74
      %s77 = sphi 0, %s76
      %s91 = sphi 0, %s77
      %s95 = sphi 0, %s95
      %s97 = sphi 0, %s95
      %s98 = sphi 0, %s97
      %s112 = sphi 0, %s98
      %s116 = sphi 0, %s116
      %s118 = sphi 0, %s116
      %s119 = sphi 0, %s118
      %s133 = sphi 0, %s119
      %s137 = sphi 0, %s137
      %s139 = sphi 0, %s137
      %s140 = sphi 0, %s139
      %s154 = sphi 0, %s140
      %s158 = sphi 0, %s158
      %s160 = sphi 0, %s158
      %s161 = sphi 0, %s160
      %s175 = sphi 0, %s161
      %s179 = sphi 0, %s179
      %s181 = sphi 0, %s179
      %s182 = sphi 0, %s181
      %s196 = sphi 0, %s182
      %s202 = sphi 0, %s204
      %s205 = sphi 0, %s202
      %s206 = sphi 0, %s205
      %s222 = sphi 0, %s206
      %s228 = sphi 0, %s230
      %s231 = sphi 0, %s228
      %s232 = sphi 0, %s231
      %s248 = sphi 0, %s232
    $region4: #{tpu_custom_call.1} parent=1 // loop_header_branch
      %22 = sbr.rel (%p20) target = $region8
    $region5: #{tpu_custom_call.1} parent=1 // loop_body
      %s24 = ssub.s32 %s19, 1
      %s25 = ssub.s32 %s19, 2
      %s26 = sadd.s32 %s19, 1
      %s27 = ssub.s32 %s19, %s26
      %p28 = scmp.eq.s32.totalorder %s27, 0
      %s30 = sadd.s32 %s29, 1
      %s31 = scalar_select %p28, %s29, %s30
      %p34 = pneg %p28
      %p35 = scmp.eq.s32.totalorder %s19, 1
      %p36 = por %p34, %p35
      %p37 = scmp.ne.s32.totalorder %s29, %s32
      %p38 = scmp.eq.s32.totalorder %s19, 0
      %p39 = por %p37, %p38
      %p40 = scmp.ne.s32.totalorder %s29, %s32
      %p41 = scmp.eq.s32.totalorder %s24, 1
      %p42 = por %p40, %p41
      %p43 = scmp.ne.s32.totalorder %s32, %s33
      %p44 = scmp.eq.s32.totalorder %s24, 0
      %p45 = por %p43, %p44
      %p46 = scmp.ne.s32.totalorder %s32, %s33
      %p47 = scmp.eq.s32.totalorder %s25, 1
      %p48 = por %p46, %p47
      %p50 = scmp.ne.s32.totalorder %s33, %s49
      %p51 = scmp.eq.s32.totalorder %s25, 0
      %p52 = por %p50, %p51
      %s54 = sadd.s32 %s53, 1
      %p57 = scmp.eq.s32.totalorder %s19, 1
      %p58 = scmp.ne.s32.totalorder %s53, %s55
      %p59 = scmp.eq.s32.totalorder %s19, 0
      %p60 = por %p58, %p59
      %p61 = scmp.ne.s32.totalorder %s53, %s55
      %p62 = scmp.eq.s32.totalorder %s24, 1
      %p63 = por %p61, %p62
      %p64 = scmp.ne.s32.totalorder %s55, %s56
      %p65 = scmp.eq.s32.totalorder %s24, 0
      %p66 = por %p64, %p65
      %p67 = scmp.ne.s32.totalorder %s55, %s56
      %p68 = scmp.eq.s32.totalorder %s25, 1
      %p69 = por %p67, %p68
      %p71 = scmp.ne.s32.totalorder %s56, %s70
      %p72 = scmp.eq.s32.totalorder %s25, 0
      %p73 = por %p71, %p72
      %s75 = sadd.s32 %s74, 1
      %p78 = scmp.eq.s32.totalorder %s19, 1
      %p79 = scmp.ne.s32.totalorder %s74, %s76
      %p80 = scmp.eq.s32.totalorder %s19, 0
      %p81 = por %p79, %p80
      %p82 = scmp.ne.s32.totalorder %s74, %s76
      %p83 = scmp.eq.s32.totalorder %s24, 1
      %p84 = por %p82, %p83
      %p85 = scmp.ne.s32.totalorder %s76, %s77
      %p86 = scmp.eq.s32.totalorder %s24, 0
      %p87 = por %p85, %p86
      %p88 = scmp.ne.s32.totalorder %s76, %s77
      %p89 = scmp.eq.s32.totalorder %s25, 1
      %p90 = por %p88, %p89
      %p92 = scmp.ne.s32.totalorder %s77, %s91
      %p93 = scmp.eq.s32.totalorder %s25, 0
      %p94 = por %p92, %p93
      %s96 = sadd.s32 %s95, 1
      %p99 = scmp.eq.s32.totalorder %s19, 1
      %p100 = scmp.ne.s32.totalorder %s95, %s97
      %p101 = scmp.eq.s32.totalorder %s19, 0
      %p102 = por %p100, %p101
      %p103 = scmp.ne.s32.totalorder %s95, %s97
      %p104 = scmp.eq.s32.totalorder %s24, 1
      %p105 = por %p103, %p104
      %p106 = scmp.ne.s32.totalorder %s97, %s98
      %p107 = scmp.eq.s32.totalorder %s24, 0
      %p108 = por %p106, %p107
      %p109 = scmp.ne.s32.totalorder %s97, %s98
      %p110 = scmp.eq.s32.totalorder %s25, 1
      %p111 = por %p109, %p110
      %p113 = scmp.ne.s32.totalorder %s98, %s112
      %p114 = scmp.eq.s32.totalorder %s25, 0
      %p115 = por %p113, %p114
      %s117 = sadd.s32 %s116, 1
      %p120 = scmp.eq.s32.totalorder %s19, 1
      %p121 = scmp.ne.s32.totalorder %s116, %s118
      %p122 = scmp.eq.s32.totalorder %s19, 0
      %p123 = por %p121, %p122
      %p124 = scmp.ne.s32.totalorder %s116, %s118
      %p125 = scmp.eq.s32.totalorder %s24, 1
      %p126 = por %p124, %p125
      %p127 = scmp.ne.s32.totalorder %s118, %s119
      %p128 = scmp.eq.s32.totalorder %s24, 0
      %p129 = por %p127, %p128
      %p130 = scmp.ne.s32.totalorder %s118, %s119
      %p131 = scmp.eq.s32.totalorder %s25, 1
      %p132 = por %p130, %p131
      %p134 = scmp.ne.s32.totalorder %s119, %s133
      %p135 = scmp.eq.s32.totalorder %s25, 0
      %p136 = por %p134, %p135
      %s138 = sadd.s32 %s137, 1
      %p141 = scmp.eq.s32.totalorder %s19, 1
      %p142 = scmp.ne.s32.totalorder %s137, %s139
      %p143 = scmp.eq.s32.totalorder %s19, 0
      %p144 = por %p142, %p143
      %p145 = scmp.ne.s32.totalorder %s137, %s139
      %p146 = scmp.eq.s32.totalorder %s24, 1
      %p147 = por %p145, %p146
      %p148 = scmp.ne.s32.totalorder %s139, %s140
      %p149 = scmp.eq.s32.totalorder %s24, 0
      %p150 = por %p148, %p149
      %p151 = scmp.ne.s32.totalorder %s139, %s140
      %p152 = scmp.eq.s32.totalorder %s25, 1
      %p153 = por %p151, %p152
      %p155 = scmp.ne.s32.totalorder %s140, %s154
      %p156 = scmp.eq.s32.totalorder %s25, 0
      %p157 = por %p155, %p156
      %s159 = sadd.s32 %s158, 1
      %p162 = scmp.eq.s32.totalorder %s19, 1
      %p163 = scmp.ne.s32.totalorder %s158, %s160
      %p164 = scmp.eq.s32.totalorder %s19, 0
      %p165 = por %p163, %p164
      %p166 = scmp.ne.s32.totalorder %s158, %s160
      %p167 = scmp.eq.s32.totalorder %s24, 1
      %p168 = por %p166, %p167
      %p169 = scmp.ne.s32.totalorder %s160, %s161
      %p170 = scmp.eq.s32.totalorder %s24, 0
      %p171 = por %p169, %p170
      %p172 = scmp.ne.s32.totalorder %s160, %s161
      %p173 = scmp.eq.s32.totalorder %s25, 1
      %p174 = por %p172, %p173
      %p176 = scmp.ne.s32.totalorder %s161, %s175
      %p177 = scmp.eq.s32.totalorder %s25, 0
      %p178 = por %p176, %p177
      %s180 = sadd.s32 %s179, 1
      %p183 = scmp.eq.s32.totalorder %s19, 1
      %p184 = scmp.ne.s32.totalorder %s179, %s181
      %p185 = scmp.eq.s32.totalorder %s19, 0
      %p186 = por %p184, %p185
      %p187 = scmp.ne.s32.totalorder %s179, %s181
      %p188 = scmp.eq.s32.totalorder %s24, 1
      %p189 = por %p187, %p188
      %p190 = scmp.ne.s32.totalorder %s181, %s182
      %p191 = scmp.eq.s32.totalorder %s24, 0
      %p192 = por %p190, %p191
      %p193 = scmp.ne.s32.totalorder %s181, %s182
      %p194 = scmp.eq.s32.totalorder %s25, 1
      %p195 = por %p193, %p194
      %p197 = scmp.ne.s32.totalorder %s182, %s196
      %p198 = scmp.eq.s32.totalorder %s25, 0
      %p199 = por %p197, %p198
      %s200 = ssub.s32 %s19, %s26
      %p201 = scmp.eq.s32.totalorder %s200, 0
      %s203 = sadd.s32 %s202, 1
      %s204 = scalar_select %p201, %s202, %s203
      %p207 = pneg %p201
      %p208 = scmp.eq.s32.totalorder %s19, 1
      %p209 = por %p207, %p208
      %p210 = scmp.ne.s32.totalorder %s202, %s205
      %p211 = scmp.eq.s32.totalorder %s19, 0
      %p212 = por %p210, %p211
      %p213 = scmp.ne.s32.totalorder %s202, %s205
      %p214 = scmp.eq.s32.totalorder %s24, 1
      %p215 = por %p213, %p214
      %p216 = scmp.ne.s32.totalorder %s205, %s206
      %p217 = scmp.eq.s32.totalorder %s24, 0
      %p218 = por %p216, %p217
      %p219 = scmp.ne.s32.totalorder %s205, %s206
      %p220 = scmp.eq.s32.totalorder %s25, 1
      %p221 = por %p219, %p220
      %p223 = scmp.ne.s32.totalorder %s206, %s222
      %p224 = scmp.eq.s32.totalorder %s25, 0
      %p225 = por %p223, %p224
      %s226 = ssub.s32 %s19, %s26
      %p227 = scmp.eq.s32.totalorder %s226, 0
      %s229 = sadd.s32 %s228, 1
      %s230 = scalar_select %p227, %s228, %s229
      %p233 = pneg %p227
      %p234 = scmp.eq.s32.totalorder %s19, 1
      %p235 = por %p233, %p234
      %p236 = scmp.ne.s32.totalorder %s228, %s231
      %p237 = scmp.eq.s32.totalorder %s19, 0
      %p238 = por %p236, %p237
      %p239 = scmp.ne.s32.totalorder %s228, %s231
      %p240 = scmp.eq.s32.totalorder %s24, 1
      %p241 = por %p239, %p240
      %p242 = scmp.ne.s32.totalorder %s231, %s232
      %p243 = scmp.eq.s32.totalorder %s24, 0
      %p244 = por %p242, %p243
      %p245 = scmp.ne.s32.totalorder %s231, %s232
      %p246 = scmp.eq.s32.totalorder %s25, 1
      %p247 = por %p245, %p246
      %p249 = scmp.ne.s32.totalorder %s232, %s248
      %p250 = scmp.eq.s32.totalorder %s25, 0
      %p251 = por %p249, %p250
      %p252 = scmp.le.s32.totalorder 1, %s19
      %p253 = scmp.lt.s32.totalorder %s19, 3
      %p254 = pnand %p252, %p253
      %p255 = pneg %p254
      // Predicated region
      $region9: #{tpu_custom_call.1} parent=5 // pred_check
        _
      $region10: #{tpu_custom_call.1} parent=5 // pred_check_branch
        %257 = sbr.rel (%p254) target = $region12
      $region11: #{tpu_custom_call.1} parent=5 // pred_region
        %s258 = ssub.s32 %s19, 1
        // Predicated region
        $region13: #{tpu_custom_call.1} parent=11 // pred_check
          %p259 = pneg %p66
        $region14: #{tpu_custom_call.1} parent=11 // pred_check_branch
          %261 = sbr.rel (%p259) target = $region16
        $region15: #{tpu_custom_call.1} parent=11 // pred_region
          _
        $region16: #{tpu_custom_call.1} parent=11 // pred_fallthru
          _
        // Predicated region
        $region17: #{tpu_custom_call.1} parent=11 // pred_check
          %p262 = pneg %p87
        $region18: #{tpu_custom_call.1} parent=11 // pred_check_branch
          %264 = sbr.rel (%p262) target = $region20
        $region19: #{tpu_custom_call.1} parent=11 // pred_region
          _
        $region20: #{tpu_custom_call.1} parent=11 // pred_fallthru
          _
        // Predicated region
        $region21: #{tpu_custom_call.1} parent=11 // pred_check
          %p265 = pneg %p108
        $region22: #{tpu_custom_call.1} parent=11 // pred_check_branch
          %267 = sbr.rel (%p265) target = $region24
        $region23: #{tpu_custom_call.1} parent=11 // pred_region
          _
        $region24: #{tpu_custom_call.1} parent=11 // pred_fallthru
          _
        // Predicated region
        $region25: #{tpu_custom_call.1} parent=11 // pred_check
          %p268 = pneg %p129
        $region26: #{tpu_custom_call.1} parent=11 // pred_check_branch
          %270 = sbr.rel (%p268) target = $region28
        $region27: #{tpu_custom_call.1} parent=11 // pred_region
          _
        $region28: #{tpu_custom_call.1} parent=11 // pred_fallthru
          _
        // Predicated region
        $region29: #{tpu_custom_call.1} parent=11 // pred_check
          %p271 = pneg %p150
        $region30: #{tpu_custom_call.1} parent=11 // pred_check_branch
          %273 = sbr.rel (%p271) target = $region32
        $region31: #{tpu_custom_call.1} parent=11 // pred_region
          _
        $region32: #{tpu_custom_call.1} parent=11 // pred_fallthru
          _
        // Predicated region
        $region33: #{tpu_custom_call.1} parent=11 // pred_check
          %p274 = pneg %p171
        $region34: #{tpu_custom_call.1} parent=11 // pred_check_branch
          %276 = sbr.rel (%p274) target = $region36
        $region35: #{tpu_custom_call.1} parent=11 // pred_region
          _
        $region36: #{tpu_custom_call.1} parent=11 // pred_fallthru
          _
        // Predicated region
        $region37: #{tpu_custom_call.1} parent=11 // pred_check
          %p277 = pneg %p192
        $region38: #{tpu_custom_call.1} parent=11 // pred_check_branch
          %279 = sbr.rel (%p277) target = $region40
        $region39: #{tpu_custom_call.1} parent=11 // pred_region
          _
        $region40: #{tpu_custom_call.1} parent=11 // pred_fallthru
          _
      $region12: #{tpu_custom_call.1} parent=5 // pred_fallthru
        _
      %p280 = scmp.lt.s32.totalorder %s19, 2
      // Predicated region
      $region41: #{tpu_custom_call.1} parent=5 // pred_check
        %p281 = pneg %p280
      $region42: #{tpu_custom_call.1} parent=5 // pred_check_branch
        %283 = sbr.rel (%p281) target = $region44
      $region43: #{tpu_custom_call.1} parent=5 // pred_region
        // Predicated region
        $region45: #{tpu_custom_call.1} parent=43 // pred_check
          %p284 = pneg %p39
        $region46: #{tpu_custom_call.1} parent=43 // pred_check_branch
          %286 = sbr.rel (%p284) target = $region48
        $region47: #{tpu_custom_call.1} parent=43 // pred_region
          %p287 = scmp.lt.s32.totalorder %s19, 1
          %s288 = scalar_select %p287, %s19, 1
          %s289 = smul.addr %s288, 32
          %s290 = smul.addr %s289, 8
          %s291 = scalar_lea.vmem %s0, %s290
        $region48: #{tpu_custom_call.1} parent=43 // pred_fallthru
          _
      $region44: #{tpu_custom_call.1} parent=5 // pred_fallthru
        _
      %p292 = scmp.le.s32.totalorder 1, %s19
      %p293 = scmp.lt.s32.totalorder %s19, 3
      %p294 = pnand %p292, %p293
      %p295 = pneg %p294
      // Predicated region
      $region49: #{tpu_custom_call.1} parent=5 // pred_check
        _
      $region50: #{tpu_custom_call.1} parent=5 // pred_check_branch
        %297 = sbr.rel (%p294) target = $region52
      $region51: #{tpu_custom_call.1} parent=5 // pred_region
        %s298 = ssub.s32 %s19, 1
        %p299 = scmp.lt.s32.totalorder %s24, 1
        %s300 = scalar_select %p299, %s24, 1
        %s301 = smul.addr %s300, 32
        %s302 = smul.addr %s301, 8
        %s303 = scalar_lea.vmem %s0, %s302
        %p304 = pneg %p45
        %p305 = pneg %p42
        %p306 = pneg %p66
        %p307 = pneg %p63
        %p308 = pneg %p87
        %p309 = pneg %p84
        %p310 = pneg %p108
        %p311 = pneg %p105
        %p312 = pneg %p129
        %p313 = pneg %p126
        %p314 = pneg %p150
        %p315 = pneg %p147
        %p316 = pneg %p171
        %p317 = pneg %p168
        %p318 = pneg %p192
        %p319 = pneg %p189
        %p320 = pneg %p218
        %p321 = pneg %p215
        %s322 = sand.u32 %s205, 1
        %s323 = scalar_lea.sflag [#allocation4], %s322
        %s324 = sand.u32 %s205, 1
        %s325 = smul.addr %s324, 256
        %s326 = scalar_lea.vmem [#allocation3], %s325
        %p327 = pneg %p244
        %p328 = pneg %p241
        %p329 = scmp.lt.s32.totalorder %s24, 1
        %s330 = scalar_select %p329, %s24, 1
        %s331 = smul.addr %s330, 32
        %s332 = smul.addr %s331, 8
        %s333 = scalar_lea.vmem %s9, %s332
        %p334 = scmp.lt.s32.totalorder %s24, 1
        %s335 = scalar_select %p334, %s24, 1
        %s336 = smul.addr %s335, 32
        %s337 = smul.addr %s336, 8
        %s338 = scalar_lea.vmem %s0, %s337
        %p339 = scmp.lt.s32.totalorder %s24, 1
        %s340 = scalar_select %p339, %s24, 1
        %s341 = smul.addr %s340, 32
        %s342 = smul.addr %s341, 8
        %s343 = scalar_lea.vmem %s9, %s342
        %v345 = vld [vmem:[%s338] sm:$0xff]
        %v346 = vld [vmem:[%s338 + $0x8] sm:$0xff]
        %v347 = vld [vmem:[%s338 + $0x10] sm:$0xff]
        %v348 = vld [vmem:[%s338 + $0x18] sm:$0xff]
        %v349 = vld [vmem:[%s338 + $0x20] sm:$0xff]
        %v350 = vld [vmem:[%s338 + $0x28] sm:$0xff]
        %v351 = vld [vmem:[%s338 + $0x30] sm:$0xff]
        %v352 = vld [vmem:[%s338 + $0x38] sm:$0xff]
        %v353 = vld [vmem:[%s338 + $0x40] sm:$0xff]
        %v354 = vld [vmem:[%s338 + $0x48] sm:$0xff]
        %v355 = vld [vmem:[%s338 + $0x50] sm:$0xff]
        %v356 = vld [vmem:[%s338 + $0x58] sm:$0xff]
        %v357 = vld [vmem:[%s338 + $0x60] sm:$0xff]
        %v358 = vld [vmem:[%s338 + $0x68] sm:$0xff]
        %v359 = vld [vmem:[%s338 + $0x70] sm:$0xff]
        %v360 = vld [vmem:[%s338 + $0x78] sm:$0xff]
        %v361 = vld [vmem:[%s338 + $0x80] sm:$0xff]
        %v362 = vld [vmem:[%s338 + $0x88] sm:$0xff]
        %v363 = vld [vmem:[%s338 + $0x90] sm:$0xff]
        %v364 = vld [vmem:[%s338 + $0x98] sm:$0xff]
        %v365 = vld [vmem:[%s338 + $0xa0] sm:$0xff]
        %v366 = vld [vmem:[%s338 + $0xa8] sm:$0xff]
        %v367 = vld [vmem:[%s338 + $0xb0] sm:$0xff]
        %v368 = vld [vmem:[%s338 + $0xb8] sm:$0xff]
        %v369 = vld [vmem:[%s338 + $0xc0] sm:$0xff]
        %v370 = vld [vmem:[%s338 + $0xc8] sm:$0xff]
        %v371 = vld [vmem:[%s338 + $0xd0] sm:$0xff]
        %v372 = vld [vmem:[%s338 + $0xd8] sm:$0xff]
        %v373 = vld [vmem:[%s338 + $0xe0] sm:$0xff]
        %v374 = vld [vmem:[%s338 + $0xe8] sm:$0xff]
        %v375 = vld [vmem:[%s338 + $0xf0] sm:$0xff]
        %v376 = vld [vmem:[%s338 + $0xf8] sm:$0xff]
        %v377 = vld [vmem:[%s1] sm:$0x1]
        %v379 = vperm.slane %v377, 0
        %v381 = vmul.f32 %v345, %v379
        %v382 = vmul.f32 %v346, %v379
        %v383 = vmul.f32 %v347, %v379
        %v384 = vmul.f32 %v348, %v379
        %v385 = vmul.f32 %v349, %v379
        %v386 = vmul.f32 %v350, %v379
        %v387 = vmul.f32 %v351, %v379
        %v388 = vmul.f32 %v352, %v379
        %v389 = vmul.f32 %v353, %v379
        %v390 = vmul.f32 %v354, %v379
        %v391 = vmul.f32 %v355, %v379
        %v392 = vmul.f32 %v356, %v379
        %v393 = vmul.f32 %v357, %v379
        %v394 = vmul.f32 %v358, %v379
        %v395 = vmul.f32 %v359, %v379
        %v396 = vmul.f32 %v360, %v379
        %v397 = vmul.f32 %v361, %v379
        %v398 = vmul.f32 %v362, %v379
        %v399 = vmul.f32 %v363, %v379
        %v400 = vmul.f32 %v364, %v379
        %v401 = vmul.f32 %v365, %v379
        %v402 = vmul.f32 %v366, %v379
        %v403 = vmul.f32 %v367, %v379
        %v404 = vmul.f32 %v368, %v379
        %v405 = vmul.f32 %v369, %v379
        %v406 = vmul.f32 %v370, %v379
        %v407 = vmul.f32 %v371, %v379
        %v408 = vmul.f32 %v372, %v379
        %v409 = vmul.f32 %v373, %v379
        %v410 = vmul.f32 %v374, %v379
        %v411 = vmul.f32 %v375, %v379
        %v412 = vmul.f32 %v376, %v379
        %v413 = vld [vmem:[%s2] sm:$0x1]
        %v415 = vperm.slane %v413, 0
        %v417 = vadd.f32 %v381, %v415
        %v418 = vadd.f32 %v382, %v415
        %v419 = vadd.f32 %v383, %v415
        %v420 = vadd.f32 %v384, %v415
        %v421 = vadd.f32 %v385, %v415
        %v422 = vadd.f32 %v386, %v415
        %v423 = vadd.f32 %v387, %v415
        %v424 = vadd.f32 %v388, %v415
        %v425 = vadd.f32 %v389, %v415
        %v426 = vadd.f32 %v390, %v415
        %v427 = vadd.f32 %v391, %v415
        %v428 = vadd.f32 %v392, %v415
        %v429 = vadd.f32 %v393, %v415
        %v430 = vadd.f32 %v394, %v415
        %v431 = vadd.f32 %v395, %v415
        %v432 = vadd.f32 %v396, %v415
        %v433 = vadd.f32 %v397, %v415
        %v434 = vadd.f32 %v398, %v415
        %v435 = vadd.f32 %v399, %v415
        %v436 = vadd.f32 %v400, %v415
        %v437 = vadd.f32 %v401, %v415
        %v438 = vadd.f32 %v402, %v415
        %v439 = vadd.f32 %v403, %v415
        %v440 = vadd.f32 %v404, %v415
        %v441 = vadd.f32 %v405, %v415
        %v442 = vadd.f32 %v406, %v415
        %v443 = vadd.f32 %v407, %v415
        %v444 = vadd.f32 %v408, %v415
        %v445 = vadd.f32 %v409, %v415
        %v446 = vadd.f32 %v410, %v415
        %v447 = vadd.f32 %v411, %v415
        %v448 = vadd.f32 %v412, %v415
        %v449 = vmax.f32 %v417, 0.0
        %v450 = vmax.f32 %v418, 0.0
        %v451 = vmax.f32 %v419, 0.0
        %v452 = vmax.f32 %v420, 0.0
        %v453 = vmax.f32 %v421, 0.0
        %v454 = vmax.f32 %v422, 0.0
        %v455 = vmax.f32 %v423, 0.0
        %v456 = vmax.f32 %v424, 0.0
        %v457 = vmax.f32 %v425, 0.0
        %v458 = vmax.f32 %v426, 0.0
        %v459 = vmax.f32 %v427, 0.0
        %v460 = vmax.f32 %v428, 0.0
        %v461 = vmax.f32 %v429, 0.0
        %v462 = vmax.f32 %v430, 0.0
        %v463 = vmax.f32 %v431, 0.0
        %v464 = vmax.f32 %v432, 0.0
        %v465 = vmax.f32 %v433, 0.0
        %v466 = vmax.f32 %v434, 0.0
        %v467 = vmax.f32 %v435, 0.0
        %v468 = vmax.f32 %v436, 0.0
        %v469 = vmax.f32 %v437, 0.0
        %v470 = vmax.f32 %v438, 0.0
        %v471 = vmax.f32 %v439, 0.0
        %v472 = vmax.f32 %v440, 0.0
        %v473 = vmax.f32 %v441, 0.0
        %v474 = vmax.f32 %v442, 0.0
        %v475 = vmax.f32 %v443, 0.0
        %v476 = vmax.f32 %v444, 0.0
        %v477 = vmax.f32 %v445, 0.0
        %v478 = vmax.f32 %v446, 0.0
        %v479 = vmax.f32 %v447, 0.0
        %v480 = vmax.f32 %v448, 0.0
        %vm481 = vcmask 523264
        %482 = vst.msk [vmem:[%s343] sm:$0xff] %vm481, %v449
        %483 = vst.msk [vmem:[%s343 + $0x8] sm:$0xff] %vm481, %v450
        %484 = vst.msk [vmem:[%s343 + $0x10] sm:$0xff] %vm481, %v451
        %485 = vst.msk [vmem:[%s343 + $0x18] sm:$0xff] %vm481, %v452
        %486 = vst.msk [vmem:[%s343 + $0x20] sm:$0xff] %vm481, %v453
        %487 = vst.msk [vmem:[%s343 + $0x28] sm:$0xff] %vm481, %v454
        %488 = vst.msk [vmem:[%s343 + $0x30] sm:$0xff] %vm481, %v455
        %489 = vst.msk [vmem:[%s343 + $0x38] sm:$0xff] %vm481, %v456
        %490 = vst.msk [vmem:[%s343 + $0x40] sm:$0xff] %vm481, %v457
        %491 = vst.msk [vmem:[%s343 + $0x48] sm:$0xff] %vm481, %v458
        %492 = vst.msk [vmem:[%s343 + $0x50] sm:$0xff] %vm481, %v459
        %493 = vst.msk [vmem:[%s343 + $0x58] sm:$0xff] %vm481, %v460
        %494 = vst.msk [vmem:[%s343 + $0x60] sm:$0xff] %vm481, %v461
        %495 = vst.msk [vmem:[%s343 + $0x68] sm:$0xff] %vm481, %v462
        %496 = vst.msk [vmem:[%s343 + $0x70] sm:$0xff] %vm481, %v463
        %497 = vst.msk [vmem:[%s343 + $0x78] sm:$0xff] %vm481, %v464
        %498 = vst.msk [vmem:[%s343 + $0x80] sm:$0xff] %vm481, %v465
        %499 = vst.msk [vmem:[%s343 + $0x88] sm:$0xff] %vm481, %v466
        %500 = vst.msk [vmem:[%s343 + $0x90] sm:$0xff] %vm481, %v467
        %501 = vst.msk [vmem:[%s343 + $0x98] sm:$0xff] %vm481, %v468
        %502 = vst.msk [vmem:[%s343 + $0xa0] sm:$0xff] %vm481, %v469
        %503 = vst.msk [vmem:[%s343 + $0xa8] sm:$0xff] %vm481, %v470
        %504 = vst.msk [vmem:[%s343 + $0xb0] sm:$0xff] %vm481, %v471
        %505 = vst.msk [vmem:[%s343 + $0xb8] sm:$0xff] %vm481, %v472
        %506 = vst.msk [vmem:[%s343 + $0xc0] sm:$0xff] %vm481, %v473
        %507 = vst.msk [vmem:[%s343 + $0xc8] sm:$0xff] %vm481, %v474
        %508 = vst.msk [vmem:[%s343 + $0xd0] sm:$0xff] %vm481, %v475
        %509 = vst.msk [vmem:[%s343 + $0xd8] sm:$0xff] %vm481, %v476
        %510 = vst.msk [vmem:[%s343 + $0xe0] sm:$0xff] %vm481, %v477
        %511 = vst.msk [vmem:[%s343 + $0xe8] sm:$0xff] %vm481, %v478
        %512 = vst.msk [vmem:[%s343 + $0xf0] sm:$0xff] %vm481, %v479
        %513 = vst.msk [vmem:[%s343 + $0xf8] sm:$0xff] %vm481, %v480
        %v514 = vpack.c.bf16 %v450, %v449
        %v515 = vpack.c.bf16 %v452, %v451
        %v516 = vpack.c.bf16 %v454, %v453
        %v517 = vpack.c.bf16 %v456, %v455
        %v518 = vpack.c.bf16 %v458, %v457
        %v519 = vpack.c.bf16 %v460, %v459
        %v520 = vpack.c.bf16 %v462, %v461
        %v521 = vpack.c.bf16 %v464, %v463
        %v522 = vpack.c.bf16 %v466, %v465
        %v523 = vpack.c.bf16 %v468, %v467
        %v524 = vpack.c.bf16 %v470, %v469
        %v525 = vpack.c.bf16 %v472, %v471
        %v526 = vpack.c.bf16 %v474, %v473
        %v527 = vpack.c.bf16 %v476, %v475
        %v528 = vpack.c.bf16 %v478, %v477
        %v529 = vpack.c.bf16 %v480, %v479
        %v530 = vld [vmem:[%s3] sm:$0xff]
        %v531 = vld [vmem:[%s3 + $0x8] sm:$0xff]
        %v532 = vld [vmem:[%s3 + $0x10] sm:$0xff]
        %v533 = vld [vmem:[%s3 + $0x18] sm:$0xff]
        %v534 = vld [vmem:[%s3 + $0x20] sm:$0xff]
        %v535 = vld [vmem:[%s3 + $0x28] sm:$0xff]
        %v536 = vld [vmem:[%s3 + $0x30] sm:$0xff]
        %v537 = vld [vmem:[%s3 + $0x38] sm:$0xff]
        %v546 = vunpack.c.l.b16 %v530
        %v547 = vunpack.c.h.b16 %v530
        %v548 = vunpack.c.l.b16 %v531
        %v549 = vunpack.c.h.b16 %v531
        %v550 = vunpack.c.l.b16 %v532
        %v551 = vunpack.c.h.b16 %v532
        %v552 = vunpack.c.l.b16 %v533
        %v553 = vunpack.c.h.b16 %v533
        %v554 = vunpack.c.l.b16 %v534
        %v555 = vunpack.c.h.b16 %v534
        %v556 = vunpack.c.l.b16 %v535
        %v557 = vunpack.c.h.b16 %v535
        %v558 = vunpack.c.l.b16 %v536
        %v559 = vunpack.c.h.b16 %v536
        %v560 = vunpack.c.l.b16 %v537
        %v561 = vunpack.c.h.b16 %v537
        %v562 = vpack.c.b16 %v548, %v546
        %v563 = vpack.c.b16 %v549, %v547
        %v564 = vpack.c.b16 %v552, %v550
        %v565 = vpack.c.b16 %v553, %v551
        %v566 = vpack.c.b16 %v556, %v554
        %v567 = vpack.c.b16 %v557, %v555
        %v568 = vpack.c.b16 %v560, %v558
        %v569 = vpack.c.b16 %v561, %v559
        %v579 = vsel %vm481, %v514, 0
        %v582 = vsel %vm481, %v515, 0
        %v585 = vsel %vm481, %v516, 0
        %v588 = vsel %vm481, %v517, 0
        %v591 = vsel %vm481, %v518, 0
        %v594 = vsel %vm481, %v519, 0
        %v597 = vsel %vm481, %v520, 0
        %v600 = vsel %vm481, %v521, 0
        %v603 = vsel %vm481, %v522, 0
        %v606 = vsel %vm481, %v523, 0
        %v609 = vsel %vm481, %v524, 0
        %v612 = vsel %vm481, %v525, 0
        %v615 = vsel %vm481, %v526, 0
        %v618 = vsel %vm481, %v527, 0
        %v621 = vsel %vm481, %v528, 0
        %v624 = vsel %vm481, %v529, 0
        %626 = vmatpush.bf16.msra.mxu0 0
        %627 = vmatpush.bf16.msra.mxu0 0
        %628 = vmatpush.bf16.msra.mxu0 0
        %629 = vmatpush.bf16.msra.mxu0 0
        %630 = vmatpush.bf16.msra.mxu0 %v568
        %631 = vmatpush.bf16.msra.mxu0 %v566
        %632 = vmatpush.bf16.msra.mxu0 %v564
        %633 = vmatpush.bf16.msra.mxu0 %v562
        %634 = vmatmul.bf16.gmra.mxu0 %v579
        %v635 = vpop.f32.mrf.mxu0
        %v636 = vadd.f32 0.0, %v635
        %v637 = vpop.f32.mrf.mxu0
        %v638 = vadd.f32 0.0, %v637
        %639 = vmatmul.bf16.gmra.mxu0 %v582
        %v640 = vpop.f32.mrf.mxu0
        %v641 = vadd.f32 0.0, %v640
        %v642 = vpop.f32.mrf.mxu0
        %v643 = vadd.f32 0.0, %v642
        %644 = vmatmul.bf16.gmra.mxu0 %v585
        %v645 = vpop.f32.mrf.mxu0
        %v646 = vadd.f32 0.0, %v645
        %v647 = vpop.f32.mrf.mxu0
        %v648 = vadd.f32 0.0, %v647
        %649 = vmatmul.bf16.gmra.mxu0 %v588
        %v650 = vpop.f32.mrf.mxu0
        %v651 = vadd.f32 0.0, %v650
        %v652 = vpop.f32.mrf.mxu0
        %v653 = vadd.f32 0.0, %v652
        %654 = vmatmul.bf16.gmra.mxu0 %v591
        %v655 = vpop.f32.mrf.mxu0
        %v656 = vadd.f32 0.0, %v655
        %v657 = vpop.f32.mrf.mxu0
        %v658 = vadd.f32 0.0, %v657
        %659 = vmatmul.bf16.gmra.mxu0 %v594
        %v660 = vpop.f32.mrf.mxu0
        %v661 = vadd.f32 0.0, %v660
        %v662 = vpop.f32.mrf.mxu0
        %v663 = vadd.f32 0.0, %v662
        %664 = vmatmul.bf16.gmra.mxu0 %v597
        %v665 = vpop.f32.mrf.mxu0
        %v666 = vadd.f32 0.0, %v665
        %v667 = vpop.f32.mrf.mxu0
        %v668 = vadd.f32 0.0, %v667
        %669 = vmatmul.bf16.gmra.mxu0 %v600
        %v670 = vpop.f32.mrf.mxu0
        %v671 = vadd.f32 0.0, %v670
        %v672 = vpop.f32.mrf.mxu0
        %v673 = vadd.f32 0.0, %v672
        %674 = vmatmul.bf16.gmra.mxu0 %v603
        %v675 = vpop.f32.mrf.mxu0
        %v676 = vadd.f32 0.0, %v675
        %v677 = vpop.f32.mrf.mxu0
        %v678 = vadd.f32 0.0, %v677
        %679 = vmatmul.bf16.gmra.mxu0 %v606
        %v680 = vpop.f32.mrf.mxu0
        %v681 = vadd.f32 0.0, %v680
        %v682 = vpop.f32.mrf.mxu0
        %v683 = vadd.f32 0.0, %v682
        %684 = vmatmul.bf16.gmra.mxu0 %v609
        %v685 = vpop.f32.mrf.mxu0
        %v686 = vadd.f32 0.0, %v685
        %v687 = vpop.f32.mrf.mxu0
        %v688 = vadd.f32 0.0, %v687
        %689 = vmatmul.bf16.gmra.mxu0 %v612
        %v690 = vpop.f32.mrf.mxu0
        %v691 = vadd.f32 0.0, %v690
        %v692 = vpop.f32.mrf.mxu0
        %v693 = vadd.f32 0.0, %v692
        %694 = vmatmul.bf16.gmra.mxu0 %v615
        %v695 = vpop.f32.mrf.mxu0
        %v696 = vadd.f32 0.0, %v695
        %v697 = vpop.f32.mrf.mxu0
        %v698 = vadd.f32 0.0, %v697
        %699 = vmatmul.bf16.gmra.mxu0 %v618
        %v700 = vpop.f32.mrf.mxu0
        %v701 = vadd.f32 0.0, %v700
        %v702 = vpop.f32.mrf.mxu0
        %v703 = vadd.f32 0.0, %v702
        %704 = vmatmul.bf16.gmra.mxu0 %v621
        %v705 = vpop.f32.mrf.mxu0
        %v706 = vadd.f32 0.0, %v705
        %v707 = vpop.f32.mrf.mxu0
        %v708 = vadd.f32 0.0, %v707
        %709 = vmatmul.bf16.gmra.mxu0 %v624
        %v710 = vpop.f32.mrf.mxu0
        %v711 = vadd.f32 0.0, %v710
        %v712 = vpop.f32.mrf.mxu0
        %v713 = vadd.f32 0.0, %v712
        %714 = vdwg.mxu0
        %715 = vmatpush.bf16.msra.mxu0 0
        %716 = vmatpush.bf16.msra.mxu0 0
        %717 = vmatpush.bf16.msra.mxu0 0
        %718 = vmatpush.bf16.msra.mxu0 0
        %719 = vmatpush.bf16.msra.mxu0 %v569
        %720 = vmatpush.bf16.msra.mxu0 %v567
        %721 = vmatpush.bf16.msra.mxu0 %v565
        %722 = vmatpush.bf16.msra.mxu0 %v563
        %723 = vmatmul.bf16.gmra.mxu0 %v579
        %v724 = vpop.f32.mrf.mxu0
        %v725 = vadd.f32 0.0, %v724
        %v726 = vpop.f32.mrf.mxu0
        %v727 = vadd.f32 0.0, %v726
        %728 = vmatmul.bf16.gmra.mxu0 %v582
        %v729 = vpop.f32.mrf.mxu0
        %v730 = vadd.f32 0.0, %v729
        %v731 = vpop.f32.mrf.mxu0
        %v732 = vadd.f32 0.0, %v731
        %733 = vmatmul.bf16.gmra.mxu0 %v585
        %v734 = vpop.f32.mrf.mxu0
        %v735 = vadd.f32 0.0, %v734
        %v736 = vpop.f32.mrf.mxu0
        %v737 = vadd.f32 0.0, %v736
        %738 = vmatmul.bf16.gmra.mxu0 %v588
        %v739 = vpop.f32.mrf.mxu0
        %v740 = vadd.f32 0.0, %v739
        %v741 = vpop.f32.mrf.mxu0
        %v742 = vadd.f32 0.0, %v741
        %743 = vmatmul.bf16.gmra.mxu0 %v591
        %v744 = vpop.f32.mrf.mxu0
        %v745 = vadd.f32 0.0, %v744
        %v746 = vpop.f32.mrf.mxu0
        %v747 = vadd.f32 0.0, %v746
        %748 = vmatmul.bf16.gmra.mxu0 %v594
        %v749 = vpop.f32.mrf.mxu0
        %v750 = vadd.f32 0.0, %v749
        %v751 = vpop.f32.mrf.mxu0
        %v752 = vadd.f32 0.0, %v751
        %753 = vmatmul.bf16.gmra.mxu0 %v597
        %v754 = vpop.f32.mrf.mxu0
        %v755 = vadd.f32 0.0, %v754
        %v756 = vpop.f32.mrf.mxu0
        %v757 = vadd.f32 0.0, %v756
        %758 = vmatmul.bf16.gmra.mxu0 %v600
        %v759 = vpop.f32.mrf.mxu0
        %v760 = vadd.f32 0.0, %v759
        %v761 = vpop.f32.mrf.mxu0
        %v762 = vadd.f32 0.0, %v761
        %763 = vmatmul.bf16.gmra.mxu0 %v603
        %v764 = vpop.f32.mrf.mxu0
        %v765 = vadd.f32 0.0, %v764
        %v766 = vpop.f32.mrf.mxu0
        %v767 = vadd.f32 0.0, %v766
        %768 = vmatmul.bf16.gmra.mxu0 %v606
        %v769 = vpop.f32.mrf.mxu0
        %v770 = vadd.f32 0.0, %v769
        %v771 = vpop.f32.mrf.mxu0
        %v772 = vadd.f32 0.0, %v771
        %773 = vmatmul.bf16.gmra.mxu0 %v609
        %v774 = vpop.f32.mrf.mxu0
        %v775 = vadd.f32 0.0, %v774
        %v776 = vpop.f32.mrf.mxu0
        %v777 = vadd.f32 0.0, %v776
        %778 = vmatmul.bf16.gmra.mxu0 %v612
        %v779 = vpop.f32.mrf.mxu0
        %v780 = vadd.f32 0.0, %v779
        %v781 = vpop.f32.mrf.mxu0
        %v782 = vadd.f32 0.0, %v781
        %783 = vmatmul.bf16.gmra.mxu0 %v615
        %v784 = vpop.f32.mrf.mxu0
        %v785 = vadd.f32 0.0, %v784
        %v786 = vpop.f32.mrf.mxu0
        %v787 = vadd.f32 0.0, %v786
        %788 = vmatmul.bf16.gmra.mxu0 %v618
        %v789 = vpop.f32.mrf.mxu0
        %v790 = vadd.f32 0.0, %v789
        %v791 = vpop.f32.mrf.mxu0
        %v792 = vadd.f32 0.0, %v791
        %793 = vmatmul.bf16.gmra.mxu0 %v621
        %v794 = vpop.f32.mrf.mxu0
        %v795 = vadd.f32 0.0, %v794
        %v796 = vpop.f32.mrf.mxu0
        %v797 = vadd.f32 0.0, %v796
        %798 = vmatmul.bf16.gmra.mxu0 %v624
        %v799 = vpop.f32.mrf.mxu0
        %v800 = vadd.f32 0.0, %v799
        %v801 = vpop.f32.mrf.mxu0
        %v802 = vadd.f32 0.0, %v801
        %803 = vdwg.mxu0
        %v804 = vld [vmem:[%s4] sm:$0x1]
        %v806 = vperm.slane %v804, 0
        %v808 = vadd.f32 %v725, %v806
        %v809 = vadd.f32 %v727, %v806
        %v810 = vadd.f32 %v730, %v806
        %v811 = vadd.f32 %v732, %v806
        %v812 = vadd.f32 %v735, %v806
        %v813 = vadd.f32 %v737, %v806
        %v814 = vadd.f32 %v740, %v806
        %v815 = vadd.f32 %v742, %v806
        %v816 = vadd.f32 %v745, %v806
        %v817 = vadd.f32 %v747, %v806
        %v818 = vadd.f32 %v750, %v806
        %v819 = vadd.f32 %v752, %v806
        %v820 = vadd.f32 %v755, %v806
        %v821 = vadd.f32 %v757, %v806
        %v822 = vadd.f32 %v760, %v806
        %v823 = vadd.f32 %v762, %v806
        %v824 = vadd.f32 %v765, %v806
        %v825 = vadd.f32 %v767, %v806
        %v826 = vadd.f32 %v770, %v806
        %v827 = vadd.f32 %v772, %v806
        %v828 = vadd.f32 %v775, %v806
        %v829 = vadd.f32 %v777, %v806
        %v830 = vadd.f32 %v780, %v806
        %v831 = vadd.f32 %v782, %v806
        %v832 = vadd.f32 %v785, %v806
        %v833 = vadd.f32 %v787, %v806
        %v834 = vadd.f32 %v790, %v806
        %v835 = vadd.f32 %v792, %v806
        %v836 = vadd.f32 %v795, %v806
        %v837 = vadd.f32 %v797, %v806
        %v838 = vadd.f32 %v800, %v806
        %v839 = vadd.f32 %v802, %v806
        %v840 = vmax.f32 %v808, 0.0
        %v841 = vmax.f32 %v809, 0.0
        %v842 = vmax.f32 %v810, 0.0
        %v843 = vmax.f32 %v811, 0.0
        %v844 = vmax.f32 %v812, 0.0
        %v845 = vmax.f32 %v813, 0.0
        %v846 = vmax.f32 %v814, 0.0
        %v847 = vmax.f32 %v815, 0.0
        %v848 = vmax.f32 %v816, 0.0
        %v849 = vmax.f32 %v817, 0.0
        %v850 = vmax.f32 %v818, 0.0
        %v851 = vmax.f32 %v819, 0.0
        %v852 = vmax.f32 %v820, 0.0
        %v853 = vmax.f32 %v821, 0.0
        %v854 = vmax.f32 %v822, 0.0
        %v855 = vmax.f32 %v823, 0.0
        %v856 = vmax.f32 %v824, 0.0
        %v857 = vmax.f32 %v825, 0.0
        %v858 = vmax.f32 %v826, 0.0
        %v859 = vmax.f32 %v827, 0.0
        %v860 = vmax.f32 %v828, 0.0
        %v861 = vmax.f32 %v829, 0.0
        %v862 = vmax.f32 %v830, 0.0
        %v863 = vmax.f32 %v831, 0.0
        %v864 = vmax.f32 %v832, 0.0
        %v865 = vmax.f32 %v833, 0.0
        %v866 = vmax.f32 %v834, 0.0
        %v867 = vmax.f32 %v835, 0.0
        %v868 = vmax.f32 %v836, 0.0
        %v869 = vmax.f32 %v837, 0.0
        %v870 = vmax.f32 %v838, 0.0
        %v871 = vmax.f32 %v839, 0.0
        %872 = vst [vmem:[#allocation2] sm:$0xf] 0
        %873 = vst [vmem:[#allocation2 + $0x4] sm:$0xf] 0
        %874 = vst [vmem:[#allocation2 + $0x8] sm:$0x1] 0
        %s875 = scalar_lea.vmem [#allocation2], 204
        %876 = vst [vmem:[%s875] sm:$0xf] 0
        %877 = vst [vmem:[%s875 + $0x4] sm:$0xf] 0
        %878 = vst [vmem:[%s875 + $0x8] sm:$0x1] 0
        %s879 = scalar_lea.vmem [#allocation2], 12
        %vm880 = vcmask 1040384
        %vm881 = vsmask.f32 256
        %vm882 = vmand %vm880, %vm881
        %v883 = vld [vmem:[%s879] sm:$0x1]
        %v884 = vsel %vm882, 0, %v883
        %885 = vst [vmem:[%s879] sm:$0x1] %v884
        %v886 = vld [vmem:[%s879 + $0xc] sm:$0x1]
        %v887 = vsel %vm882, 0, %v886
        %888 = vst [vmem:[%s879 + $0xc] sm:$0x1] %v887
        %v889 = vld [vmem:[%s879 + $0x18] sm:$0x1]
        %v890 = vsel %vm882, 0, %v889
        %891 = vst [vmem:[%s879 + $0x18] sm:$0x1] %v890
        %v892 = vld [vmem:[%s879 + $0x24] sm:$0x1]
        %v893 = vsel %vm882, 0, %v892
        %894 = vst [vmem:[%s879 + $0x24] sm:$0x1] %v893
        %v895 = vld [vmem:[%s879 + $0x30] sm:$0x1]
        %v896 = vsel %vm882, 0, %v895
        %897 = vst [vmem:[%s879 + $0x30] sm:$0x1] %v896
        %v898 = vld [vmem:[%s879 + $0x3c] sm:$0x1]
        %v899 = vsel %vm882, 0, %v898
        %900 = vst [vmem:[%s879 + $0x3c] sm:$0x1] %v899
        %v901 = vld [vmem:[%s879 + $0x48] sm:$0x1]
        %v902 = vsel %vm882, 0, %v901
        %903 = vst [vmem:[%s879 + $0x48] sm:$0x1] %v902
        %v904 = vld [vmem:[%s879 + $0x54] sm:$0x1]
        %v905 = vsel %vm882, 0, %v904
        %906 = vst [vmem:[%s879 + $0x54] sm:$0x1] %v905
        %v907 = vld [vmem:[%s879 + $0x60] sm:$0x1]
        %v908 = vsel %vm882, 0, %v907
        %909 = vst [vmem:[%s879 + $0x60] sm:$0x1] %v908
        %v910 = vld [vmem:[%s879 + $0x6c] sm:$0x1]
        %v911 = vsel %vm882, 0, %v910
        %912 = vst [vmem:[%s879 + $0x6c] sm:$0x1] %v911
        %v913 = vld [vmem:[%s879 + $0x78] sm:$0x1]
        %v914 = vsel %vm882, 0, %v913
        %915 = vst [vmem:[%s879 + $0x78] sm:$0x1] %v914
        %v916 = vld [vmem:[%s879 + $0x84] sm:$0x1]
        %v917 = vsel %vm882, 0, %v916
        %918 = vst [vmem:[%s879 + $0x84] sm:$0x1] %v917
        %v919 = vld [vmem:[%s879 + $0x90] sm:$0x1]
        %v920 = vsel %vm882, 0, %v919
        %921 = vst [vmem:[%s879 + $0x90] sm:$0x1] %v920
        %v922 = vld [vmem:[%s879 + $0x9c] sm:$0x1]
        %v923 = vsel %vm882, 0, %v922
        %924 = vst [vmem:[%s879 + $0x9c] sm:$0x1] %v923
        %v925 = vld [vmem:[%s879 + $0xa8] sm:$0x1]
        %v926 = vsel %vm882, 0, %v925
        %927 = vst [vmem:[%s879 + $0xa8] sm:$0x1] %v926
        %v928 = vld [vmem:[%s879 + $0xb4] sm:$0x1]
        %v929 = vsel %vm882, 0, %v928
        %930 = vst [vmem:[%s879 + $0xb4] sm:$0x1] %v929
        %vm931 = vsmask.f32 7938
        %vm932 = vmand %vm880, %vm931
        %v933 = vld [vmem:[%s879 + $0x8] sm:$0x1]
        %v934 = vsel %vm932, 0, %v933
        %935 = vst [vmem:[%s879 + $0x8] sm:$0x1] %v934
        %v936 = vld [vmem:[%s879 + $0x14] sm:$0x1]
        %v937 = vsel %vm932, 0, %v936
        %938 = vst [vmem:[%s879 + $0x14] sm:$0x1] %v937
        %v939 = vld [vmem:[%s879 + $0x20] sm:$0x1]
        %v940 = vsel %vm932, 0, %v939
        %941 = vst [vmem:[%s879 + $0x20] sm:$0x1] %v940
        %v942 = vld [vmem:[%s879 + $0x2c] sm:$0x1]
        %v943 = vsel %vm932, 0, %v942
        %944 = vst [vmem:[%s879 + $0x2c] sm:$0x1] %v943
        %v945 = vld [vmem:[%s879 + $0x38] sm:$0x1]
        %v946 = vsel %vm932, 0, %v945
        %947 = vst [vmem:[%s879 + $0x38] sm:$0x1] %v946
        %v948 = vld [vmem:[%s879 + $0x44] sm:$0x1]
        %v949 = vsel %vm932, 0, %v948
        %950 = vst [vmem:[%s879 + $0x44] sm:$0x1] %v949
        %v951 = vld [vmem:[%s879 + $0x50] sm:$0x1]
        %v952 = vsel %vm932, 0, %v951
        %953 = vst [vmem:[%s879 + $0x50] sm:$0x1] %v952
        %v954 = vld [vmem:[%s879 + $0x5c] sm:$0x1]
        %v955 = vsel %vm932, 0, %v954
        %956 = vst [vmem:[%s879 + $0x5c] sm:$0x1] %v955
        %v957 = vld [vmem:[%s879 + $0x68] sm:$0x1]
        %v958 = vsel %vm932, 0, %v957
        %959 = vst [vmem:[%s879 + $0x68] sm:$0x1] %v958
        %v960 = vld [vmem:[%s879 + $0x74] sm:$0x1]
        %v961 = vsel %vm932, 0, %v960
        %962 = vst [vmem:[%s879 + $0x74] sm:$0x1] %v961
        %v963 = vld [vmem:[%s879 + $0x80] sm:$0x1]
        %v964 = vsel %vm932, 0, %v963
        %965 = vst [vmem:[%s879 + $0x80] sm:$0x1] %v964
        %v966 = vld [vmem:[%s879 + $0x8c] sm:$0x1]
        %v967 = vsel %vm932, 0, %v966
        %968 = vst [vmem:[%s879 + $0x8c] sm:$0x1] %v967
        %v969 = vld [vmem:[%s879 + $0x98] sm:$0x1]
        %v970 = vsel %vm932, 0, %v969
        %971 = vst [vmem:[%s879 + $0x98] sm:$0x1] %v970
        %v972 = vld [vmem:[%s879 + $0xa4] sm:$0x1]
        %v973 = vsel %vm932, 0, %v972
        %974 = vst [vmem:[%s879 + $0xa4] sm:$0x1] %v973
        %v975 = vld [vmem:[%s879 + $0xb0] sm:$0x1]
        %v976 = vsel %vm932, 0, %v975
        %977 = vst [vmem:[%s879 + $0xb0] sm:$0x1] %v976
        %v978 = vld [vmem:[%s879 + $0xbc] sm:$0x1]
        %v979 = vsel %vm932, 0, %v978
        %980 = vst [vmem:[%s879 + $0xbc] sm:$0x1] %v979
        %v981 = vpack.c.bf16 %v840, %v840
        %v982 = vpack.c.bf16 %v841, %v841
        %v983 = vpack.c.bf16 %v842, %v842
        %v984 = vpack.c.bf16 %v843, %v843
        %v985 = vpack.c.bf16 %v844, %v844
        %v986 = vpack.c.bf16 %v845, %v845
        %v987 = vpack.c.bf16 %v846, %v846
        %v988 = vpack.c.bf16 %v847, %v847
        %v989 = vpack.c.bf16 %v848, %v848
        %v990 = vpack.c.bf16 %v849, %v849
        %v991 = vpack.c.bf16 %v850, %v850
        %v992 = vpack.c.bf16 %v851, %v851
        %v993 = vpack.c.bf16 %v852, %v852
        %v994 = vpack.c.bf16 %v853, %v853
        %v995 = vpack.c.bf16 %v854, %v854
        %v996 = vpack.c.bf16 %v855, %v855
        %v997 = vpack.c.bf16 %v856, %v856
        %v998 = vpack.c.bf16 %v857, %v857
        %v999 = vpack.c.bf16 %v858, %v858
        %v1000 = vpack.c.bf16 %v859, %v859
        %v1001 = vpack.c.bf16 %v860, %v860
        %v1002 = vpack.c.bf16 %v861, %v861
        %v1003 = vpack.c.bf16 %v862, %v862
        %v1004 = vpack.c.bf16 %v863, %v863
        %v1005 = vpack.c.bf16 %v864, %v864
        %v1006 = vpack.c.bf16 %v865, %v865
        %v1007 = vpack.c.bf16 %v866, %v866
        %v1008 = vpack.c.bf16 %v867, %v867
        %v1009 = vpack.c.bf16 %v868, %v868
        %v1010 = vpack.c.bf16 %v869, %v869
        %v1011 = vpack.c.bf16 %v870, %v870
        %v1012 = vpack.c.bf16 %v871, %v871
        %vm1013 = vsmask.f32 4368
        %vm1014 = vmor %vm881, %vm1013
        %v1016 = vshrl.u32 %v981, 16
        %v1018 = vrot.slane %v1016, 7
        %v1019 = vshll.u32 %v981, 16
        %v1021 = vor.u32 %v1018, %v1019
        %v1022 = vrot.slane %v1018, 4
        %v1024 = vshrl.u32 %v982, 16
        %v1026 = vrot.slane %v1024, 7
        %v1027 = vshll.u32 %v982, 16
        %v1029 = vor.u32 %v1026, %v1027
        %v1030 = vsel %vm1014, %v1022, %v1029
        %v1031 = vrot.slane %v1026, 4
        %v1033 = vshrl.u32 %v983, 16
        %v1035 = vrot.slane %v1033, 7
        %v1036 = vshll.u32 %v983, 16
        %v1038 = vor.u32 %v1035, %v1036
        %v1039 = vrot.slane %v1035, 4
        %v1041 = vshrl.u32 %v984, 16
        %v1043 = vrot.slane %v1041, 7
        %v1044 = vshll.u32 %v984, 16
        %v1046 = vor.u32 %v1043, %v1044
        %v1047 = vsel %vm1014, %v1039, %v1046
        %v1048 = vrot.slane %v1043, 4
        %v1050 = vshrl.u32 %v985, 16
        %v1052 = vrot.slane %v1050, 7
        %v1053 = vshll.u32 %v985, 16
        %v1055 = vor.u32 %v1052, %v1053
        %v1056 = vrot.slane %v1052, 4
        %v1058 = vshrl.u32 %v986, 16
        %v1060 = vrot.slane %v1058, 7
        %v1061 = vshll.u32 %v986, 16
        %v1063 = vor.u32 %v1060, %v1061
        %v1064 = vsel %vm1014, %v1056, %v1063
        %v1065 = vrot.slane %v1060, 4
        %v1067 = vshrl.u32 %v987, 16
        %v1069 = vrot.slane %v1067, 7
        %v1070 = vshll.u32 %v987, 16
        %v1072 = vor.u32 %v1069, %v1070
        %v1073 = vrot.slane %v1069, 4
        %v1075 = vshrl.u32 %v988, 16
        %v1077 = vrot.slane %v1075, 7
        %v1078 = vshll.u32 %v988, 16
        %v1080 = vor.u32 %v1077, %v1078
        %v1081 = vsel %vm1014, %v1073, %v1080
        %v1082 = vrot.slane %v1077, 4
        %v1084 = vshrl.u32 %v989, 16
        %v1086 = vrot.slane %v1084, 7
        %v1087 = vshll.u32 %v989, 16
        %v1089 = vor.u32 %v1086, %v1087
        %v1090 = vrot.slane %v1086, 4
        %v1092 = vshrl.u32 %v990, 16
        %v1094 = vrot.slane %v1092, 7
        %v1095 = vshll.u32 %v990, 16
        %v1097 = vor.u32 %v1094, %v1095
        %v1098 = vsel %vm1014, %v1090, %v1097
        %v1099 = vrot.slane %v1094, 4
        %v1101 = vshrl.u32 %v991, 16
        %v1103 = vrot.slane %v1101, 7
        %v1104 = vshll.u32 %v991, 16
        %v1106 = vor.u32 %v1103, %v1104
        %v1107 = vrot.slane %v1103, 4
        %v1109 = vshrl.u32 %v992, 16
        %v1111 = vrot.slane %v1109, 7
        %v1112 = vshll.u32 %v992, 16
        %v1114 = vor.u32 %v1111, %v1112
        %v1115 = vsel %vm1014, %v1107, %v1114
        %v1116 = vrot.slane %v1111, 4
        %v1118 = vshrl.u32 %v993, 16
        %v1120 = vrot.slane %v1118, 7
        %v1121 = vshll.u32 %v993, 16
        %v1123 = vor.u32 %v1120, %v1121
        %v1124 = vrot.slane %v1120, 4
        %v1126 = vshrl.u32 %v994, 16
        %v1128 = vrot.slane %v1126, 7
        %v1129 = vshll.u32 %v994, 16
        %v1131 = vor.u32 %v1128, %v1129
        %v1132 = vsel %vm1014, %v1124, %v1131
        %v1133 = vrot.slane %v1128, 4
        %v1135 = vshrl.u32 %v995, 16
        %v1137 = vrot.slane %v1135, 7
        %v1138 = vshll.u32 %v995, 16
        %v1140 = vor.u32 %v1137, %v1138
        %v1141 = vrot.slane %v1137, 4
        %v1143 = vshrl.u32 %v996, 16
        %v1145 = vrot.slane %v1143, 7
        %v1146 = vshll.u32 %v996, 16
        %v1148 = vor.u32 %v1145, %v1146
        %v1149 = vsel %vm1014, %v1141, %v1148
        %v1150 = vrot.slane %v1145, 4
        %v1152 = vshrl.u32 %v997, 16
        %v1154 = vrot.slane %v1152, 7
        %v1155 = vshll.u32 %v997, 16
        %v1157 = vor.u32 %v1154, %v1155
        %v1158 = vrot.slane %v1154, 4
        %v1160 = vshrl.u32 %v998, 16
        %v1162 = vrot.slane %v1160, 7
        %v1163 = vshll.u32 %v998, 16
        %v1165 = vor.u32 %v1162, %v1163
        %v1166 = vsel %vm1014, %v1158, %v1165
        %v1167 = vrot.slane %v1162, 4
        %v1169 = vshrl.u32 %v999, 16
        %v1171 = vrot.slane %v1169, 7
        %v1172 = vshll.u32 %v999, 16
        %v1174 = vor.u32 %v1171, %v1172
        %v1175 = vrot.slane %v1171, 4
        %v1177 = vshrl.u32 %v1000, 16
        %v1179 = vrot.slane %v1177, 7
        %v1180 = vshll.u32 %v1000, 16
        %v1182 = vor.u32 %v1179, %v1180
        %v1183 = vsel %vm1014, %v1175, %v1182
        %v1184 = vrot.slane %v1179, 4
        %v1186 = vshrl.u32 %v1001, 16
        %v1188 = vrot.slane %v1186, 7
        %v1189 = vshll.u32 %v1001, 16
        %v1191 = vor.u32 %v1188, %v1189
        %v1192 = vrot.slane %v1188, 4
        %v1194 = vshrl.u32 %v1002, 16
        %v1196 = vrot.slane %v1194, 7
        %v1197 = vshll.u32 %v1002, 16
        %v1199 = vor.u32 %v1196, %v1197
        %v1200 = vsel %vm1014, %v1192, %v1199
        %v1201 = vrot.slane %v1196, 4
        %v1203 = vshrl.u32 %v1003, 16
        %v1205 = vrot.slane %v1203, 7
        %v1206 = vshll.u32 %v1003, 16
        %v1208 = vor.u32 %v1205, %v1206
        %v1209 = vrot.slane %v1205, 4
        %v1211 = vshrl.u32 %v1004, 16
        %v1213 = vrot.slane %v1211, 7
        %v1214 = vshll.u32 %v1004, 16
        %v1216 = vor.u32 %v1213, %v1214
        %v1217 = vsel %vm1014, %v1209, %v1216
        %v1218 = vrot.slane %v1213, 4
        %v1220 = vshrl.u32 %v1005, 16
        %v1222 = vrot.slane %v1220, 7
        %v1223 = vshll.u32 %v1005, 16
        %v1225 = vor.u32 %v1222, %v1223
        %v1226 = vrot.slane %v1222, 4
        %v1228 = vshrl.u32 %v1006, 16
        %v1230 = vrot.slane %v1228, 7
        %v1231 = vshll.u32 %v1006, 16
        %v1233 = vor.u32 %v1230, %v1231
        %v1234 = vsel %vm1014, %v1226, %v1233
        %v1235 = vrot.slane %v1230, 4
        %v1237 = vshrl.u32 %v1007, 16
        %v1239 = vrot.slane %v1237, 7
        %v1240 = vshll.u32 %v1007, 16
        %v1242 = vor.u32 %v1239, %v1240
        %v1243 = vrot.slane %v1239, 4
        %v1245 = vshrl.u32 %v1008, 16
        %v1247 = vrot.slane %v1245, 7
        %v1248 = vshll.u32 %v1008, 16
        %v1250 = vor.u32 %v1247, %v1248
        %v1251 = vsel %vm1014, %v1243, %v1250
        %v1252 = vrot.slane %v1247, 4
        %v1254 = vshrl.u32 %v1009, 16
        %v1256 = vrot.slane %v1254, 7
        %v1257 = vshll.u32 %v1009, 16
        %v1259 = vor.u32 %v1256, %v1257
        %v1260 = vrot.slane %v1256, 4
        %v1262 = vshrl.u32 %v1010, 16
        %v1264 = vrot.slane %v1262, 7
        %v1265 = vshll.u32 %v1010, 16
        %v1267 = vor.u32 %v1264, %v1265
        %v1268 = vsel %vm1014, %v1260, %v1267
        %v1269 = vrot.slane %v1264, 4
        %v1271 = vshrl.u32 %v1011, 16
        %v1273 = vrot.slane %v1271, 7
        %v1274 = vshll.u32 %v1011, 16
        %v1276 = vor.u32 %v1273, %v1274
        %v1277 = vrot.slane %v1273, 4
        %v1279 = vshrl.u32 %v1012, 16
        %v1281 = vrot.slane %v1279, 7
        %v1282 = vshll.u32 %v1012, 16
        %v1284 = vor.u32 %v1281, %v1282
        %v1285 = vsel %vm1014, %v1277, %v1284
        %v1286 = vrot.slane %v1281, 4
        %vm1335 = vcmask 1043456
        %vm1336 = vmand %vm1335, %vm931
        %v1337 = vld [vmem:[%s879] sm:$0xf]
        %v1338 = vsel %vm1336, %v1021, %v1337
        %1339 = vst [vmem:[%s879] sm:$0xf] %v1338
        %1340 = vst [vmem:[%s879 + $0x4] sm:$0xf] %v1030
        %v1341 = vld [vmem:[%s879 + $0x8] sm:$0x1]
        %v1342 = vsel %vm882, %v1031, %v1341
        %1343 = vst [vmem:[%s879 + $0x8] sm:$0x1] %v1342
        %v1344 = vld [vmem:[%s879 + $0xc] sm:$0xf]
        %v1345 = vsel %vm1336, %v1038, %v1344
        %1346 = vst [vmem:[%s879 + $0xc] sm:$0xf] %v1345
        %1347 = vst [vmem:[%s879 + $0x10] sm:$0xf] %v1047
        %v1348 = vld [vmem:[%s879 + $0x14] sm:$0x1]
        %v1349 = vsel %vm882, %v1048, %v1348
        %1350 = vst [vmem:[%s879 + $0x14] sm:$0x1] %v1349
        %v1351 = vld [vmem:[%s879 + $0x18] sm:$0xf]
        %v1352 = vsel %vm1336, %v1055, %v1351
        %1353 = vst [vmem:[%s879 + $0x18] sm:$0xf] %v1352
        %1354 = vst [vmem:[%s879 + $0x1c] sm:$0xf] %v1064
        %v1355 = vld [vmem:[%s879 + $0x20] sm:$0x1]
        %v1356 = vsel %vm882, %v1065, %v1355
        %1357 = vst [vmem:[%s879 + $0x20] sm:$0x1] %v1356
        %v1358 = vld [vmem:[%s879 + $0x24] sm:$0xf]
        %v1359 = vsel %vm1336, %v1072, %v1358
        %1360 = vst [vmem:[%s879 + $0x24] sm:$0xf] %v1359
        %1361 = vst [vmem:[%s879 + $0x28] sm:$0xf] %v1081
        %v1362 = vld [vmem:[%s879 + $0x2c] sm:$0x1]
        %v1363 = vsel %vm882, %v1082, %v1362
        %1364 = vst [vmem:[%s879 + $0x2c] sm:$0x1] %v1363
        %v1365 = vld [vmem:[%s879 + $0x30] sm:$0xf]
        %v1366 = vsel %vm1336, %v1089, %v1365
        %1367 = vst [vmem:[%s879 + $0x30] sm:$0xf] %v1366
        %1368 = vst [vmem:[%s879 + $0x34] sm:$0xf] %v1098
        %v1369 = vld [vmem:[%s879 + $0x38] sm:$0x1]
        %v1370 = vsel %vm882, %v1099, %v1369
        %1371 = vst [vmem:[%s879 + $0x38] sm:$0x1] %v1370
        %v1372 = vld [vmem:[%s879 + $0x3c] sm:$0xf]
        %v1373 = vsel %vm1336, %v1106, %v1372
        %1374 = vst [vmem:[%s879 + $0x3c] sm:$0xf] %v1373
        %1375 = vst [vmem:[%s879 + $0x40] sm:$0xf] %v1115
        %v1376 = vld [vmem:[%s879 + $0x44] sm:$0x1]
        %v1377 = vsel %vm882, %v1116, %v1376
        %1378 = vst [vmem:[%s879 + $0x44] sm:$0x1] %v1377
        %v1379 = vld [vmem:[%s879 + $0x48] sm:$0xf]
        %v1380 = vsel %vm1336, %v1123, %v1379
        %1381 = vst [vmem:[%s879 + $0x48] sm:$0xf] %v1380
        %1382 = vst [vmem:[%s879 + $0x4c] sm:$0xf] %v1132
        %v1383 = vld [vmem:[%s879 + $0x50] sm:$0x1]
        %v1384 = vsel %vm882, %v1133, %v1383
        %1385 = vst [vmem:[%s879 + $0x50] sm:$0x1] %v1384
        %v1386 = vld [vmem:[%s879 + $0x54] sm:$0xf]
        %v1387 = vsel %vm1336, %v1140, %v1386
        %1388 = vst [vmem:[%s879 + $0x54] sm:$0xf] %v1387
        %1389 = vst [vmem:[%s879 + $0x58] sm:$0xf] %v1149
        %v1390 = vld [vmem:[%s879 + $0x5c] sm:$0x1]
        %v1391 = vsel %vm882, %v1150, %v1390
        %1392 = vst [vmem:[%s879 + $0x5c] sm:$0x1] %v1391
        %v1393 = vld [vmem:[%s879 + $0x60] sm:$0xf]
        %v1394 = vsel %vm1336, %v1157, %v1393
        %1395 = vst [vmem:[%s879 + $0x60] sm:$0xf] %v1394
        %1396 = vst [vmem:[%s879 + $0x64] sm:$0xf] %v1166
        %v1397 = vld [vmem:[%s879 + $0x68] sm:$0x1]
        %v1398 = vsel %vm882, %v1167, %v1397
        %1399 = vst [vmem:[%s879 + $0x68] sm:$0x1] %v1398
        %v1400 = vld [vmem:[%s879 + $0x6c] sm:$0xf]
        %v1401 = vsel %vm1336, %v1174, %v1400
        %1402 = vst [vmem:[%s879 + $0x6c] sm:$0xf] %v1401
        %1403 = vst [vmem:[%s879 + $0x70] sm:$0xf] %v1183
        %v1404 = vld [vmem:[%s879 + $0x74] sm:$0x1]
        %v1405 = vsel %vm882, %v1184, %v1404
        %1406 = vst [vmem:[%s879 + $0x74] sm:$0x1] %v1405
        %v1407 = vld [vmem:[%s879 + $0x78] sm:$0xf]
        %v1408 = vsel %vm1336, %v1191, %v1407
        %1409 = vst [vmem:[%s879 + $0x78] sm:$0xf] %v1408
        %1410 = vst [vmem:[%s879 + $0x7c] sm:$0xf] %v1200
        %v1411 = vld [vmem:[%s879 + $0x80] sm:$0x1]
        %v1412 = vsel %vm882, %v1201, %v1411
        %1413 = vst [vmem:[%s879 + $0x80] sm:$0x1] %v1412
        %v1414 = vld [vmem:[%s879 + $0x84] sm:$0xf]
        %v1415 = vsel %vm1336, %v1208, %v1414
        %1416 = vst [vmem:[%s879 + $0x84] sm:$0xf] %v1415
        %1417 = vst [vmem:[%s879 + $0x88] sm:$0xf] %v1217
        %v1418 = vld [vmem:[%s879 + $0x8c] sm:$0x1]
        %v1419 = vsel %vm882, %v1218, %v1418
        %1420 = vst [vmem:[%s879 + $0x8c] sm:$0x1] %v1419
        %v1421 = vld [vmem:[%s879 + $0x90] sm:$0xf]
        %v1422 = vsel %vm1336, %v1225, %v1421
        %1423 = vst [vmem:[%s879 + $0x90] sm:$0xf] %v1422
        %1424 = vst [vmem:[%s879 + $0x94] sm:$0xf] %v1234
        %v1425 = vld [vmem:[%s879 + $0x98] sm:$0x1]
        %v1426 = vsel %vm882, %v1235, %v1425
        %1427 = vst [vmem:[%s879 + $0x98] sm:$0x1] %v1426
        %v1428 = vld [vmem:[%s879 + $0x9c] sm:$0xf]
        %v1429 = vsel %vm1336, %v1242, %v1428
        %1430 = vst [vmem:[%s879 + $0x9c] sm:$0xf] %v1429
        %1431 = vst [vmem:[%s879 + $0xa0] sm:$0xf] %v1251
        %v1432 = vld [vmem:[%s879 + $0xa4] sm:$0x1]
        %v1433 = vsel %vm882, %v1252, %v1432
        %1434 = vst [vmem:[%s879 + $0xa4] sm:$0x1] %v1433
        %v1435 = vld [vmem:[%s879 + $0xa8] sm:$0xf]
        %v1436 = vsel %vm1336, %v1259, %v1435
        %1437 = vst [vmem:[%s879 + $0xa8] sm:$0xf] %v1436
        %1438 = vst [vmem:[%s879 + $0xac] sm:$0xf] %v1268
        %v1439 = vld [vmem:[%s879 + $0xb0] sm:$0x1]
        %v1440 = vsel %vm882, %v1269, %v1439
        %1441 = vst [vmem:[%s879 + $0xb0] sm:$0x1] %v1440
        %v1442 = vld [vmem:[%s879 + $0xb4] sm:$0xf]
        %v1443 = vsel %vm1336, %v1276, %v1442
        %1444 = vst [vmem:[%s879 + $0xb4] sm:$0xf] %v1443
        %1445 = vst [vmem:[%s879 + $0xb8] sm:$0xf] %v1285
        %v1446 = vld [vmem:[%s879 + $0xbc] sm:$0x1]
        %v1447 = vsel %vm882, %v1286, %v1446
        %1448 = vst [vmem:[%s879 + $0xbc] sm:$0x1] %v1447
        %v1449 = vld [vmem:[#allocation2] sm:$0xf]
        %v1450 = vld [vmem:[#allocation2 + $0x4] sm:$0xf]
        %v1451 = vld [vmem:[#allocation2 + $0xc] sm:$0xf]
        %v1452 = vld [vmem:[#allocation2 + $0x10] sm:$0xf]
        %v1453 = vld [vmem:[#allocation2 + $0x18] sm:$0xf]
        %v1454 = vld [vmem:[#allocation2 + $0x1c] sm:$0xf]
        %v1455 = vld [vmem:[#allocation2 + $0x24] sm:$0xf]
        %v1456 = vld [vmem:[#allocation2 + $0x28] sm:$0xf]
        %v1457 = vld [vmem:[#allocation2 + $0x30] sm:$0xf]
        %v1458 = vld [vmem:[#allocation2 + $0x34] sm:$0xf]
        %v1459 = vld [vmem:[#allocation2 + $0x3c] sm:$0xf]
        %v1460 = vld [vmem:[#allocation2 + $0x40] sm:$0xf]
        %v1461 = vld [vmem:[#allocation2 + $0x48] sm:$0xf]
        %v1462 = vld [vmem:[#allocation2 + $0x4c] sm:$0xf]
        %v1463 = vld [vmem:[#allocation2 + $0x54] sm:$0xf]
        %v1464 = vld [vmem:[#allocation2 + $0x58] sm:$0xf]
        %v1465 = vld [vmem:[#allocation2 + $0x60] sm:$0xf]
        %v1466 = vld [vmem:[#allocation2 + $0x64] sm:$0xf]
        %v1467 = vld [vmem:[#allocation2 + $0x6c] sm:$0xf]
        %v1468 = vld [vmem:[#allocation2 + $0x70] sm:$0xf]
        %v1469 = vld [vmem:[#allocation2 + $0x78] sm:$0xf]
        %v1470 = vld [vmem:[#allocation2 + $0x7c] sm:$0xf]
        %v1471 = vld [vmem:[#allocation2 + $0x84] sm:$0xf]
        %v1472 = vld [vmem:[#allocation2 + $0x88] sm:$0xf]
        %v1473 = vld [vmem:[#allocation2 + $0x90] sm:$0xf]
        %v1474 = vld [vmem:[#allocation2 + $0x94] sm:$0xf]
        %v1475 = vld [vmem:[#allocation2 + $0x9c] sm:$0xf]
        %v1476 = vld [vmem:[#allocation2 + $0xa0] sm:$0xf]
        %v1477 = vld [vmem:[#allocation2 + $0xa8] sm:$0xf]
        %v1478 = vld [vmem:[#allocation2 + $0xac] sm:$0xf]
        %v1479 = vld [vmem:[#allocation2 + $0xb4] sm:$0xf]
        %v1480 = vld [vmem:[#allocation2 + $0xb8] sm:$0xf]
        %v1481 = vld [vmem:[#allocation2 + $0x8] sm:$0x1]
        %v1482 = vld [vmem:[#allocation2 + $0x14] sm:$0x1]
        %v1483 = vld [vmem:[#allocation2 + $0x20] sm:$0x1]
        %v1484 = vld [vmem:[#allocation2 + $0x2c] sm:$0x1]
        %v1485 = vld [vmem:[#allocation2 + $0x38] sm:$0x1]
        %v1486 = vld [vmem:[#allocation2 + $0x44] sm:$0x1]
        %v1487 = vld [vmem:[#allocation2 + $0x50] sm:$0x1]
        %v1488 = vld [vmem:[#allocation2 + $0x5c] sm:$0x1]
        %v1489 = vld [vmem:[#allocation2 + $0x68] sm:$0x1]
        %v1490 = vld [vmem:[#allocation2 + $0x74] sm:$0x1]
        %v1491 = vld [vmem:[#allocation2 + $0x80] sm:$0x1]
        %v1492 = vld [vmem:[#allocation2 + $0x8c] sm:$0x1]
        %v1493 = vld [vmem:[#allocation2 + $0x98] sm:$0x1]
        %v1494 = vld [vmem:[#allocation2 + $0xa4] sm:$0x1]
        %v1495 = vld [vmem:[#allocation2 + $0xb0] sm:$0x1]
        %v1496 = vld [vmem:[#allocation2 + $0xbc] sm:$0x1]
        %v1497 = vld [vmem:[#allocation2] sm:$0xe]
        %v1498 = vld [vmem:[#allocation2 + $0xc] sm:$0xe]
        %v1499 = vld [vmem:[#allocation2 + $0x18] sm:$0xe]
        %v1500 = vld [vmem:[#allocation2 + $0x24] sm:$0xe]
        %v1501 = vld [vmem:[#allocation2 + $0x30] sm:$0xe]
        %v1502 = vld [vmem:[#allocation2 + $0x3c] sm:$0xe]
        %v1503 = vld [vmem:[#allocation2 + $0x48] sm:$0xe]
        %v1504 = vld [vmem:[#allocation2 + $0x54] sm:$0xe]
        %v1505 = vld [vmem:[#allocation2 + $0x60] sm:$0xe]
        %v1506 = vld [vmem:[#allocation2 + $0x6c] sm:$0xe]
        %v1507 = vld [vmem:[#allocation2 + $0x78] sm:$0xe]
        %v1508 = vld [vmem:[#allocation2 + $0x84] sm:$0xe]
        %v1509 = vld [vmem:[#allocation2 + $0x90] sm:$0xe]
        %v1510 = vld [vmem:[#allocation2 + $0x9c] sm:$0xe]
        %v1511 = vld [vmem:[#allocation2 + $0xa8] sm:$0xe]
        %v1512 = vld [vmem:[#allocation2 + $0xb4] sm:$0xe]
        %v1513 = vld [vmem:[%s879] sm:$0xf]
        %v1514 = vld [vmem:[%s879 + $0x4] sm:$0xf]
        %v1515 = vld [vmem:[%s879 + $0xc] sm:$0xf]
        %v1516 = vld [vmem:[%s879 + $0x10] sm:$0xf]
        %v1517 = vld [vmem:[%s879 + $0x18] sm:$0xf]
        %v1518 = vld [vmem:[%s879 + $0x1c] sm:$0xf]
        %v1519 = vld [vmem:[%s879 + $0x24] sm:$0xf]
        %v1520 = vld [vmem:[%s879 + $0x28] sm:$0xf]
        %v1521 = vld [vmem:[%s879 + $0x30] sm:$0xf]
        %v1522 = vld [vmem:[%s879 + $0x34] sm:$0xf]
        %v1523 = vld [vmem:[%s879 + $0x3c] sm:$0xf]
        %v1524 = vld [vmem:[%s879 + $0x40] sm:$0xf]
        %v1525 = vld [vmem:[%s879 + $0x48] sm:$0xf]
        %v1526 = vld [vmem:[%s879 + $0x4c] sm:$0xf]
        %v1527 = vld [vmem:[%s879 + $0x54] sm:$0xf]
        %v1528 = vld [vmem:[%s879 + $0x58] sm:$0xf]
        %v1529 = vld [vmem:[%s879 + $0x60] sm:$0xf]
        %v1530 = vld [vmem:[%s879 + $0x64] sm:$0xf]
        %v1531 = vld [vmem:[%s879 + $0x6c] sm:$0xf]
        %v1532 = vld [vmem:[%s879 + $0x70] sm:$0xf]
        %v1533 = vld [vmem:[%s879 + $0x78] sm:$0xf]
        %v1534 = vld [vmem:[%s879 + $0x7c] sm:$0xf]
        %v1535 = vld [vmem:[%s879 + $0x84] sm:$0xf]
        %v1536 = vld [vmem:[%s879 + $0x88] sm:$0xf]
        %v1537 = vld [vmem:[%s879 + $0x90] sm:$0xf]
        %v1538 = vld [vmem:[%s879 + $0x94] sm:$0xf]
        %v1539 = vld [vmem:[%s879 + $0x9c] sm:$0xf]
        %v1540 = vld [vmem:[%s879 + $0xa0] sm:$0xf]
        %v1541 = vld [vmem:[%s879 + $0xa8] sm:$0xf]
        %v1542 = vld [vmem:[%s879 + $0xac] sm:$0xf]
        %v1543 = vld [vmem:[%s879 + $0xb4] sm:$0xf]
        %v1544 = vld [vmem:[%s879 + $0xb8] sm:$0xf]
        %v1545 = vld [vmem:[%s879 + $0x8] sm:$0x1]
        %v1546 = vld [vmem:[%s879 + $0x14] sm:$0x1]
        %v1547 = vld [vmem:[%s879 + $0x20] sm:$0x1]
        %v1548 = vld [vmem:[%s879 + $0x2c] sm:$0x1]
        %v1549 = vld [vmem:[%s879 + $0x38] sm:$0x1]
        %v1550 = vld [vmem:[%s879 + $0x44] sm:$0x1]
        %v1551 = vld [vmem:[%s879 + $0x50] sm:$0x1]
        %v1552 = vld [vmem:[%s879 + $0x5c] sm:$0x1]
        %v1553 = vld [vmem:[%s879 + $0x68] sm:$0x1]
        %v1554 = vld [vmem:[%s879 + $0x74] sm:$0x1]
        %v1555 = vld [vmem:[%s879 + $0x80] sm:$0x1]
        %v1556 = vld [vmem:[%s879 + $0x8c] sm:$0x1]
        %v1557 = vld [vmem:[%s879 + $0x98] sm:$0x1]
        %v1558 = vld [vmem:[%s879 + $0xa4] sm:$0x1]
        %v1559 = vld [vmem:[%s879 + $0xb0] sm:$0x1]
        %v1560 = vld [vmem:[%s879 + $0xbc] sm:$0x1]
        %v1561 = vld [vmem:[%s879] sm:$0xe]
        %v1562 = vld [vmem:[%s879 + $0xc] sm:$0xe]
        %v1563 = vld [vmem:[%s879 + $0x18] sm:$0xe]
        %v1564 = vld [vmem:[%s879 + $0x24] sm:$0xe]
        %v1565 = vld [vmem:[%s879 + $0x30] sm:$0xe]
        %v1566 = vld [vmem:[%s879 + $0x3c] sm:$0xe]
        %v1567 = vld [vmem:[%s879 + $0x48] sm:$0xe]
        %v1568 = vld [vmem:[%s879 + $0x54] sm:$0xe]
        %v1569 = vld [vmem:[%s879 + $0x60] sm:$0xe]
        %v1570 = vld [vmem:[%s879 + $0x6c] sm:$0xe]
        %v1571 = vld [vmem:[%s879 + $0x78] sm:$0xe]
        %v1572 = vld [vmem:[%s879 + $0x84] sm:$0xe]
        %v1573 = vld [vmem:[%s879 + $0x90] sm:$0xe]
        %v1574 = vld [vmem:[%s879 + $0x9c] sm:$0xe]
        %v1575 = vld [vmem:[%s879 + $0xa8] sm:$0xe]
        %v1576 = vld [vmem:[%s879 + $0xb4] sm:$0xe]
        %s1577 = scalar_lea.vmem [#allocation2], 24
        %v1578 = vld [vmem:[%s1577] sm:$0xf]
        %v1579 = vld [vmem:[%s1577 + $0x4] sm:$0xf]
        %v1580 = vld [vmem:[%s1577 + $0xc] sm:$0xf]
        %v1581 = vld [vmem:[%s1577 + $0x10] sm:$0xf]
        %v1582 = vld [vmem:[%s1577 + $0x18] sm:$0xf]
        %v1583 = vld [vmem:[%s1577 + $0x1c] sm:$0xf]
        %v1584 = vld [vmem:[%s1577 + $0x24] sm:$0xf]
        %v1585 = vld [vmem:[%s1577 + $0x28] sm:$0xf]
        %v1586 = vld [vmem:[%s1577 + $0x30] sm:$0xf]
        %v1587 = vld [vmem:[%s1577 + $0x34] sm:$0xf]
        %v1588 = vld [vmem:[%s1577 + $0x3c] sm:$0xf]
        %v1589 = vld [vmem:[%s1577 + $0x40] sm:$0xf]
        %v1590 = vld [vmem:[%s1577 + $0x48] sm:$0xf]
        %v1591 = vld [vmem:[%s1577 + $0x4c] sm:$0xf]
        %v1592 = vld [vmem:[%s1577 + $0x54] sm:$0xf]
        %v1593 = vld [vmem:[%s1577 + $0x58] sm:$0xf]
        %v1594 = vld [vmem:[%s1577 + $0x60] sm:$0xf]
        %v1595 = vld [vmem:[%s1577 + $0x64] sm:$0xf]
        %v1596 = vld [vmem:[%s1577 + $0x6c] sm:$0xf]
        %v1597 = vld [vmem:[%s1577 + $0x70] sm:$0xf]
        %v1598 = vld [vmem:[%s1577 + $0x78] sm:$0xf]
        %v1599 = vld [vmem:[%s1577 + $0x7c] sm:$0xf]
        %v1600 = vld [vmem:[%s1577 + $0x84] sm:$0xf]
        %v1601 = vld [vmem:[%s1577 + $0x88] sm:$0xf]
        %v1602 = vld [vmem:[%s1577 + $0x90] sm:$0xf]
        %v1603 = vld [vmem:[%s1577 + $0x94] sm:$0xf]
        %v1604 = vld [vmem:[%s1577 + $0x9c] sm:$0xf]
        %v1605 = vld [vmem:[%s1577 + $0xa0] sm:$0xf]
        %v1606 = vld [vmem:[%s1577 + $0xa8] sm:$0xf]
        %v1607 = vld [vmem:[%s1577 + $0xac] sm:$0xf]
        %v1608 = vld [vmem:[%s1577 + $0xb4] sm:$0xf]
        %v1609 = vld [vmem:[%s1577 + $0xb8] sm:$0xf]
        %v1610 = vld [vmem:[%s1577 + $0x8] sm:$0x1]
        %v1611 = vld [vmem:[%s1577 + $0x14] sm:$0x1]
        %v1612 = vld [vmem:[%s1577 + $0x20] sm:$0x1]
        %v1613 = vld [vmem:[%s1577 + $0x2c] sm:$0x1]
        %v1614 = vld [vmem:[%s1577 + $0x38] sm:$0x1]
        %v1615 = vld [vmem:[%s1577 + $0x44] sm:$0x1]
        %v1616 = vld [vmem:[%s1577 + $0x50] sm:$0x1]
        %v1617 = vld [vmem:[%s1577 + $0x5c] sm:$0x1]
        %v1618 = vld [vmem:[%s1577 + $0x68] sm:$0x1]
        %v1619 = vld [vmem:[%s1577 + $0x74] sm:$0x1]
        %v1620 = vld [vmem:[%s1577 + $0x80] sm:$0x1]
        %v1621 = vld [vmem:[%s1577 + $0x8c] sm:$0x1]
        %v1622 = vld [vmem:[%s1577 + $0x98] sm:$0x1]
        %v1623 = vld [vmem:[%s1577 + $0xa4] sm:$0x1]
        %v1624 = vld [vmem:[%s1577 + $0xb0] sm:$0x1]
        %v1625 = vld [vmem:[%s1577 + $0xbc] sm:$0x1]
        %v1626 = vld [vmem:[%s1577] sm:$0xe]
        %v1627 = vld [vmem:[%s1577 + $0xc] sm:$0xe]
        %v1628 = vld [vmem:[%s1577 + $0x18] sm:$0xe]
        %v1629 = vld [vmem:[%s1577 + $0x24] sm:$0xe]
        %v1630 = vld [vmem:[%s1577 + $0x30] sm:$0xe]
        %v1631 = vld [vmem:[%s1577 + $0x3c] sm:$0xe]
        %v1632 = vld [vmem:[%s1577 + $0x48] sm:$0xe]
        %v1633 = vld [vmem:[%s1577 + $0x54] sm:$0xe]
        %v1634 = vld [vmem:[%s1577 + $0x60] sm:$0xe]
        %v1635 = vld [vmem:[%s1577 + $0x6c] sm:$0xe]
        %v1636 = vld [vmem:[%s1577 + $0x78] sm:$0xe]
        %v1637 = vld [vmem:[%s1577 + $0x84] sm:$0xe]
        %v1638 = vld [vmem:[%s1577 + $0x90] sm:$0xe]
        %v1639 = vld [vmem:[%s1577 + $0x9c] sm:$0xe]
        %v1640 = vld [vmem:[%s1577 + $0xa8] sm:$0xe]
        %v1641 = vld [vmem:[%s1577 + $0xb4] sm:$0xe]
        %v1674 = vunpack.c.l.b16 %v1449
        %v1675 = vunpack.c.l.b16 %v1450
        %v1676 = vunpack.c.l.b16 %v1451
        %v1677 = vunpack.c.l.b16 %v1452
        %v1678 = vunpack.c.l.b16 %v1453
        %v1679 = vunpack.c.l.b16 %v1454
        %v1680 = vunpack.c.l.b16 %v1455
        %v1681 = vunpack.c.l.b16 %v1456
        %v1682 = vunpack.c.l.b16 %v1457
        %v1683 = vunpack.c.l.b16 %v1458
        %v1684 = vunpack.c.l.b16 %v1459
        %v1685 = vunpack.c.l.b16 %v1460
        %v1686 = vunpack.c.l.b16 %v1461
        %v1687 = vunpack.c.l.b16 %v1462
        %v1688 = vunpack.c.l.b16 %v1463
        %v1689 = vunpack.c.l.b16 %v1464
        %v1690 = vunpack.c.l.b16 %v1465
        %v1691 = vunpack.c.l.b16 %v1466
        %v1692 = vunpack.c.l.b16 %v1467
        %v1693 = vunpack.c.l.b16 %v1468
        %v1694 = vunpack.c.l.b16 %v1469
        %v1695 = vunpack.c.l.b16 %v1470
        %v1696 = vunpack.c.l.b16 %v1471
        %v1697 = vunpack.c.l.b16 %v1472
        %v1698 = vunpack.c.l.b16 %v1473
        %v1699 = vunpack.c.l.b16 %v1474
        %v1700 = vunpack.c.l.b16 %v1475
        %v1701 = vunpack.c.l.b16 %v1476
        %v1702 = vunpack.c.l.b16 %v1477
        %v1703 = vunpack.c.l.b16 %v1478
        %v1704 = vunpack.c.l.b16 %v1479
        %v1705 = vunpack.c.l.b16 %v1480
        %v1706 = vpack.c.b16 %v1675, %v1674
        %v1707 = vpack.c.b16 %v1677, %v1676
        %v1708 = vpack.c.b16 %v1679, %v1678
        %v1709 = vpack.c.b16 %v1681, %v1680
        %v1710 = vpack.c.b16 %v1683, %v1682
        %v1711 = vpack.c.b16 %v1685, %v1684
        %v1712 = vpack.c.b16 %v1687, %v1686
        %v1713 = vpack.c.b16 %v1689, %v1688
        %v1714 = vpack.c.b16 %v1691, %v1690
        %v1715 = vpack.c.b16 %v1693, %v1692
        %v1716 = vpack.c.b16 %v1695, %v1694
        %v1717 = vpack.c.b16 %v1697, %v1696
        %v1718 = vpack.c.b16 %v1699, %v1698
        %v1719 = vpack.c.b16 %v1701, %v1700
        %v1720 = vpack.c.b16 %v1703, %v1702
        %v1721 = vpack.c.b16 %v1705, %v1704
        %v1754 = vunpack.c.l.b16 %v1481
        %v1755 = vunpack.c.l.b16 %v1482
        %v1756 = vunpack.c.l.b16 %v1483
        %v1757 = vunpack.c.l.b16 %v1484
        %v1758 = vunpack.c.l.b16 %v1485
        %v1759 = vunpack.c.l.b16 %v1486
        %v1760 = vunpack.c.l.b16 %v1487
        %v1761 = vunpack.c.l.b16 %v1488
        %v1762 = vunpack.c.l.b16 %v1489
        %v1763 = vunpack.c.l.b16 %v1490
        %v1764 = vunpack.c.l.b16 %v1491
        %v1765 = vunpack.c.l.b16 %v1492
        %v1766 = vunpack.c.l.b16 %v1493
        %v1767 = vunpack.c.l.b16 %v1494
        %v1768 = vunpack.c.l.b16 %v1495
        %v1769 = vunpack.c.l.b16 %v1496
        %v1770 = vpack.c.b16 %v1754, %v1754
        %v1771 = vpack.c.b16 %v1755, %v1755
        %v1772 = vpack.c.b16 %v1756, %v1756
        %v1773 = vpack.c.b16 %v1757, %v1757
        %v1774 = vpack.c.b16 %v1758, %v1758
        %v1775 = vpack.c.b16 %v1759, %v1759
        %v1776 = vpack.c.b16 %v1760, %v1760
        %v1777 = vpack.c.b16 %v1761, %v1761
        %v1778 = vpack.c.b16 %v1762, %v1762
        %v1779 = vpack.c.b16 %v1763, %v1763
        %v1780 = vpack.c.b16 %v1764, %v1764
        %v1781 = vpack.c.b16 %v1765, %v1765
        %v1782 = vpack.c.b16 %v1766, %v1766
        %v1783 = vpack.c.b16 %v1767, %v1767
        %v1784 = vpack.c.b16 %v1768, %v1768
        %v1785 = vpack.c.b16 %v1769, %v1769
        %vm1786 = vsmask.f32 7424
        %v1788 = vshrl.u32 %v1706, 16
        %v1790 = vshll.u32 %v1706, 16
        %v1792 = vrot.slane %v1790, 1
        %v1793 = vor.u32 %v1788, %v1792
        %v1795 = vshll.u32 %v1770, 16
        %v1797 = vrot.slane %v1795, 1
        %v1798 = vsel %vm1786, %v1793, %v1797
        %v1800 = vshrl.u32 %v1707, 16
        %v1802 = vshll.u32 %v1707, 16
        %v1804 = vrot.slane %v1802, 1
        %v1805 = vor.u32 %v1800, %v1804
        %v1807 = vshll.u32 %v1771, 16
        %v1809 = vrot.slane %v1807, 1
        %v1810 = vsel %vm1786, %v1805, %v1809
        %v1812 = vshrl.u32 %v1708, 16
        %v1814 = vshll.u32 %v1708, 16
        %v1816 = vrot.slane %v1814, 1
        %v1817 = vor.u32 %v1812, %v1816
        %v1819 = vshll.u32 %v1772, 16
        %v1821 = vrot.slane %v1819, 1
        %v1822 = vsel %vm1786, %v1817, %v1821
        %v1824 = vshrl.u32 %v1709, 16
        %v1826 = vshll.u32 %v1709, 16
        %v1828 = vrot.slane %v1826, 1
        %v1829 = vor.u32 %v1824, %v1828
        %v1831 = vshll.u32 %v1773, 16
        %v1833 = vrot.slane %v1831, 1
        %v1834 = vsel %vm1786, %v1829, %v1833
        %v1836 = vshrl.u32 %v1710, 16
        %v1838 = vshll.u32 %v1710, 16
        %v1840 = vrot.slane %v1838, 1
        %v1841 = vor.u32 %v1836, %v1840
        %v1843 = vshll.u32 %v1774, 16
        %v1845 = vrot.slane %v1843, 1
        %v1846 = vsel %vm1786, %v1841, %v1845
        %v1848 = vshrl.u32 %v1711, 16
        %v1850 = vshll.u32 %v1711, 16
        %v1852 = vrot.slane %v1850, 1
        %v1853 = vor.u32 %v1848, %v1852
        %v1855 = vshll.u32 %v1775, 16
        %v1857 = vrot.slane %v1855, 1
        %v1858 = vsel %vm1786, %v1853, %v1857
        %v1860 = vshrl.u32 %v1712, 16
        %v1862 = vshll.u32 %v1712, 16
        %v1864 = vrot.slane %v1862, 1
        %v1865 = vor.u32 %v1860, %v1864
        %v1867 = vshll.u32 %v1776, 16
        %v1869 = vrot.slane %v1867, 1
        %v1870 = vsel %vm1786, %v1865, %v1869
        %v1872 = vshrl.u32 %v1713, 16
        %v1874 = vshll.u32 %v1713, 16
        %v1876 = vrot.slane %v1874, 1
        %v1877 = vor.u32 %v1872, %v1876
        %v1879 = vshll.u32 %v1777, 16
        %v1881 = vrot.slane %v1879, 1
        %v1882 = vsel %vm1786, %v1877, %v1881
        %v1884 = vshrl.u32 %v1714, 16
        %v1886 = vshll.u32 %v1714, 16
        %v1888 = vrot.slane %v1886, 1
        %v1889 = vor.u32 %v1884, %v1888
        %v1891 = vshll.u32 %v1778, 16
        %v1893 = vrot.slane %v1891, 1
        %v1894 = vsel %vm1786, %v1889, %v1893
        %v1896 = vshrl.u32 %v1715, 16
        %v1898 = vshll.u32 %v1715, 16
        %v1900 = vrot.slane %v1898, 1
        %v1901 = vor.u32 %v1896, %v1900
        %v1903 = vshll.u32 %v1779, 16
        %v1905 = vrot.slane %v1903, 1
        %v1906 = vsel %vm1786, %v1901, %v1905
        %v1908 = vshrl.u32 %v1716, 16
        %v1910 = vshll.u32 %v1716, 16
        %v1912 = vrot.slane %v1910, 1
        %v1913 = vor.u32 %v1908, %v1912
        %v1915 = vshll.u32 %v1780, 16
        %v1917 = vrot.slane %v1915, 1
        %v1918 = vsel %vm1786, %v1913, %v1917
        %v1920 = vshrl.u32 %v1717, 16
        %v1922 = vshll.u32 %v1717, 16
        %v1924 = vrot.slane %v1922, 1
        %v1925 = vor.u32 %v1920, %v1924
        %v1927 = vshll.u32 %v1781, 16
        %v1929 = vrot.slane %v1927, 1
        %v1930 = vsel %vm1786, %v1925, %v1929
        %v1932 = vshrl.u32 %v1718, 16
        %v1934 = vshll.u32 %v1718, 16
        %v1936 = vrot.slane %v1934, 1
        %v1937 = vor.u32 %v1932, %v1936
        %v1939 = vshll.u32 %v1782, 16
        %v1941 = vrot.slane %v1939, 1
        %v1942 = vsel %vm1786, %v1937, %v1941
        %v1944 = vshrl.u32 %v1719, 16
        %v1946 = vshll.u32 %v1719, 16
        %v1948 = vrot.slane %v1946, 1
        %v1949 = vor.u32 %v1944, %v1948
        %v1951 = vshll.u32 %v1783, 16
        %v1953 = vrot.slane %v1951, 1
        %v1954 = vsel %vm1786, %v1949, %v1953
        %v1956 = vshrl.u32 %v1720, 16
        %v1958 = vshll.u32 %v1720, 16
        %v1960 = vrot.slane %v1958, 1
        %v1961 = vor.u32 %v1956, %v1960
        %v1963 = vshll.u32 %v1784, 16
        %v1965 = vrot.slane %v1963, 1
        %v1966 = vsel %vm1786, %v1961, %v1965
        %v1968 = vshrl.u32 %v1721, 16
        %v1970 = vshll.u32 %v1721, 16
        %v1972 = vrot.slane %v1970, 1
        %v1973 = vor.u32 %v1968, %v1972
        %v1975 = vshll.u32 %v1785, 16
        %v1977 = vrot.slane %v1975, 1
        %v1978 = vsel %vm1786, %v1973, %v1977
        %v2011 = vunpack.c.l.b16 %v1497
        %v2012 = vunpack.c.l.b16 %v1498
        %v2013 = vunpack.c.l.b16 %v1499
        %v2014 = vunpack.c.l.b16 %v1500
        %v2015 = vunpack.c.l.b16 %v1501
        %v2016 = vunpack.c.l.b16 %v1502
        %v2017 = vunpack.c.l.b16 %v1503
        %v2018 = vunpack.c.l.b16 %v1504
        %v2019 = vunpack.c.l.b16 %v1505
        %v2020 = vunpack.c.l.b16 %v1506
        %v2021 = vunpack.c.l.b16 %v1507
        %v2022 = vunpack.c.l.b16 %v1508
        %v2023 = vunpack.c.l.b16 %v1509
        %v2024 = vunpack.c.l.b16 %v1510
        %v2025 = vunpack.c.l.b16 %v1511
        %v2026 = vunpack.c.l.b16 %v1512
        %v2027 = vpack.c.b16 %v1675, %v2011
        %v2028 = vpack.c.b16 %v1677, %v2012
        %v2029 = vpack.c.b16 %v1679, %v2013
        %v2030 = vpack.c.b16 %v1681, %v2014
        %v2031 = vpack.c.b16 %v1683, %v2015
        %v2032 = vpack.c.b16 %v1685, %v2016
        %v2033 = vpack.c.b16 %v1687, %v2017
        %v2034 = vpack.c.b16 %v1689, %v2018
        %v2035 = vpack.c.b16 %v1691, %v2019
        %v2036 = vpack.c.b16 %v1693, %v2020
        %v2037 = vpack.c.b16 %v1695, %v2021
        %v2038 = vpack.c.b16 %v1697, %v2022
        %v2039 = vpack.c.b16 %v1699, %v2023
        %v2040 = vpack.c.b16 %v1701, %v2024
        %v2041 = vpack.c.b16 %v1703, %v2025
        %v2042 = vpack.c.b16 %v1705, %v2026
        %vm2043 = vcmask 1046528
        %v2044 = vrot.slane %v2027, 1
        %v2045 = vrot.slane %v1770, 1
        %v2046 = vsel %vm2043, %v2044, %v2045
        %v2047 = vrot.slane %v2028, 1
        %v2048 = vrot.slane %v1771, 1
        %v2049 = vsel %vm2043, %v2047, %v2048
        %v2050 = vrot.slane %v2029, 1
        %v2051 = vrot.slane %v1772, 1
        %v2052 = vsel %vm2043, %v2050, %v2051
        %v2053 = vrot.slane %v2030, 1
        %v2054 = vrot.slane %v1773, 1
        %v2055 = vsel %vm2043, %v2053, %v2054
        %v2056 = vrot.slane %v2031, 1
        %v2057 = vrot.slane %v1774, 1
        %v2058 = vsel %vm2043, %v2056, %v2057
        %v2059 = vrot.slane %v2032, 1
        %v2060 = vrot.slane %v1775, 1
        %v2061 = vsel %vm2043, %v2059, %v2060
        %v2062 = vrot.slane %v2033, 1
        %v2063 = vrot.slane %v1776, 1
        %v2064 = vsel %vm2043, %v2062, %v2063
        %v2065 = vrot.slane %v2034, 1
        %v2066 = vrot.slane %v1777, 1
        %v2067 = vsel %vm2043, %v2065, %v2066
        %v2068 = vrot.slane %v2035, 1
        %v2069 = vrot.slane %v1778, 1
        %v2070 = vsel %vm2043, %v2068, %v2069
        %v2071 = vrot.slane %v2036, 1
        %v2072 = vrot.slane %v1779, 1
        %v2073 = vsel %vm2043, %v2071, %v2072
        %v2074 = vrot.slane %v2037, 1
        %v2075 = vrot.slane %v1780, 1
        %v2076 = vsel %vm2043, %v2074, %v2075
        %v2077 = vrot.slane %v2038, 1
        %v2078 = vrot.slane %v1781, 1
        %v2079 = vsel %vm2043, %v2077, %v2078
        %v2080 = vrot.slane %v2039, 1
        %v2081 = vrot.slane %v1782, 1
        %v2082 = vsel %vm2043, %v2080, %v2081
        %v2083 = vrot.slane %v2040, 1
        %v2084 = vrot.slane %v1783, 1
        %v2085 = vsel %vm2043, %v2083, %v2084
        %v2086 = vrot.slane %v2041, 1
        %v2087 = vrot.slane %v1784, 1
        %v2088 = vsel %vm2043, %v2086, %v2087
        %v2089 = vrot.slane %v2042, 1
        %v2090 = vrot.slane %v1785, 1
        %v2091 = vsel %vm2043, %v2089, %v2090
        %v2140 = vunpack.c.l.b16 %v1513
        %v2141 = vunpack.c.l.b16 %v1514
        %v2142 = vunpack.c.l.b16 %v1515
        %v2143 = vunpack.c.l.b16 %v1516
        %v2144 = vunpack.c.l.b16 %v1517
        %v2145 = vunpack.c.l.b16 %v1518
        %v2146 = vunpack.c.l.b16 %v1519
        %v2147 = vunpack.c.l.b16 %v1520
        %v2148 = vunpack.c.l.b16 %v1521
        %v2149 = vunpack.c.l.b16 %v1522
        %v2150 = vunpack.c.l.b16 %v1523
        %v2151 = vunpack.c.l.b16 %v1524
        %v2152 = vunpack.c.l.b16 %v1525
        %v2153 = vunpack.c.l.b16 %v1526
        %v2154 = vunpack.c.l.b16 %v1527
        %v2155 = vunpack.c.l.b16 %v1528
        %v2156 = vunpack.c.l.b16 %v1529
        %v2157 = vunpack.c.l.b16 %v1530
        %v2158 = vunpack.c.l.b16 %v1531
        %v2159 = vunpack.c.l.b16 %v1532
        %v2160 = vunpack.c.l.b16 %v1533
        %v2161 = vunpack.c.l.b16 %v1534
        %v2162 = vunpack.c.l.b16 %v1535
        %v2163 = vunpack.c.l.b16 %v1536
        %v2164 = vunpack.c.l.b16 %v1537
        %v2165 = vunpack.c.l.b16 %v1538
        %v2166 = vunpack.c.l.b16 %v1539
        %v2167 = vunpack.c.l.b16 %v1540
        %v2168 = vunpack.c.l.b16 %v1541
        %v2169 = vunpack.c.l.b16 %v1542
        %v2170 = vunpack.c.l.b16 %v1543
        %v2171 = vunpack.c.l.b16 %v1544
        %v2172 = vpack.c.b16 %v2141, %v2140
        %v2173 = vpack.c.b16 %v2143, %v2142
        %v2174 = vpack.c.b16 %v2145, %v2144
        %v2175 = vpack.c.b16 %v2147, %v2146
        %v2176 = vpack.c.b16 %v2149, %v2148
        %v2177 = vpack.c.b16 %v2151, %v2150
        %v2178 = vpack.c.b16 %v2153, %v2152
        %v2179 = vpack.c.b16 %v2155, %v2154
        %v2180 = vpack.c.b16 %v2157, %v2156
        %v2181 = vpack.c.b16 %v2159, %v2158
        %v2182 = vpack.c.b16 %v2161, %v2160
        %v2183 = vpack.c.b16 %v2163, %v2162
        %v2184 = vpack.c.b16 %v2165, %v2164
        %v2185 = vpack.c.b16 %v2167, %v2166
        %v2186 = vpack.c.b16 %v2169, %v2168
        %v2187 = vpack.c.b16 %v2171, %v2170
        %v2220 = vunpack.c.l.b16 %v1545
        %v2221 = vunpack.c.l.b16 %v1546
        %v2222 = vunpack.c.l.b16 %v1547
        %v2223 = vunpack.c.l.b16 %v1548
        %v2224 = vunpack.c.l.b16 %v1549
        %v2225 = vunpack.c.l.b16 %v1550
        %v2226 = vunpack.c.l.b16 %v1551
        %v2227 = vunpack.c.l.b16 %v1552
        %v2228 = vunpack.c.l.b16 %v1553
        %v2229 = vunpack.c.l.b16 %v1554
        %v2230 = vunpack.c.l.b16 %v1555
        %v2231 = vunpack.c.l.b16 %v1556
        %v2232 = vunpack.c.l.b16 %v1557
        %v2233 = vunpack.c.l.b16 %v1558
        %v2234 = vunpack.c.l.b16 %v1559
        %v2235 = vunpack.c.l.b16 %v1560
        %v2236 = vpack.c.b16 %v2220, %v2220
        %v2237 = vpack.c.b16 %v2221, %v2221
        %v2238 = vpack.c.b16 %v2222, %v2222
        %v2239 = vpack.c.b16 %v2223, %v2223
        %v2240 = vpack.c.b16 %v2224, %v2224
        %v2241 = vpack.c.b16 %v2225, %v2225
        %v2242 = vpack.c.b16 %v2226, %v2226
        %v2243 = vpack.c.b16 %v2227, %v2227
        %v2244 = vpack.c.b16 %v2228, %v2228
        %v2245 = vpack.c.b16 %v2229, %v2229
        %v2246 = vpack.c.b16 %v2230, %v2230
        %v2247 = vpack.c.b16 %v2231, %v2231
        %v2248 = vpack.c.b16 %v2232, %v2232
        %v2249 = vpack.c.b16 %v2233, %v2233
        %v2250 = vpack.c.b16 %v2234, %v2234
        %v2251 = vpack.c.b16 %v2235, %v2235
        %v2253 = vshrl.u32 %v2172, 16
        %v2255 = vshll.u32 %v2172, 16
        %v2257 = vrot.slane %v2255, 1
        %v2258 = vor.u32 %v2253, %v2257
        %v2260 = vshll.u32 %v2236, 16
        %v2262 = vrot.slane %v2260, 1
        %v2263 = vsel %vm1786, %v2258, %v2262
        %v2265 = vshrl.u32 %v2173, 16
        %v2267 = vshll.u32 %v2173, 16
        %v2269 = vrot.slane %v2267, 1
        %v2270 = vor.u32 %v2265, %v2269
        %v2272 = vshll.u32 %v2237, 16
        %v2274 = vrot.slane %v2272, 1
        %v2275 = vsel %vm1786, %v2270, %v2274
        %v2277 = vshrl.u32 %v2174, 16
        %v2279 = vshll.u32 %v2174, 16
        %v2281 = vrot.slane %v2279, 1
        %v2282 = vor.u32 %v2277, %v2281
        %v2284 = vshll.u32 %v2238, 16
        %v2286 = vrot.slane %v2284, 1
        %v2287 = vsel %vm1786, %v2282, %v2286
        %v2289 = vshrl.u32 %v2175, 16
        %v2291 = vshll.u32 %v2175, 16
        %v2293 = vrot.slane %v2291, 1
        %v2294 = vor.u32 %v2289, %v2293
        %v2296 = vshll.u32 %v2239, 16
        %v2298 = vrot.slane %v2296, 1
        %v2299 = vsel %vm1786, %v2294, %v2298
        %v2301 = vshrl.u32 %v2176, 16
        %v2303 = vshll.u32 %v2176, 16
        %v2305 = vrot.slane %v2303, 1
        %v2306 = vor.u32 %v2301, %v2305
        %v2308 = vshll.u32 %v2240, 16
        %v2310 = vrot.slane %v2308, 1
        %v2311 = vsel %vm1786, %v2306, %v2310
        %v2313 = vshrl.u32 %v2177, 16
        %v2315 = vshll.u32 %v2177, 16
        %v2317 = vrot.slane %v2315, 1
        %v2318 = vor.u32 %v2313, %v2317
        %v2320 = vshll.u32 %v2241, 16
        %v2322 = vrot.slane %v2320, 1
        %v2323 = vsel %vm1786, %v2318, %v2322
        %v2325 = vshrl.u32 %v2178, 16
        %v2327 = vshll.u32 %v2178, 16
        %v2329 = vrot.slane %v2327, 1
        %v2330 = vor.u32 %v2325, %v2329
        %v2332 = vshll.u32 %v2242, 16
        %v2334 = vrot.slane %v2332, 1
        %v2335 = vsel %vm1786, %v2330, %v2334
        %v2337 = vshrl.u32 %v2179, 16
        %v2339 = vshll.u32 %v2179, 16
        %v2341 = vrot.slane %v2339, 1
        %v2342 = vor.u32 %v2337, %v2341
        %v2344 = vshll.u32 %v2243, 16
        %v2346 = vrot.slane %v2344, 1
        %v2347 = vsel %vm1786, %v2342, %v2346
        %v2349 = vshrl.u32 %v2180, 16
        %v2351 = vshll.u32 %v2180, 16
        %v2353 = vrot.slane %v2351, 1
        %v2354 = vor.u32 %v2349, %v2353
        %v2356 = vshll.u32 %v2244, 16
        %v2358 = vrot.slane %v2356, 1
        %v2359 = vsel %vm1786, %v2354, %v2358
        %v2361 = vshrl.u32 %v2181, 16
        %v2363 = vshll.u32 %v2181, 16
        %v2365 = vrot.slane %v2363, 1
        %v2366 = vor.u32 %v2361, %v2365
        %v2368 = vshll.u32 %v2245, 16
        %v2370 = vrot.slane %v2368, 1
        %v2371 = vsel %vm1786, %v2366, %v2370
        %v2373 = vshrl.u32 %v2182, 16
        %v2375 = vshll.u32 %v2182, 16
        %v2377 = vrot.slane %v2375, 1
        %v2378 = vor.u32 %v2373, %v2377
        %v2380 = vshll.u32 %v2246, 16
        %v2382 = vrot.slane %v2380, 1
        %v2383 = vsel %vm1786, %v2378, %v2382
        %v2385 = vshrl.u32 %v2183, 16
        %v2387 = vshll.u32 %v2183, 16
        %v2389 = vrot.slane %v2387, 1
        %v2390 = vor.u32 %v2385, %v2389
        %v2392 = vshll.u32 %v2247, 16
        %v2394 = vrot.slane %v2392, 1
        %v2395 = vsel %vm1786, %v2390, %v2394
        %v2397 = vshrl.u32 %v2184, 16
        %v2399 = vshll.u32 %v2184, 16
        %v2401 = vrot.slane %v2399, 1
        %v2402 = vor.u32 %v2397, %v2401
        %v2404 = vshll.u32 %v2248, 16
        %v2406 = vrot.slane %v2404, 1
        %v2407 = vsel %vm1786, %v2402, %v2406
        %v2409 = vshrl.u32 %v2185, 16
        %v2411 = vshll.u32 %v2185, 16
        %v2413 = vrot.slane %v2411, 1
        %v2414 = vor.u32 %v2409, %v2413
        %v2416 = vshll.u32 %v2249, 16
        %v2418 = vrot.slane %v2416, 1
        %v2419 = vsel %vm1786, %v2414, %v2418
        %v2421 = vshrl.u32 %v2186, 16
        %v2423 = vshll.u32 %v2186, 16
        %v2425 = vrot.slane %v2423, 1
        %v2426 = vor.u32 %v2421, %v2425
        %v2428 = vshll.u32 %v2250, 16
        %v2430 = vrot.slane %v2428, 1
        %v2431 = vsel %vm1786, %v2426, %v2430
        %v2433 = vshrl.u32 %v2187, 16
        %v2435 = vshll.u32 %v2187, 16
        %v2437 = vrot.slane %v2435, 1
        %v2438 = vor.u32 %v2433, %v2437
        %v2440 = vshll.u32 %v2251, 16
        %v2442 = vrot.slane %v2440, 1
        %v2443 = vsel %vm1786, %v2438, %v2442
        %v2476 = vunpack.c.l.b16 %v1561
        %v2477 = vunpack.c.l.b16 %v1562
        %v2478 = vunpack.c.l.b16 %v1563
        %v2479 = vunpack.c.l.b16 %v1564
        %v2480 = vunpack.c.l.b16 %v1565
        %v2481 = vunpack.c.l.b16 %v1566
        %v2482 = vunpack.c.l.b16 %v1567
        %v2483 = vunpack.c.l.b16 %v1568
        %v2484 = vunpack.c.l.b16 %v1569
        %v2485 = vunpack.c.l.b16 %v1570
        %v2486 = vunpack.c.l.b16 %v1571
        %v2487 = vunpack.c.l.b16 %v1572
        %v2488 = vunpack.c.l.b16 %v1573
        %v2489 = vunpack.c.l.b16 %v1574
        %v2490 = vunpack.c.l.b16 %v1575
        %v2491 = vunpack.c.l.b16 %v1576
        %v2492 = vpack.c.b16 %v2141, %v2476
        %v2493 = vpack.c.b16 %v2143, %v2477
        %v2494 = vpack.c.b16 %v2145, %v2478
        %v2495 = vpack.c.b16 %v2147, %v2479
        %v2496 = vpack.c.b16 %v2149, %v2480
        %v2497 = vpack.c.b16 %v2151, %v2481
        %v2498 = vpack.c.b16 %v2153, %v2482
        %v2499 = vpack.c.b16 %v2155, %v2483
        %v2500 = vpack.c.b16 %v2157, %v2484
        %v2501 = vpack.c.b16 %v2159, %v2485
        %v2502 = vpack.c.b16 %v2161, %v2486
        %v2503 = vpack.c.b16 %v2163, %v2487
        %v2504 = vpack.c.b16 %v2165, %v2488
        %v2505 = vpack.c.b16 %v2167, %v2489
        %v2506 = vpack.c.b16 %v2169, %v2490
        %v2507 = vpack.c.b16 %v2171, %v2491
        %v2508 = vrot.slane %v2492, 1
        %v2509 = vrot.slane %v2236, 1
        %v2510 = vsel %vm2043, %v2508, %v2509
        %v2511 = vrot.slane %v2493, 1
        %v2512 = vrot.slane %v2237, 1
        %v2513 = vsel %vm2043, %v2511, %v2512
        %v2514 = vrot.slane %v2494, 1
        %v2515 = vrot.slane %v2238, 1
        %v2516 = vsel %vm2043, %v2514, %v2515
        %v2517 = vrot.slane %v2495, 1
        %v2518 = vrot.slane %v2239, 1
        %v2519 = vsel %vm2043, %v2517, %v2518
        %v2520 = vrot.slane %v2496, 1
        %v2521 = vrot.slane %v2240, 1
        %v2522 = vsel %vm2043, %v2520, %v2521
        %v2523 = vrot.slane %v2497, 1
        %v2524 = vrot.slane %v2241, 1
        %v2525 = vsel %vm2043, %v2523, %v2524
        %v2526 = vrot.slane %v2498, 1
        %v2527 = vrot.slane %v2242, 1
        %v2528 = vsel %vm2043, %v2526, %v2527
        %v2529 = vrot.slane %v2499, 1
        %v2530 = vrot.slane %v2243, 1
        %v2531 = vsel %vm2043, %v2529, %v2530
        %v2532 = vrot.slane %v2500, 1
        %v2533 = vrot.slane %v2244, 1
        %v2534 = vsel %vm2043, %v2532, %v2533
        %v2535 = vrot.slane %v2501, 1
        %v2536 = vrot.slane %v2245, 1
        %v2537 = vsel %vm2043, %v2535, %v2536
        %v2538 = vrot.slane %v2502, 1
        %v2539 = vrot.slane %v2246, 1
        %v2540 = vsel %vm2043, %v2538, %v2539
        %v2541 = vrot.slane %v2503, 1
        %v2542 = vrot.slane %v2247, 1
        %v2543 = vsel %vm2043, %v2541, %v2542
        %v2544 = vrot.slane %v2504, 1
        %v2545 = vrot.slane %v2248, 1
        %v2546 = vsel %vm2043, %v2544, %v2545
        %v2547 = vrot.slane %v2505, 1
        %v2548 = vrot.slane %v2249, 1
        %v2549 = vsel %vm2043, %v2547, %v2548
        %v2550 = vrot.slane %v2506, 1
        %v2551 = vrot.slane %v2250, 1
        %v2552 = vsel %vm2043, %v2550, %v2551
        %v2553 = vrot.slane %v2507, 1
        %v2554 = vrot.slane %v2251, 1
        %v2555 = vsel %vm2043, %v2553, %v2554
        %v2604 = vunpack.c.l.b16 %v1578
        %v2605 = vunpack.c.l.b16 %v1579
        %v2606 = vunpack.c.l.b16 %v1580
        %v2607 = vunpack.c.l.b16 %v1581
        %v2608 = vunpack.c.l.b16 %v1582
        %v2609 = vunpack.c.l.b16 %v1583
        %v2610 = vunpack.c.l.b16 %v1584
        %v2611 = vunpack.c.l.b16 %v1585
        %v2612 = vunpack.c.l.b16 %v1586
        %v2613 = vunpack.c.l.b16 %v1587
        %v2614 = vunpack.c.l.b16 %v1588
        %v2615 = vunpack.c.l.b16 %v1589
        %v2616 = vunpack.c.l.b16 %v1590
        %v2617 = vunpack.c.l.b16 %v1591
        %v2618 = vunpack.c.l.b16 %v1592
        %v2619 = vunpack.c.l.b16 %v1593
        %v2620 = vunpack.c.l.b16 %v1594
        %v2621 = vunpack.c.l.b16 %v1595
        %v2622 = vunpack.c.l.b16 %v1596
        %v2623 = vunpack.c.l.b16 %v1597
        %v2624 = vunpack.c.l.b16 %v1598
        %v2625 = vunpack.c.l.b16 %v1599
        %v2626 = vunpack.c.l.b16 %v1600
        %v2627 = vunpack.c.l.b16 %v1601
        %v2628 = vunpack.c.l.b16 %v1602
        %v2629 = vunpack.c.l.b16 %v1603
        %v2630 = vunpack.c.l.b16 %v1604
        %v2631 = vunpack.c.l.b16 %v1605
        %v2632 = vunpack.c.l.b16 %v1606
        %v2633 = vunpack.c.l.b16 %v1607
        %v2634 = vunpack.c.l.b16 %v1608
        %v2635 = vunpack.c.l.b16 %v1609
        %v2636 = vpack.c.b16 %v2605, %v2604
        %v2637 = vpack.c.b16 %v2607, %v2606
        %v2638 = vpack.c.b16 %v2609, %v2608
        %v2639 = vpack.c.b16 %v2611, %v2610
        %v2640 = vpack.c.b16 %v2613, %v2612
        %v2641 = vpack.c.b16 %v2615, %v2614
        %v2642 = vpack.c.b16 %v2617, %v2616
        %v2643 = vpack.c.b16 %v2619, %v2618
        %v2644 = vpack.c.b16 %v2621, %v2620
        %v2645 = vpack.c.b16 %v2623, %v2622
        %v2646 = vpack.c.b16 %v2625, %v2624
        %v2647 = vpack.c.b16 %v2627, %v2626
        %v2648 = vpack.c.b16 %v2629, %v2628
        %v2649 = vpack.c.b16 %v2631, %v2630
        %v2650 = vpack.c.b16 %v2633, %v2632
        %v2651 = vpack.c.b16 %v2635, %v2634
        %v2684 = vunpack.c.l.b16 %v1610
        %v2685 = vunpack.c.l.b16 %v1611
        %v2686 = vunpack.c.l.b16 %v1612
        %v2687 = vunpack.c.l.b16 %v1613
        %v2688 = vunpack.c.l.b16 %v1614
        %v2689 = vunpack.c.l.b16 %v1615
        %v2690 = vunpack.c.l.b16 %v1616
        %v2691 = vunpack.c.l.b16 %v1617
        %v2692 = vunpack.c.l.b16 %v1618
        %v2693 = vunpack.c.l.b16 %v1619
        %v2694 = vunpack.c.l.b16 %v1620
        %v2695 = vunpack.c.l.b16 %v1621
        %v2696 = vunpack.c.l.b16 %v1622
        %v2697 = vunpack.c.l.b16 %v1623
        %v2698 = vunpack.c.l.b16 %v1624
        %v2699 = vunpack.c.l.b16 %v1625
        %v2700 = vpack.c.b16 %v2684, %v2684
        %v2701 = vpack.c.b16 %v2685, %v2685
        %v2702 = vpack.c.b16 %v2686, %v2686
        %v2703 = vpack.c.b16 %v2687, %v2687
        %v2704 = vpack.c.b16 %v2688, %v2688
        %v2705 = vpack.c.b16 %v2689, %v2689
        %v2706 = vpack.c.b16 %v2690, %v2690
        %v2707 = vpack.c.b16 %v2691, %v2691
        %v2708 = vpack.c.b16 %v2692, %v2692
        %v2709 = vpack.c.b16 %v2693, %v2693
        %v2710 = vpack.c.b16 %v2694, %v2694
        %v2711 = vpack.c.b16 %v2695, %v2695
        %v2712 = vpack.c.b16 %v2696, %v2696
        %v2713 = vpack.c.b16 %v2697, %v2697
        %v2714 = vpack.c.b16 %v2698, %v2698
        %v2715 = vpack.c.b16 %v2699, %v2699
        %v2717 = vshrl.u32 %v2636, 16
        %v2719 = vshll.u32 %v2636, 16
        %v2721 = vrot.slane %v2719, 1
        %v2722 = vor.u32 %v2717, %v2721
        %v2724 = vshll.u32 %v2700, 16
        %v2726 = vrot.slane %v2724, 1
        %v2727 = vsel %vm1786, %v2722, %v2726
        %v2729 = vshrl.u32 %v2637, 16
        %v2731 = vshll.u32 %v2637, 16
        %v2733 = vrot.slane %v2731, 1
        %v2734 = vor.u32 %v2729, %v2733
        %v2736 = vshll.u32 %v2701, 16
        %v2738 = vrot.slane %v2736, 1
        %v2739 = vsel %vm1786, %v2734, %v2738
        %v2741 = vshrl.u32 %v2638, 16
        %v2743 = vshll.u32 %v2638, 16
        %v2745 = vrot.slane %v2743, 1
        %v2746 = vor.u32 %v2741, %v2745
        %v2748 = vshll.u32 %v2702, 16
        %v2750 = vrot.slane %v2748, 1
        %v2751 = vsel %vm1786, %v2746, %v2750
        %v2753 = vshrl.u32 %v2639, 16
        %v2755 = vshll.u32 %v2639, 16
        %v2757 = vrot.slane %v2755, 1
        %v2758 = vor.u32 %v2753, %v2757
        %v2760 = vshll.u32 %v2703, 16
        %v2762 = vrot.slane %v2760, 1
        %v2763 = vsel %vm1786, %v2758, %v2762
        %v2765 = vshrl.u32 %v2640, 16
        %v2767 = vshll.u32 %v2640, 16
        %v2769 = vrot.slane %v2767, 1
        %v2770 = vor.u32 %v2765, %v2769
        %v2772 = vshll.u32 %v2704, 16
        %v2774 = vrot.slane %v2772, 1
        %v2775 = vsel %vm1786, %v2770, %v2774
        %v2777 = vshrl.u32 %v2641, 16
        %v2779 = vshll.u32 %v2641, 16
        %v2781 = vrot.slane %v2779, 1
        %v2782 = vor.u32 %v2777, %v2781
        %v2784 = vshll.u32 %v2705, 16
        %v2786 = vrot.slane %v2784, 1
        %v2787 = vsel %vm1786, %v2782, %v2786
        %v2789 = vshrl.u32 %v2642, 16
        %v2791 = vshll.u32 %v2642, 16
        %v2793 = vrot.slane %v2791, 1
        %v2794 = vor.u32 %v2789, %v2793
        %v2796 = vshll.u32 %v2706, 16
        %v2798 = vrot.slane %v2796, 1
        %v2799 = vsel %vm1786, %v2794, %v2798
        %v2801 = vshrl.u32 %v2643, 16
        %v2803 = vshll.u32 %v2643, 16
        %v2805 = vrot.slane %v2803, 1
        %v2806 = vor.u32 %v2801, %v2805
        %v2808 = vshll.u32 %v2707, 16
        %v2810 = vrot.slane %v2808, 1
        %v2811 = vsel %vm1786, %v2806, %v2810
        %v2813 = vshrl.u32 %v2644, 16
        %v2815 = vshll.u32 %v2644, 16
        %v2817 = vrot.slane %v2815, 1
        %v2818 = vor.u32 %v2813, %v2817
        %v2820 = vshll.u32 %v2708, 16
        %v2822 = vrot.slane %v2820, 1
        %v2823 = vsel %vm1786, %v2818, %v2822
        %v2825 = vshrl.u32 %v2645, 16
        %v2827 = vshll.u32 %v2645, 16
        %v2829 = vrot.slane %v2827, 1
        %v2830 = vor.u32 %v2825, %v2829
        %v2832 = vshll.u32 %v2709, 16
        %v2834 = vrot.slane %v2832, 1
        %v2835 = vsel %vm1786, %v2830, %v2834
        %v2837 = vshrl.u32 %v2646, 16
        %v2839 = vshll.u32 %v2646, 16
        %v2841 = vrot.slane %v2839, 1
        %v2842 = vor.u32 %v2837, %v2841
        %v2844 = vshll.u32 %v2710, 16
        %v2846 = vrot.slane %v2844, 1
        %v2847 = vsel %vm1786, %v2842, %v2846
        %v2849 = vshrl.u32 %v2647, 16
        %v2851 = vshll.u32 %v2647, 16
        %v2853 = vrot.slane %v2851, 1
        %v2854 = vor.u32 %v2849, %v2853
        %v2856 = vshll.u32 %v2711, 16
        %v2858 = vrot.slane %v2856, 1
        %v2859 = vsel %vm1786, %v2854, %v2858
        %v2861 = vshrl.u32 %v2648, 16
        %v2863 = vshll.u32 %v2648, 16
        %v2865 = vrot.slane %v2863, 1
        %v2866 = vor.u32 %v2861, %v2865
        %v2868 = vshll.u32 %v2712, 16
        %v2870 = vrot.slane %v2868, 1
        %v2871 = vsel %vm1786, %v2866, %v2870
        %v2873 = vshrl.u32 %v2649, 16
        %v2875 = vshll.u32 %v2649, 16
        %v2877 = vrot.slane %v2875, 1
        %v2878 = vor.u32 %v2873, %v2877
        %v2880 = vshll.u32 %v2713, 16
        %v2882 = vrot.slane %v2880, 1
        %v2883 = vsel %vm1786, %v2878, %v2882
        %v2885 = vshrl.u32 %v2650, 16
        %v2887 = vshll.u32 %v2650, 16
        %v2889 = vrot.slane %v2887, 1
        %v2890 = vor.u32 %v2885, %v2889
        %v2892 = vshll.u32 %v2714, 16
        %v2894 = vrot.slane %v2892, 1
        %v2895 = vsel %vm1786, %v2890, %v2894
        %v2897 = vshrl.u32 %v2651, 16
        %v2899 = vshll.u32 %v2651, 16
        %v2901 = vrot.slane %v2899, 1
        %v2902 = vor.u32 %v2897, %v2901
        %v2904 = vshll.u32 %v2715, 16
        %v2906 = vrot.slane %v2904, 1
        %v2907 = vsel %vm1786, %v2902, %v2906
        %v2940 = vunpack.c.l.b16 %v1626
        %v2941 = vunpack.c.l.b16 %v1627
        %v2942 = vunpack.c.l.b16 %v1628
        %v2943 = vunpack.c.l.b16 %v1629
        %v2944 = vunpack.c.l.b16 %v1630
        %v2945 = vunpack.c.l.b16 %v1631
        %v2946 = vunpack.c.l.b16 %v1632
        %v2947 = vunpack.c.l.b16 %v1633
        %v2948 = vunpack.c.l.b16 %v1634
        %v2949 = vunpack.c.l.b16 %v1635
        %v2950 = vunpack.c.l.b16 %v1636
        %v2951 = vunpack.c.l.b16 %v1637
        %v2952 = vunpack.c.l.b16 %v1638
        %v2953 = vunpack.c.l.b16 %v1639
        %v2954 = vunpack.c.l.b16 %v1640
        %v2955 = vunpack.c.l.b16 %v1641
        %v2956 = vpack.c.b16 %v2605, %v2940
        %v2957 = vpack.c.b16 %v2607, %v2941
        %v2958 = vpack.c.b16 %v2609, %v2942
        %v2959 = vpack.c.b16 %v2611, %v2943
        %v2960 = vpack.c.b16 %v2613, %v2944
        %v2961 = vpack.c.b16 %v2615, %v2945
        %v2962 = vpack.c.b16 %v2617, %v2946
        %v2963 = vpack.c.b16 %v2619, %v2947
        %v2964 = vpack.c.b16 %v2621, %v2948
        %v2965 = vpack.c.b16 %v2623, %v2949
        %v2966 = vpack.c.b16 %v2625, %v2950
        %v2967 = vpack.c.b16 %v2627, %v2951
        %v2968 = vpack.c.b16 %v2629, %v2952
        %v2969 = vpack.c.b16 %v2631, %v2953
        %v2970 = vpack.c.b16 %v2633, %v2954
        %v2971 = vpack.c.b16 %v2635, %v2955
        %v2972 = vrot.slane %v2956, 1
        %v2973 = vrot.slane %v2700, 1
        %v2974 = vsel %vm2043, %v2972, %v2973
        %v2975 = vrot.slane %v2957, 1
        %v2976 = vrot.slane %v2701, 1
        %v2977 = vsel %vm2043, %v2975, %v2976
        %v2978 = vrot.slane %v2958, 1
        %v2979 = vrot.slane %v2702, 1
        %v2980 = vsel %vm2043, %v2978, %v2979
        %v2981 = vrot.slane %v2959, 1
        %v2982 = vrot.slane %v2703, 1
        %v2983 = vsel %vm2043, %v2981, %v2982
        %v2984 = vrot.slane %v2960, 1
        %v2985 = vrot.slane %v2704, 1
        %v2986 = vsel %vm2043, %v2984, %v2985
        %v2987 = vrot.slane %v2961, 1
        %v2988 = vrot.slane %v2705, 1
        %v2989 = vsel %vm2043, %v2987, %v2988
        %v2990 = vrot.slane %v2962, 1
        %v2991 = vrot.slane %v2706, 1
        %v2992 = vsel %vm2043, %v2990, %v2991
        %v2993 = vrot.slane %v2963, 1
        %v2994 = vrot.slane %v2707, 1
        %v2995 = vsel %vm2043, %v2993, %v2994
        %v2996 = vrot.slane %v2964, 1
        %v2997 = vrot.slane %v2708, 1
        %v2998 = vsel %vm2043, %v2996, %v2997
        %v2999 = vrot.slane %v2965, 1
        %v3000 = vrot.slane %v2709, 1
        %v3001 = vsel %vm2043, %v2999, %v3000
        %v3002 = vrot.slane %v2966, 1
        %v3003 = vrot.slane %v2710, 1
        %v3004 = vsel %vm2043, %v3002, %v3003
        %v3005 = vrot.slane %v2967, 1
        %v3006 = vrot.slane %v2711, 1
        %v3007 = vsel %vm2043, %v3005, %v3006
        %v3008 = vrot.slane %v2968, 1
        %v3009 = vrot.slane %v2712, 1
        %v3010 = vsel %vm2043, %v3008, %v3009
        %v3011 = vrot.slane %v2969, 1
        %v3012 = vrot.slane %v2713, 1
        %v3013 = vsel %vm2043, %v3011, %v3012
        %v3014 = vrot.slane %v2970, 1
        %v3015 = vrot.slane %v2714, 1
        %v3016 = vsel %vm2043, %v3014, %v3015
        %v3017 = vrot.slane %v2971, 1
        %v3018 = vrot.slane %v2715, 1
        %v3019 = vsel %vm2043, %v3017, %v3018
        %v3036 = vld [vmem:[%s5] sm:$0xf]
        %v3037 = vld [vmem:[%s5 + $0x4] sm:$0xf]
        %v3038 = vld [vmem:[%s5 + $0x8] sm:$0xf]
        %v3039 = vld [vmem:[%s5 + $0xc] sm:$0xf]
        %v3040 = vld [vmem:[%s5 + $0x10] sm:$0xf]
        %v3041 = vld [vmem:[%s5 + $0x14] sm:$0xf]
        %v3042 = vld [vmem:[%s5 + $0x18] sm:$0xf]
        %v3043 = vld [vmem:[%s5 + $0x1c] sm:$0xf]
        %v3044 = vld [vmem:[%s5 + $0x20] sm:$0xf]
        %v3045 = vld [vmem:[%s5 + $0x24] sm:$0xf]
        %v3046 = vld [vmem:[%s5 + $0x28] sm:$0xf]
        %v3047 = vld [vmem:[%s5 + $0x2c] sm:$0xf]
        %v3048 = vld [vmem:[%s5 + $0x30] sm:$0xf]
        %v3049 = vld [vmem:[%s5 + $0x34] sm:$0xf]
        %v3050 = vld [vmem:[%s5 + $0x38] sm:$0xf]
        %v3051 = vld [vmem:[%s5 + $0x3c] sm:$0xf]
        %v3052 = vld [vmem:[%s5 + $0x40] sm:$0xf]
        %v3053 = vld [vmem:[%s5 + $0x44] sm:$0xf]
        %v3054 = vld [vmem:[%s5 + $0x48] sm:$0xf]
        %v3055 = vld [vmem:[%s5 + $0x4c] sm:$0xf]
        %v3056 = vld [vmem:[%s5 + $0x50] sm:$0xf]
        %v3057 = vld [vmem:[%s5 + $0x54] sm:$0xf]
        %v3058 = vld [vmem:[%s5 + $0x58] sm:$0xf]
        %v3059 = vld [vmem:[%s5 + $0x5c] sm:$0xf]
        %v3060 = vld [vmem:[%s5 + $0x60] sm:$0xf]
        %v3061 = vld [vmem:[%s5 + $0x64] sm:$0xf]
        %v3062 = vld [vmem:[%s5 + $0x68] sm:$0xf]
        %v3063 = vld [vmem:[%s5 + $0x6c] sm:$0xf]
        %v3064 = vld [vmem:[%s5 + $0x70] sm:$0xf]
        %v3065 = vld [vmem:[%s5 + $0x74] sm:$0xf]
        %v3066 = vld [vmem:[%s5 + $0x78] sm:$0xf]
        %v3067 = vld [vmem:[%s5 + $0x7c] sm:$0xf]
        %v3068 = vld [vmem:[%s5 + $0x80] sm:$0xf]
        %v3069 = vld [vmem:[%s5 + $0x84] sm:$0xf]
        %v3070 = vld [vmem:[%s5 + $0x88] sm:$0xf]
        %v3071 = vld [vmem:[%s5 + $0x8c] sm:$0xf]
        %v3072 = vld [vmem:[%s5 + $0x90] sm:$0xf]
        %v3073 = vld [vmem:[%s5 + $0x94] sm:$0xf]
        %v3074 = vld [vmem:[%s5 + $0x98] sm:$0xf]
        %v3075 = vld [vmem:[%s5 + $0x9c] sm:$0xf]
        %v3076 = vld [vmem:[%s5 + $0xa0] sm:$0xf]
        %v3077 = vld [vmem:[%s5 + $0xa4] sm:$0xf]
        %v3078 = vld [vmem:[%s5 + $0xa8] sm:$0xf]
        %v3079 = vld [vmem:[%s5 + $0xac] sm:$0xf]
        %v3080 = vld [vmem:[%s5 + $0xb0] sm:$0xf]
        %v3081 = vld [vmem:[%s5 + $0xb4] sm:$0xf]
        %v3082 = vld [vmem:[%s5 + $0xb8] sm:$0xf]
        %v3083 = vld [vmem:[%s5 + $0xbc] sm:$0xf]
        %v3084 = vld [vmem:[%s5 + $0xc0] sm:$0xf]
        %v3085 = vld [vmem:[%s5 + $0xc4] sm:$0xf]
        %v3086 = vld [vmem:[%s5 + $0xc8] sm:$0xf]
        %v3087 = vld [vmem:[%s5 + $0xcc] sm:$0xf]
        %v3088 = vld [vmem:[%s5 + $0xd0] sm:$0xf]
        %v3089 = vld [vmem:[%s5 + $0xd4] sm:$0xf]
        %v3090 = vld [vmem:[%s5 + $0xd8] sm:$0xf]
        %v3091 = vld [vmem:[%s5 + $0xdc] sm:$0xf]
        %v3092 = vld [vmem:[%s5 + $0xe0] sm:$0xf]
        %v3093 = vld [vmem:[%s5 + $0xe4] sm:$0xf]
        %v3094 = vld [vmem:[%s5 + $0xe8] sm:$0xf]
        %v3095 = vld [vmem:[%s5 + $0xec] sm:$0xf]
        %v3096 = vld [vmem:[%s5 + $0xf0] sm:$0xf]
        %v3097 = vld [vmem:[%s5 + $0xf4] sm:$0xf]
        %v3098 = vld [vmem:[%s5 + $0xf8] sm:$0xf]
        %v3099 = vld [vmem:[%s5 + $0xfc] sm:$0xf]
        %v3100 = vld [vmem:[%s5 + $0x100] sm:$0xf]
        %v3101 = vld [vmem:[%s5 + $0x104] sm:$0xf]
        %v3102 = vld [vmem:[%s5 + $0x108] sm:$0xf]
        %v3103 = vld [vmem:[%s5 + $0x10c] sm:$0xf]
        %v3104 = vld [vmem:[%s5 + $0x110] sm:$0xf]
        %v3105 = vld [vmem:[%s5 + $0x114] sm:$0xf]
        %v3106 = vld [vmem:[%s5 + $0x118] sm:$0xf]
        %v3107 = vld [vmem:[%s5 + $0x11c] sm:$0xf]
        %v3108 = vld [vmem:[%s5 + $0x120] sm:$0xf]
        %v3109 = vld [vmem:[%s5 + $0x124] sm:$0xf]
        %v3110 = vld [vmem:[%s5 + $0x128] sm:$0xf]
        %v3111 = vld [vmem:[%s5 + $0x12c] sm:$0xf]
        %v3112 = vld [vmem:[%s5 + $0x130] sm:$0xf]
        %v3113 = vld [vmem:[%s5 + $0x134] sm:$0xf]
        %v3114 = vld [vmem:[%s5 + $0x138] sm:$0xf]
        %v3115 = vld [vmem:[%s5 + $0x13c] sm:$0xf]
        %v3116 = vld [vmem:[%s5 + $0x140] sm:$0xf]
        %v3117 = vld [vmem:[%s5 + $0x144] sm:$0xf]
        %v3118 = vld [vmem:[%s5 + $0x148] sm:$0xf]
        %v3119 = vld [vmem:[%s5 + $0x14c] sm:$0xf]
        %v3120 = vld [vmem:[%s5 + $0x150] sm:$0xf]
        %v3121 = vld [vmem:[%s5 + $0x154] sm:$0xf]
        %v3122 = vld [vmem:[%s5 + $0x158] sm:$0xf]
        %v3123 = vld [vmem:[%s5 + $0x15c] sm:$0xf]
        %v3124 = vld [vmem:[%s5 + $0x160] sm:$0xf]
        %v3125 = vld [vmem:[%s5 + $0x164] sm:$0xf]
        %v3126 = vld [vmem:[%s5 + $0x168] sm:$0xf]
        %v3127 = vld [vmem:[%s5 + $0x16c] sm:$0xf]
        %v3128 = vld [vmem:[%s5 + $0x170] sm:$0xf]
        %v3129 = vld [vmem:[%s5 + $0x174] sm:$0xf]
        %v3130 = vld [vmem:[%s5 + $0x178] sm:$0xf]
        %v3131 = vld [vmem:[%s5 + $0x17c] sm:$0xf]
        %v3132 = vld [vmem:[%s5 + $0x180] sm:$0xf]
        %v3133 = vld [vmem:[%s5 + $0x184] sm:$0xf]
        %v3134 = vld [vmem:[%s5 + $0x188] sm:$0xf]
        %v3135 = vld [vmem:[%s5 + $0x18c] sm:$0xf]
        %v3136 = vld [vmem:[%s5 + $0x190] sm:$0xf]
        %v3137 = vld [vmem:[%s5 + $0x194] sm:$0xf]
        %v3138 = vld [vmem:[%s5 + $0x198] sm:$0xf]
        %v3139 = vld [vmem:[%s5 + $0x19c] sm:$0xf]
        %v3140 = vld [vmem:[%s5 + $0x1a0] sm:$0xf]
        %v3141 = vld [vmem:[%s5 + $0x1a4] sm:$0xf]
        %v3142 = vld [vmem:[%s5 + $0x1a8] sm:$0xf]
        %v3143 = vld [vmem:[%s5 + $0x1ac] sm:$0xf]
        %v3144 = vld [vmem:[%s5 + $0x1b0] sm:$0xf]
        %v3145 = vld [vmem:[%s5 + $0x1b4] sm:$0xf]
        %v3146 = vld [vmem:[%s5 + $0x1b8] sm:$0xf]
        %v3147 = vld [vmem:[%s5 + $0x1bc] sm:$0xf]
        %v3148 = vld [vmem:[%s5 + $0x1c0] sm:$0xf]
        %v3149 = vld [vmem:[%s5 + $0x1c4] sm:$0xf]
        %v3150 = vld [vmem:[%s5 + $0x1c8] sm:$0xf]
        %v3151 = vld [vmem:[%s5 + $0x1cc] sm:$0xf]
        %v3152 = vld [vmem:[%s5 + $0x1d0] sm:$0xf]
        %v3153 = vld [vmem:[%s5 + $0x1d4] sm:$0xf]
        %v3154 = vld [vmem:[%s5 + $0x1d8] sm:$0xf]
        %v3155 = vld [vmem:[%s5 + $0x1dc] sm:$0xf]
        %v3156 = vld [vmem:[%s5 + $0x1e0] sm:$0xf]
        %v3157 = vld [vmem:[%s5 + $0x1e4] sm:$0xf]
        %v3158 = vld [vmem:[%s5 + $0x1e8] sm:$0xf]
        %v3159 = vld [vmem:[%s5 + $0x1ec] sm:$0xf]
        %v3160 = vld [vmem:[%s5 + $0x1f0] sm:$0xf]
        %v3161 = vld [vmem:[%s5 + $0x1f4] sm:$0xf]
        %v3162 = vld [vmem:[%s5 + $0x1f8] sm:$0xf]
        %v3163 = vld [vmem:[%s5 + $0x1fc] sm:$0xf]
        %v3164 = vld [vmem:[%s5 + $0x200] sm:$0xf]
        %v3165 = vld [vmem:[%s5 + $0x204] sm:$0xf]
        %v3166 = vld [vmem:[%s5 + $0x208] sm:$0xf]
        %v3167 = vld [vmem:[%s5 + $0x20c] sm:$0xf]
        %v3168 = vld [vmem:[%s5 + $0x210] sm:$0xf]
        %v3169 = vld [vmem:[%s5 + $0x214] sm:$0xf]
        %v3170 = vld [vmem:[%s5 + $0x218] sm:$0xf]
        %v3171 = vld [vmem:[%s5 + $0x21c] sm:$0xf]
        %v3172 = vld [vmem:[%s5 + $0x220] sm:$0xf]
        %v3173 = vld [vmem:[%s5 + $0x224] sm:$0xf]
        %v3174 = vld [vmem:[%s5 + $0x228] sm:$0xf]
        %v3175 = vld [vmem:[%s5 + $0x22c] sm:$0xf]
        %v3176 = vld [vmem:[%s5 + $0x230] sm:$0xf]
        %v3177 = vld [vmem:[%s5 + $0x234] sm:$0xf]
        %v3178 = vld [vmem:[%s5 + $0x238] sm:$0xf]
        %v3179 = vld [vmem:[%s5 + $0x23c] sm:$0xf]
        %v3180 = vld [vmem:[%s6] sm:$0x1]
        %v3182 = vperm.slane %v3180, 0
        %v3328 = vunpack.c.l.b16 %v3036
        %v3329 = vunpack.c.l.b16 %v3037
        %v3330 = vunpack.c.l.b16 %v3038
        %v3331 = vunpack.c.l.b16 %v3039
        %v3332 = vunpack.c.l.b16 %v3040
        %v3333 = vunpack.c.l.b16 %v3041
        %v3334 = vunpack.c.l.b16 %v3042
        %v3335 = vunpack.c.l.b16 %v3043
        %v3336 = vunpack.c.l.b16 %v3044
        %v3337 = vunpack.c.l.b16 %v3045
        %v3338 = vunpack.c.l.b16 %v3046
        %v3339 = vunpack.c.l.b16 %v3047
        %v3340 = vunpack.c.l.b16 %v3048
        %v3341 = vunpack.c.l.b16 %v3049
        %v3342 = vunpack.c.l.b16 %v3050
        %v3343 = vunpack.c.l.b16 %v3051
        %v3344 = vunpack.c.l.b16 %v3052
        %v3345 = vunpack.c.l.b16 %v3053
        %v3346 = vunpack.c.l.b16 %v3054
        %v3347 = vunpack.c.l.b16 %v3055
        %v3348 = vunpack.c.l.b16 %v3056
        %v3349 = vunpack.c.l.b16 %v3057
        %v3350 = vunpack.c.l.b16 %v3058
        %v3351 = vunpack.c.l.b16 %v3059
        %v3352 = vunpack.c.l.b16 %v3060
        %v3353 = vunpack.c.l.b16 %v3061
        %v3354 = vunpack.c.l.b16 %v3062
        %v3355 = vunpack.c.l.b16 %v3063
        %v3356 = vunpack.c.l.b16 %v3064
        %v3357 = vunpack.c.l.b16 %v3065
        %v3358 = vunpack.c.l.b16 %v3066
        %v3359 = vunpack.c.l.b16 %v3067
        %v3360 = vunpack.c.l.b16 %v3068
        %v3361 = vunpack.c.l.b16 %v3069
        %v3362 = vunpack.c.l.b16 %v3070
        %v3363 = vunpack.c.l.b16 %v3071
        %v3364 = vunpack.c.l.b16 %v3072
        %v3365 = vunpack.c.l.b16 %v3073
        %v3366 = vunpack.c.l.b16 %v3074
        %v3367 = vunpack.c.l.b16 %v3075
        %v3368 = vunpack.c.l.b16 %v3076
        %v3369 = vunpack.c.l.b16 %v3077
        %v3370 = vunpack.c.l.b16 %v3078
        %v3371 = vunpack.c.l.b16 %v3079
        %v3372 = vunpack.c.l.b16 %v3080
        %v3373 = vunpack.c.l.b16 %v3081
        %v3374 = vunpack.c.l.b16 %v3082
        %v3375 = vunpack.c.l.b16 %v3083
        %v3376 = vunpack.c.l.b16 %v3084
        %v3377 = vunpack.c.l.b16 %v3085
        %v3378 = vunpack.c.l.b16 %v3086
        %v3379 = vunpack.c.l.b16 %v3087
        %v3380 = vunpack.c.l.b16 %v3088
        %v3381 = vunpack.c.l.b16 %v3089
        %v3382 = vunpack.c.l.b16 %v3090
        %v3383 = vunpack.c.l.b16 %v3091
        %v3384 = vunpack.c.l.b16 %v3092
        %v3385 = vunpack.c.l.b16 %v3093
        %v3386 = vunpack.c.l.b16 %v3094
        %v3387 = vunpack.c.l.b16 %v3095
        %v3388 = vunpack.c.l.b16 %v3096
        %v3389 = vunpack.c.l.b16 %v3097
        %v3390 = vunpack.c.l.b16 %v3098
        %v3391 = vunpack.c.l.b16 %v3099
        %v3392 = vunpack.c.l.b16 %v3100
        %v3393 = vunpack.c.l.b16 %v3101
        %v3394 = vunpack.c.l.b16 %v3102
        %v3395 = vunpack.c.l.b16 %v3103
        %v3396 = vunpack.c.l.b16 %v3104
        %v3397 = vunpack.c.l.b16 %v3105
        %v3398 = vunpack.c.l.b16 %v3106
        %v3399 = vunpack.c.l.b16 %v3107
        %v3400 = vunpack.c.l.b16 %v3108
        %v3401 = vunpack.c.l.b16 %v3109
        %v3402 = vunpack.c.l.b16 %v3110
        %v3403 = vunpack.c.l.b16 %v3111
        %v3404 = vunpack.c.l.b16 %v3112
        %v3405 = vunpack.c.l.b16 %v3113
        %v3406 = vunpack.c.l.b16 %v3114
        %v3407 = vunpack.c.l.b16 %v3115
        %v3408 = vunpack.c.l.b16 %v3116
        %v3409 = vunpack.c.l.b16 %v3117
        %v3410 = vunpack.c.l.b16 %v3118
        %v3411 = vunpack.c.l.b16 %v3119
        %v3412 = vunpack.c.l.b16 %v3120
        %v3413 = vunpack.c.l.b16 %v3121
        %v3414 = vunpack.c.l.b16 %v3122
        %v3415 = vunpack.c.l.b16 %v3123
        %v3416 = vunpack.c.l.b16 %v3124
        %v3417 = vunpack.c.l.b16 %v3125
        %v3418 = vunpack.c.l.b16 %v3126
        %v3419 = vunpack.c.l.b16 %v3127
        %v3420 = vunpack.c.l.b16 %v3128
        %v3421 = vunpack.c.l.b16 %v3129
        %v3422 = vunpack.c.l.b16 %v3130
        %v3423 = vunpack.c.l.b16 %v3131
        %v3424 = vunpack.c.l.b16 %v3132
        %v3425 = vunpack.c.l.b16 %v3133
        %v3426 = vunpack.c.l.b16 %v3134
        %v3427 = vunpack.c.l.b16 %v3135
        %v3428 = vunpack.c.l.b16 %v3136
        %v3429 = vunpack.c.l.b16 %v3137
        %v3430 = vunpack.c.l.b16 %v3138
        %v3431 = vunpack.c.l.b16 %v3139
        %v3432 = vunpack.c.l.b16 %v3140
        %v3433 = vunpack.c.l.b16 %v3141
        %v3434 = vunpack.c.l.b16 %v3142
        %v3435 = vunpack.c.l.b16 %v3143
        %v3436 = vunpack.c.l.b16 %v3144
        %v3437 = vunpack.c.l.b16 %v3145
        %v3438 = vunpack.c.l.b16 %v3146
        %v3439 = vunpack.c.l.b16 %v3147
        %v3440 = vunpack.c.l.b16 %v3148
        %v3441 = vunpack.c.l.b16 %v3149
        %v3442 = vunpack.c.l.b16 %v3150
        %v3443 = vunpack.c.l.b16 %v3151
        %v3444 = vunpack.c.l.b16 %v3152
        %v3445 = vunpack.c.l.b16 %v3153
        %v3446 = vunpack.c.l.b16 %v3154
        %v3447 = vunpack.c.l.b16 %v3155
        %v3448 = vunpack.c.l.b16 %v3156
        %v3449 = vunpack.c.l.b16 %v3157
        %v3450 = vunpack.c.l.b16 %v3158
        %v3451 = vunpack.c.l.b16 %v3159
        %v3452 = vunpack.c.l.b16 %v3160
        %v3453 = vunpack.c.l.b16 %v3161
        %v3454 = vunpack.c.l.b16 %v3162
        %v3455 = vunpack.c.l.b16 %v3163
        %v3456 = vunpack.c.l.b16 %v3164
        %v3457 = vunpack.c.l.b16 %v3165
        %v3458 = vunpack.c.l.b16 %v3166
        %v3459 = vunpack.c.l.b16 %v3167
        %v3460 = vunpack.c.l.b16 %v3168
        %v3461 = vunpack.c.l.b16 %v3169
        %v3462 = vunpack.c.l.b16 %v3170
        %v3463 = vunpack.c.l.b16 %v3171
        %v3464 = vunpack.c.l.b16 %v3172
        %v3465 = vunpack.c.l.b16 %v3173
        %v3466 = vunpack.c.l.b16 %v3174
        %v3467 = vunpack.c.l.b16 %v3175
        %v3468 = vunpack.c.l.b16 %v3176
        %v3469 = vunpack.c.l.b16 %v3177
        %v3470 = vunpack.c.l.b16 %v3178
        %v3471 = vunpack.c.l.b16 %v3179
        %v3472 = vpack.c.b16 %v3329, %v3328
        %v3473 = vpack.c.b16 %v3331, %v3330
        %v3474 = vpack.c.b16 %v3333, %v3332
        %v3475 = vpack.c.b16 %v3335, %v3334
        %v3476 = vpack.c.b16 %v3337, %v3336
        %v3477 = vpack.c.b16 %v3339, %v3338
        %v3478 = vpack.c.b16 %v3341, %v3340
        %v3479 = vpack.c.b16 %v3343, %v3342
        %v3480 = vpack.c.b16 %v3345, %v3344
        %v3481 = vpack.c.b16 %v3347, %v3346
        %v3482 = vpack.c.b16 %v3349, %v3348
        %v3483 = vpack.c.b16 %v3351, %v3350
        %v3484 = vpack.c.b16 %v3353, %v3352
        %v3485 = vpack.c.b16 %v3355, %v3354
        %v3486 = vpack.c.b16 %v3357, %v3356
        %v3487 = vpack.c.b16 %v3359, %v3358
        %v3488 = vpack.c.b16 %v3361, %v3360
        %v3489 = vpack.c.b16 %v3363, %v3362
        %v3490 = vpack.c.b16 %v3365, %v3364
        %v3491 = vpack.c.b16 %v3367, %v3366
        %v3492 = vpack.c.b16 %v3369, %v3368
        %v3493 = vpack.c.b16 %v3371, %v3370
        %v3494 = vpack.c.b16 %v3373, %v3372
        %v3495 = vpack.c.b16 %v3375, %v3374
        %v3496 = vpack.c.b16 %v3377, %v3376
        %v3497 = vpack.c.b16 %v3379, %v3378
        %v3498 = vpack.c.b16 %v3381, %v3380
        %v3499 = vpack.c.b16 %v3383, %v3382
        %v3500 = vpack.c.b16 %v3385, %v3384
        %v3501 = vpack.c.b16 %v3387, %v3386
        %v3502 = vpack.c.b16 %v3389, %v3388
        %v3503 = vpack.c.b16 %v3391, %v3390
        %v3504 = vpack.c.b16 %v3393, %v3392
        %v3505 = vpack.c.b16 %v3395, %v3394
        %v3506 = vpack.c.b16 %v3397, %v3396
        %v3507 = vpack.c.b16 %v3399, %v3398
        %v3508 = vpack.c.b16 %v3401, %v3400
        %v3509 = vpack.c.b16 %v3403, %v3402
        %v3510 = vpack.c.b16 %v3405, %v3404
        %v3511 = vpack.c.b16 %v3407, %v3406
        %v3512 = vpack.c.b16 %v3409, %v3408
        %v3513 = vpack.c.b16 %v3411, %v3410
        %v3514 = vpack.c.b16 %v3413, %v3412
        %v3515 = vpack.c.b16 %v3415, %v3414
        %v3516 = vpack.c.b16 %v3417, %v3416
        %v3517 = vpack.c.b16 %v3419, %v3418
        %v3518 = vpack.c.b16 %v3421, %v3420
        %v3519 = vpack.c.b16 %v3423, %v3422
        %v3520 = vpack.c.b16 %v3425, %v3424
        %v3521 = vpack.c.b16 %v3427, %v3426
        %v3522 = vpack.c.b16 %v3429, %v3428
        %v3523 = vpack.c.b16 %v3431, %v3430
        %v3524 = vpack.c.b16 %v3433, %v3432
        %v3525 = vpack.c.b16 %v3435, %v3434
        %v3526 = vpack.c.b16 %v3437, %v3436
        %v3527 = vpack.c.b16 %v3439, %v3438
        %v3528 = vpack.c.b16 %v3441, %v3440
        %v3529 = vpack.c.b16 %v3443, %v3442
        %v3530 = vpack.c.b16 %v3445, %v3444
        %v3531 = vpack.c.b16 %v3447, %v3446
        %v3532 = vpack.c.b16 %v3449, %v3448
        %v3533 = vpack.c.b16 %v3451, %v3450
        %v3534 = vpack.c.b16 %v3453, %v3452
        %v3535 = vpack.c.b16 %v3455, %v3454
        %v3536 = vpack.c.b16 %v3457, %v3456
        %v3537 = vpack.c.b16 %v3459, %v3458
        %v3538 = vpack.c.b16 %v3461, %v3460
        %v3539 = vpack.c.b16 %v3463, %v3462
        %v3540 = vpack.c.b16 %v3465, %v3464
        %v3541 = vpack.c.b16 %v3467, %v3466
        %v3542 = vpack.c.b16 %v3469, %v3468
        %v3543 = vpack.c.b16 %v3471, %v3470
        %3616 = vmatpush.bf16.msra.mxu0 %v3479
        %3617 = vmatpush.bf16.msra.mxu0 %v3478
        %3618 = vmatpush.bf16.msra.mxu0 %v3477
        %3619 = vmatpush.bf16.msra.mxu0 %v3476
        %3620 = vmatpush.bf16.msra.mxu0 %v3475
        %3621 = vmatpush.bf16.msra.mxu0 %v3474
        %3622 = vmatpush.bf16.msra.mxu0 %v3473
        %3623 = vmatpush.bf16.msra.mxu0 %v3472
        %3624 = vmatmul.bf16.gmra.mxu0 %v1706
        %v3625 = vpop.f32.mrf.mxu0
        %v3626 = vadd.f32 %v3182, %v3625
        %v3627 = vpop.f32.mrf.mxu0
        %v3628 = vadd.f32 %v3182, %v3627
        %3629 = vmatmul.bf16.gmra.mxu0 %v1707
        %v3630 = vpop.f32.mrf.mxu0
        %v3631 = vadd.f32 %v3182, %v3630
        %v3632 = vpop.f32.mrf.mxu0
        %v3633 = vadd.f32 %v3182, %v3632
        %3634 = vmatmul.bf16.gmra.mxu0 %v1708
        %v3635 = vpop.f32.mrf.mxu0
        %v3636 = vadd.f32 %v3182, %v3635
        %v3637 = vpop.f32.mrf.mxu0
        %v3638 = vadd.f32 %v3182, %v3637
        %3639 = vmatmul.bf16.gmra.mxu0 %v1709
        %v3640 = vpop.f32.mrf.mxu0
        %v3641 = vadd.f32 %v3182, %v3640
        %v3642 = vpop.f32.mrf.mxu0
        %v3643 = vadd.f32 %v3182, %v3642
        %3644 = vmatmul.bf16.gmra.mxu0 %v1710
        %v3645 = vpop.f32.mrf.mxu0
        %v3646 = vadd.f32 %v3182, %v3645
        %v3647 = vpop.f32.mrf.mxu0
        %v3648 = vadd.f32 %v3182, %v3647
        %3649 = vmatmul.bf16.gmra.mxu0 %v1711
        %v3650 = vpop.f32.mrf.mxu0
        %v3651 = vadd.f32 %v3182, %v3650
        %v3652 = vpop.f32.mrf.mxu0
        %v3653 = vadd.f32 %v3182, %v3652
        %3654 = vmatmul.bf16.gmra.mxu0 %v1712
        %v3655 = vpop.f32.mrf.mxu0
        %v3656 = vadd.f32 %v3182, %v3655
        %v3657 = vpop.f32.mrf.mxu0
        %v3658 = vadd.f32 %v3182, %v3657
        %3659 = vmatmul.bf16.gmra.mxu0 %v1713
        %v3660 = vpop.f32.mrf.mxu0
        %v3661 = vadd.f32 %v3182, %v3660
        %v3662 = vpop.f32.mrf.mxu0
        %v3663 = vadd.f32 %v3182, %v3662
        %3664 = vmatmul.bf16.gmra.mxu0 %v1714
        %v3665 = vpop.f32.mrf.mxu0
        %v3666 = vadd.f32 %v3182, %v3665
        %v3667 = vpop.f32.mrf.mxu0
        %v3668 = vadd.f32 %v3182, %v3667
        %3669 = vmatmul.bf16.gmra.mxu0 %v1715
        %v3670 = vpop.f32.mrf.mxu0
        %v3671 = vadd.f32 %v3182, %v3670
        %v3672 = vpop.f32.mrf.mxu0
        %v3673 = vadd.f32 %v3182, %v3672
        %3674 = vmatmul.bf16.gmra.mxu0 %v1716
        %v3675 = vpop.f32.mrf.mxu0
        %v3676 = vadd.f32 %v3182, %v3675
        %v3677 = vpop.f32.mrf.mxu0
        %v3678 = vadd.f32 %v3182, %v3677
        %3679 = vmatmul.bf16.gmra.mxu0 %v1717
        %v3680 = vpop.f32.mrf.mxu0
        %v3681 = vadd.f32 %v3182, %v3680
        %v3682 = vpop.f32.mrf.mxu0
        %v3683 = vadd.f32 %v3182, %v3682
        %3684 = vmatmul.bf16.gmra.mxu0 %v1718
        %v3685 = vpop.f32.mrf.mxu0
        %v3686 = vadd.f32 %v3182, %v3685
        %v3687 = vpop.f32.mrf.mxu0
        %v3688 = vadd.f32 %v3182, %v3687
        %3689 = vmatmul.bf16.gmra.mxu0 %v1719
        %v3690 = vpop.f32.mrf.mxu0
        %v3691 = vadd.f32 %v3182, %v3690
        %v3692 = vpop.f32.mrf.mxu0
        %v3693 = vadd.f32 %v3182, %v3692
        %3694 = vmatmul.bf16.gmra.mxu0 %v1720
        %v3695 = vpop.f32.mrf.mxu0
        %v3696 = vadd.f32 %v3182, %v3695
        %v3697 = vpop.f32.mrf.mxu0
        %v3698 = vadd.f32 %v3182, %v3697
        %3699 = vmatmul.bf16.gmra.mxu0 %v1721
        %v3700 = vpop.f32.mrf.mxu0
        %v3701 = vadd.f32 %v3182, %v3700
        %v3702 = vpop.f32.mrf.mxu0
        %v3703 = vadd.f32 %v3182, %v3702
        %3704 = vdwg.mxu0
        %3705 = vmatpush.bf16.msra.mxu0 %v3487
        %3706 = vmatpush.bf16.msra.mxu0 %v3486
        %3707 = vmatpush.bf16.msra.mxu0 %v3485
        %3708 = vmatpush.bf16.msra.mxu0 %v3484
        %3709 = vmatpush.bf16.msra.mxu0 %v3483
        %3710 = vmatpush.bf16.msra.mxu0 %v3482
        %3711 = vmatpush.bf16.msra.mxu0 %v3481
        %3712 = vmatpush.bf16.msra.mxu0 %v3480
        %3713 = vmatmul.bf16.gmra.mxu0 %v1798
        %v3714 = vpop.f32.mrf.mxu0
        %v3715 = vadd.f32 %v3626, %v3714
        %v3716 = vpop.f32.mrf.mxu0
        %v3717 = vadd.f32 %v3628, %v3716
        %3718 = vmatmul.bf16.gmra.mxu0 %v1810
        %v3719 = vpop.f32.mrf.mxu0
        %v3720 = vadd.f32 %v3631, %v3719
        %v3721 = vpop.f32.mrf.mxu0
        %v3722 = vadd.f32 %v3633, %v3721
        %3723 = vmatmul.bf16.gmra.mxu0 %v1822
        %v3724 = vpop.f32.mrf.mxu0
        %v3725 = vadd.f32 %v3636, %v3724
        %v3726 = vpop.f32.mrf.mxu0
        %v3727 = vadd.f32 %v3638, %v3726
        %3728 = vmatmul.bf16.gmra.mxu0 %v1834
        %v3729 = vpop.f32.mrf.mxu0
        %v3730 = vadd.f32 %v3641, %v3729
        %v3731 = vpop.f32.mrf.mxu0
        %v3732 = vadd.f32 %v3643, %v3731
        %3733 = vmatmul.bf16.gmra.mxu0 %v1846
        %v3734 = vpop.f32.mrf.mxu0
        %v3735 = vadd.f32 %v3646, %v3734
        %v3736 = vpop.f32.mrf.mxu0
        %v3737 = vadd.f32 %v3648, %v3736
        %3738 = vmatmul.bf16.gmra.mxu0 %v1858
        %v3739 = vpop.f32.mrf.mxu0
        %v3740 = vadd.f32 %v3651, %v3739
        %v3741 = vpop.f32.mrf.mxu0
        %v3742 = vadd.f32 %v3653, %v3741
        %3743 = vmatmul.bf16.gmra.mxu0 %v1870
        %v3744 = vpop.f32.mrf.mxu0
        %v3745 = vadd.f32 %v3656, %v3744
        %v3746 = vpop.f32.mrf.mxu0
        %v3747 = vadd.f32 %v3658, %v3746
        %3748 = vmatmul.bf16.gmra.mxu0 %v1882
        %v3749 = vpop.f32.mrf.mxu0
        %v3750 = vadd.f32 %v3661, %v3749
        %v3751 = vpop.f32.mrf.mxu0
        %v3752 = vadd.f32 %v3663, %v3751
        %3753 = vmatmul.bf16.gmra.mxu0 %v1894
        %v3754 = vpop.f32.mrf.mxu0
        %v3755 = vadd.f32 %v3666, %v3754
        %v3756 = vpop.f32.mrf.mxu0
        %v3757 = vadd.f32 %v3668, %v3756
        %3758 = vmatmul.bf16.gmra.mxu0 %v1906
        %v3759 = vpop.f32.mrf.mxu0
        %v3760 = vadd.f32 %v3671, %v3759
        %v3761 = vpop.f32.mrf.mxu0
        %v3762 = vadd.f32 %v3673, %v3761
        %3763 = vmatmul.bf16.gmra.mxu0 %v1918
        %v3764 = vpop.f32.mrf.mxu0
        %v3765 = vadd.f32 %v3676, %v3764
        %v3766 = vpop.f32.mrf.mxu0
        %v3767 = vadd.f32 %v3678, %v3766
        %3768 = vmatmul.bf16.gmra.mxu0 %v1930
        %v3769 = vpop.f32.mrf.mxu0
        %v3770 = vadd.f32 %v3681, %v3769
        %v3771 = vpop.f32.mrf.mxu0
        %v3772 = vadd.f32 %v3683, %v3771
        %3773 = vmatmul.bf16.gmra.mxu0 %v1942
        %v3774 = vpop.f32.mrf.mxu0
        %v3775 = vadd.f32 %v3686, %v3774
        %v3776 = vpop.f32.mrf.mxu0
        %v3777 = vadd.f32 %v3688, %v3776
        %3778 = vmatmul.bf16.gmra.mxu0 %v1954
        %v3779 = vpop.f32.mrf.mxu0
        %v3780 = vadd.f32 %v3691, %v3779
        %v3781 = vpop.f32.mrf.mxu0
        %v3782 = vadd.f32 %v3693, %v3781
        %3783 = vmatmul.bf16.gmra.mxu0 %v1966
        %v3784 = vpop.f32.mrf.mxu0
        %v3785 = vadd.f32 %v3696, %v3784
        %v3786 = vpop.f32.mrf.mxu0
        %v3787 = vadd.f32 %v3698, %v3786
        %3788 = vmatmul.bf16.gmra.mxu0 %v1978
        %v3789 = vpop.f32.mrf.mxu0
        %v3790 = vadd.f32 %v3701, %v3789
        %v3791 = vpop.f32.mrf.mxu0
        %v3792 = vadd.f32 %v3703, %v3791
        %3793 = vdwg.mxu0
        %3794 = vmatpush.bf16.msra.mxu0 %v3495
        %3795 = vmatpush.bf16.msra.mxu0 %v3494
        %3796 = vmatpush.bf16.msra.mxu0 %v3493
        %3797 = vmatpush.bf16.msra.mxu0 %v3492
        %3798 = vmatpush.bf16.msra.mxu0 %v3491
        %3799 = vmatpush.bf16.msra.mxu0 %v3490
        %3800 = vmatpush.bf16.msra.mxu0 %v3489
        %3801 = vmatpush.bf16.msra.mxu0 %v3488
        %3802 = vmatmul.bf16.gmra.mxu0 %v2046
        %v3803 = vpop.f32.mrf.mxu0
        %v3804 = vadd.f32 %v3715, %v3803
        %v3805 = vpop.f32.mrf.mxu0
        %v3806 = vadd.f32 %v3717, %v3805
        %3807 = vmatmul.bf16.gmra.mxu0 %v2049
        %v3808 = vpop.f32.mrf.mxu0
        %v3809 = vadd.f32 %v3720, %v3808
        %v3810 = vpop.f32.mrf.mxu0
        %v3811 = vadd.f32 %v3722, %v3810
        %3812 = vmatmul.bf16.gmra.mxu0 %v2052
        %v3813 = vpop.f32.mrf.mxu0
        %v3814 = vadd.f32 %v3725, %v3813
        %v3815 = vpop.f32.mrf.mxu0
        %v3816 = vadd.f32 %v3727, %v3815
        %3817 = vmatmul.bf16.gmra.mxu0 %v2055
        %v3818 = vpop.f32.mrf.mxu0
        %v3819 = vadd.f32 %v3730, %v3818
        %v3820 = vpop.f32.mrf.mxu0
        %v3821 = vadd.f32 %v3732, %v3820
        %3822 = vmatmul.bf16.gmra.mxu0 %v2058
        %v3823 = vpop.f32.mrf.mxu0
        %v3824 = vadd.f32 %v3735, %v3823
        %v3825 = vpop.f32.mrf.mxu0
        %v3826 = vadd.f32 %v3737, %v3825
        %3827 = vmatmul.bf16.gmra.mxu0 %v2061
        %v3828 = vpop.f32.mrf.mxu0
        %v3829 = vadd.f32 %v3740, %v3828
        %v3830 = vpop.f32.mrf.mxu0
        %v3831 = vadd.f32 %v3742, %v3830
        %3832 = vmatmul.bf16.gmra.mxu0 %v2064
        %v3833 = vpop.f32.mrf.mxu0
        %v3834 = vadd.f32 %v3745, %v3833
        %v3835 = vpop.f32.mrf.mxu0
        %v3836 = vadd.f32 %v3747, %v3835
        %3837 = vmatmul.bf16.gmra.mxu0 %v2067
        %v3838 = vpop.f32.mrf.mxu0
        %v3839 = vadd.f32 %v3750, %v3838
        %v3840 = vpop.f32.mrf.mxu0
        %v3841 = vadd.f32 %v3752, %v3840
        %3842 = vmatmul.bf16.gmra.mxu0 %v2070
        %v3843 = vpop.f32.mrf.mxu0
        %v3844 = vadd.f32 %v3755, %v3843
        %v3845 = vpop.f32.mrf.mxu0
        %v3846 = vadd.f32 %v3757, %v3845
        %3847 = vmatmul.bf16.gmra.mxu0 %v2073
        %v3848 = vpop.f32.mrf.mxu0
        %v3849 = vadd.f32 %v3760, %v3848
        %v3850 = vpop.f32.mrf.mxu0
        %v3851 = vadd.f32 %v3762, %v3850
        %3852 = vmatmul.bf16.gmra.mxu0 %v2076
        %v3853 = vpop.f32.mrf.mxu0
        %v3854 = vadd.f32 %v3765, %v3853
        %v3855 = vpop.f32.mrf.mxu0
        %v3856 = vadd.f32 %v3767, %v3855
        %3857 = vmatmul.bf16.gmra.mxu0 %v2079
        %v3858 = vpop.f32.mrf.mxu0
        %v3859 = vadd.f32 %v3770, %v3858
        %v3860 = vpop.f32.mrf.mxu0
        %v3861 = vadd.f32 %v3772, %v3860
        %3862 = vmatmul.bf16.gmra.mxu0 %v2082
        %v3863 = vpop.f32.mrf.mxu0
        %v3864 = vadd.f32 %v3775, %v3863
        %v3865 = vpop.f32.mrf.mxu0
        %v3866 = vadd.f32 %v3777, %v3865
        %3867 = vmatmul.bf16.gmra.mxu0 %v2085
        %v3868 = vpop.f32.mrf.mxu0
        %v3869 = vadd.f32 %v3780, %v3868
        %v3870 = vpop.f32.mrf.mxu0
        %v3871 = vadd.f32 %v3782, %v3870
        %3872 = vmatmul.bf16.gmra.mxu0 %v2088
        %v3873 = vpop.f32.mrf.mxu0
        %v3874 = vadd.f32 %v3785, %v3873
        %v3875 = vpop.f32.mrf.mxu0
        %v3876 = vadd.f32 %v3787, %v3875
        %3877 = vmatmul.bf16.gmra.mxu0 %v2091
        %v3878 = vpop.f32.mrf.mxu0
        %v3879 = vadd.f32 %v3790, %v3878
        %v3880 = vpop.f32.mrf.mxu0
        %v3881 = vadd.f32 %v3792, %v3880
        %3882 = vdwg.mxu0
        %3883 = vmatpush.bf16.msra.mxu0 %v3503
        %3884 = vmatpush.bf16.msra.mxu0 %v3502
        %3885 = vmatpush.bf16.msra.mxu0 %v3501
        %3886 = vmatpush.bf16.msra.mxu0 %v3500
        %3887 = vmatpush.bf16.msra.mxu0 %v3499
        %3888 = vmatpush.bf16.msra.mxu0 %v3498
        %3889 = vmatpush.bf16.msra.mxu0 %v3497
        %3890 = vmatpush.bf16.msra.mxu0 %v3496
        %3891 = vmatmul.bf16.gmra.mxu0 %v2172
        %v3892 = vpop.f32.mrf.mxu0
        %v3893 = vadd.f32 %v3804, %v3892
        %v3894 = vpop.f32.mrf.mxu0
        %v3895 = vadd.f32 %v3806, %v3894
        %3896 = vmatmul.bf16.gmra.mxu0 %v2173
        %v3897 = vpop.f32.mrf.mxu0
        %v3898 = vadd.f32 %v3809, %v3897
        %v3899 = vpop.f32.mrf.mxu0
        %v3900 = vadd.f32 %v3811, %v3899
        %3901 = vmatmul.bf16.gmra.mxu0 %v2174
        %v3902 = vpop.f32.mrf.mxu0
        %v3903 = vadd.f32 %v3814, %v3902
        %v3904 = vpop.f32.mrf.mxu0
        %v3905 = vadd.f32 %v3816, %v3904
        %3906 = vmatmul.bf16.gmra.mxu0 %v2175
        %v3907 = vpop.f32.mrf.mxu0
        %v3908 = vadd.f32 %v3819, %v3907
        %v3909 = vpop.f32.mrf.mxu0
        %v3910 = vadd.f32 %v3821, %v3909
        %3911 = vmatmul.bf16.gmra.mxu0 %v2176
        %v3912 = vpop.f32.mrf.mxu0
        %v3913 = vadd.f32 %v3824, %v3912
        %v3914 = vpop.f32.mrf.mxu0
        %v3915 = vadd.f32 %v3826, %v3914
        %3916 = vmatmul.bf16.gmra.mxu0 %v2177
        %v3917 = vpop.f32.mrf.mxu0
        %v3918 = vadd.f32 %v3829, %v3917
        %v3919 = vpop.f32.mrf.mxu0
        %v3920 = vadd.f32 %v3831, %v3919
        %3921 = vmatmul.bf16.gmra.mxu0 %v2178
        %v3922 = vpop.f32.mrf.mxu0
        %v3923 = vadd.f32 %v3834, %v3922
        %v3924 = vpop.f32.mrf.mxu0
        %v3925 = vadd.f32 %v3836, %v3924
        %3926 = vmatmul.bf16.gmra.mxu0 %v2179
        %v3927 = vpop.f32.mrf.mxu0
        %v3928 = vadd.f32 %v3839, %v3927
        %v3929 = vpop.f32.mrf.mxu0
        %v3930 = vadd.f32 %v3841, %v3929
        %3931 = vmatmul.bf16.gmra.mxu0 %v2180
        %v3932 = vpop.f32.mrf.mxu0
        %v3933 = vadd.f32 %v3844, %v3932
        %v3934 = vpop.f32.mrf.mxu0
        %v3935 = vadd.f32 %v3846, %v3934
        %3936 = vmatmul.bf16.gmra.mxu0 %v2181
        %v3937 = vpop.f32.mrf.mxu0
        %v3938 = vadd.f32 %v3849, %v3937
        %v3939 = vpop.f32.mrf.mxu0
        %v3940 = vadd.f32 %v3851, %v3939
        %3941 = vmatmul.bf16.gmra.mxu0 %v2182
        %v3942 = vpop.f32.mrf.mxu0
        %v3943 = vadd.f32 %v3854, %v3942
        %v3944 = vpop.f32.mrf.mxu0
        %v3945 = vadd.f32 %v3856, %v3944
        %3946 = vmatmul.bf16.gmra.mxu0 %v2183
        %v3947 = vpop.f32.mrf.mxu0
        %v3948 = vadd.f32 %v3859, %v3947
        %v3949 = vpop.f32.mrf.mxu0
        %v3950 = vadd.f32 %v3861, %v3949
        %3951 = vmatmul.bf16.gmra.mxu0 %v2184
        %v3952 = vpop.f32.mrf.mxu0
        %v3953 = vadd.f32 %v3864, %v3952
        %v3954 = vpop.f32.mrf.mxu0
        %v3955 = vadd.f32 %v3866, %v3954
        %3956 = vmatmul.bf16.gmra.mxu0 %v2185
        %v3957 = vpop.f32.mrf.mxu0
        %v3958 = vadd.f32 %v3869, %v3957
        %v3959 = vpop.f32.mrf.mxu0
        %v3960 = vadd.f32 %v3871, %v3959
        %3961 = vmatmul.bf16.gmra.mxu0 %v2186
        %v3962 = vpop.f32.mrf.mxu0
        %v3963 = vadd.f32 %v3874, %v3962
        %v3964 = vpop.f32.mrf.mxu0
        %v3965 = vadd.f32 %v3876, %v3964
        %3966 = vmatmul.bf16.gmra.mxu0 %v2187
        %v3967 = vpop.f32.mrf.mxu0
        %v3968 = vadd.f32 %v3879, %v3967
        %v3969 = vpop.f32.mrf.mxu0
        %v3970 = vadd.f32 %v3881, %v3969
        %3971 = vdwg.mxu0
        %3972 = vmatpush.bf16.msra.mxu0 %v3511
        %3973 = vmatpush.bf16.msra.mxu0 %v3510
        %3974 = vmatpush.bf16.msra.mxu0 %v3509
        %3975 = vmatpush.bf16.msra.mxu0 %v3508
        %3976 = vmatpush.bf16.msra.mxu0 %v3507
        %3977 = vmatpush.bf16.msra.mxu0 %v3506
        %3978 = vmatpush.bf16.msra.mxu0 %v3505
        %3979 = vmatpush.bf16.msra.mxu0 %v3504
        %3980 = vmatmul.bf16.gmra.mxu0 %v2263
        %v3981 = vpop.f32.mrf.mxu0
        %v3982 = vadd.f32 %v3893, %v3981
        %v3983 = vpop.f32.mrf.mxu0
        %v3984 = vadd.f32 %v3895, %v3983
        %3985 = vmatmul.bf16.gmra.mxu0 %v2275
        %v3986 = vpop.f32.mrf.mxu0
        %v3987 = vadd.f32 %v3898, %v3986
        %v3988 = vpop.f32.mrf.mxu0
        %v3989 = vadd.f32 %v3900, %v3988
        %3990 = vmatmul.bf16.gmra.mxu0 %v2287
        %v3991 = vpop.f32.mrf.mxu0
        %v3992 = vadd.f32 %v3903, %v3991
        %v3993 = vpop.f32.mrf.mxu0
        %v3994 = vadd.f32 %v3905, %v3993
        %3995 = vmatmul.bf16.gmra.mxu0 %v2299
        %v3996 = vpop.f32.mrf.mxu0
        %v3997 = vadd.f32 %v3908, %v3996
        %v3998 = vpop.f32.mrf.mxu0
        %v3999 = vadd.f32 %v3910, %v3998
        %4000 = vmatmul.bf16.gmra.mxu0 %v2311
        %v4001 = vpop.f32.mrf.mxu0
        %v4002 = vadd.f32 %v3913, %v4001
        %v4003 = vpop.f32.mrf.mxu0
        %v4004 = vadd.f32 %v3915, %v4003
        %4005 = vmatmul.bf16.gmra.mxu0 %v2323
        %v4006 = vpop.f32.mrf.mxu0
        %v4007 = vadd.f32 %v3918, %v4006
        %v4008 = vpop.f32.mrf.mxu0
        %v4009 = vadd.f32 %v3920, %v4008
        %4010 = vmatmul.bf16.gmra.mxu0 %v2335
        %v4011 = vpop.f32.mrf.mxu0
        %v4012 = vadd.f32 %v3923, %v4011
        %v4013 = vpop.f32.mrf.mxu0
        %v4014 = vadd.f32 %v3925, %v4013
        %4015 = vmatmul.bf16.gmra.mxu0 %v2347
        %v4016 = vpop.f32.mrf.mxu0
        %v4017 = vadd.f32 %v3928, %v4016
        %v4018 = vpop.f32.mrf.mxu0
        %v4019 = vadd.f32 %v3930, %v4018
        %4020 = vmatmul.bf16.gmra.mxu0 %v2359
        %v4021 = vpop.f32.mrf.mxu0
        %v4022 = vadd.f32 %v3933, %v4021
        %v4023 = vpop.f32.mrf.mxu0
        %v4024 = vadd.f32 %v3935, %v4023
        %4025 = vmatmul.bf16.gmra.mxu0 %v2371
        %v4026 = vpop.f32.mrf.mxu0
        %v4027 = vadd.f32 %v3938, %v4026
        %v4028 = vpop.f32.mrf.mxu0
        %v4029 = vadd.f32 %v3940, %v4028
        %4030 = vmatmul.bf16.gmra.mxu0 %v2383
        %v4031 = vpop.f32.mrf.mxu0
        %v4032 = vadd.f32 %v3943, %v4031
        %v4033 = vpop.f32.mrf.mxu0
        %v4034 = vadd.f32 %v3945, %v4033
        %4035 = vmatmul.bf16.gmra.mxu0 %v2395
        %v4036 = vpop.f32.mrf.mxu0
        %v4037 = vadd.f32 %v3948, %v4036
        %v4038 = vpop.f32.mrf.mxu0
        %v4039 = vadd.f32 %v3950, %v4038
        %4040 = vmatmul.bf16.gmra.mxu0 %v2407
        %v4041 = vpop.f32.mrf.mxu0
        %v4042 = vadd.f32 %v3953, %v4041
        %v4043 = vpop.f32.mrf.mxu0
        %v4044 = vadd.f32 %v3955, %v4043
        %4045 = vmatmul.bf16.gmra.mxu0 %v2419
        %v4046 = vpop.f32.mrf.mxu0
        %v4047 = vadd.f32 %v3958, %v4046
        %v4048 = vpop.f32.mrf.mxu0
        %v4049 = vadd.f32 %v3960, %v4048
        %4050 = vmatmul.bf16.gmra.mxu0 %v2431
        %v4051 = vpop.f32.mrf.mxu0
        %v4052 = vadd.f32 %v3963, %v4051
        %v4053 = vpop.f32.mrf.mxu0
        %v4054 = vadd.f32 %v3965, %v4053
        %4055 = vmatmul.bf16.gmra.mxu0 %v2443
        %v4056 = vpop.f32.mrf.mxu0
        %v4057 = vadd.f32 %v3968, %v4056
        %v4058 = vpop.f32.mrf.mxu0
        %v4059 = vadd.f32 %v3970, %v4058
        %4060 = vdwg.mxu0
        %4061 = vmatpush.bf16.msra.mxu0 %v3519
        %4062 = vmatpush.bf16.msra.mxu0 %v3518
        %4063 = vmatpush.bf16.msra.mxu0 %v3517
        %4064 = vmatpush.bf16.msra.mxu0 %v3516
        %4065 = vmatpush.bf16.msra.mxu0 %v3515
        %4066 = vmatpush.bf16.msra.mxu0 %v3514
        %4067 = vmatpush.bf16.msra.mxu0 %v3513
        %4068 = vmatpush.bf16.msra.mxu0 %v3512
        %4069 = vmatmul.bf16.gmra.mxu0 %v2510
        %v4070 = vpop.f32.mrf.mxu0
        %v4071 = vadd.f32 %v3982, %v4070
        %v4072 = vpop.f32.mrf.mxu0
        %v4073 = vadd.f32 %v3984, %v4072
        %4074 = vmatmul.bf16.gmra.mxu0 %v2513
        %v4075 = vpop.f32.mrf.mxu0
        %v4076 = vadd.f32 %v3987, %v4075
        %v4077 = vpop.f32.mrf.mxu0
        %v4078 = vadd.f32 %v3989, %v4077
        %4079 = vmatmul.bf16.gmra.mxu0 %v2516
        %v4080 = vpop.f32.mrf.mxu0
        %v4081 = vadd.f32 %v3992, %v4080
        %v4082 = vpop.f32.mrf.mxu0
        %v4083 = vadd.f32 %v3994, %v4082
        %4084 = vmatmul.bf16.gmra.mxu0 %v2519
        %v4085 = vpop.f32.mrf.mxu0
        %v4086 = vadd.f32 %v3997, %v4085
        %v4087 = vpop.f32.mrf.mxu0
        %v4088 = vadd.f32 %v3999, %v4087
        %4089 = vmatmul.bf16.gmra.mxu0 %v2522
        %v4090 = vpop.f32.mrf.mxu0
        %v4091 = vadd.f32 %v4002, %v4090
        %v4092 = vpop.f32.mrf.mxu0
        %v4093 = vadd.f32 %v4004, %v4092
        %4094 = vmatmul.bf16.gmra.mxu0 %v2525
        %v4095 = vpop.f32.mrf.mxu0
        %v4096 = vadd.f32 %v4007, %v4095
        %v4097 = vpop.f32.mrf.mxu0
        %v4098 = vadd.f32 %v4009, %v4097
        %4099 = vmatmul.bf16.gmra.mxu0 %v2528
        %v4100 = vpop.f32.mrf.mxu0
        %v4101 = vadd.f32 %v4012, %v4100
        %v4102 = vpop.f32.mrf.mxu0
        %v4103 = vadd.f32 %v4014, %v4102
        %4104 = vmatmul.bf16.gmra.mxu0 %v2531
        %v4105 = vpop.f32.mrf.mxu0
        %v4106 = vadd.f32 %v4017, %v4105
        %v4107 = vpop.f32.mrf.mxu0
        %v4108 = vadd.f32 %v4019, %v4107
        %4109 = vmatmul.bf16.gmra.mxu0 %v2534
        %v4110 = vpop.f32.mrf.mxu0
        %v4111 = vadd.f32 %v4022, %v4110
        %v4112 = vpop.f32.mrf.mxu0
        %v4113 = vadd.f32 %v4024, %v4112
        %4114 = vmatmul.bf16.gmra.mxu0 %v2537
        %v4115 = vpop.f32.mrf.mxu0
        %v4116 = vadd.f32 %v4027, %v4115
        %v4117 = vpop.f32.mrf.mxu0
        %v4118 = vadd.f32 %v4029, %v4117
        %4119 = vmatmul.bf16.gmra.mxu0 %v2540
        %v4120 = vpop.f32.mrf.mxu0
        %v4121 = vadd.f32 %v4032, %v4120
        %v4122 = vpop.f32.mrf.mxu0
        %v4123 = vadd.f32 %v4034, %v4122
        %4124 = vmatmul.bf16.gmra.mxu0 %v2543
        %v4125 = vpop.f32.mrf.mxu0
        %v4126 = vadd.f32 %v4037, %v4125
        %v4127 = vpop.f32.mrf.mxu0
        %v4128 = vadd.f32 %v4039, %v4127
        %4129 = vmatmul.bf16.gmra.mxu0 %v2546
        %v4130 = vpop.f32.mrf.mxu0
        %v4131 = vadd.f32 %v4042, %v4130
        %v4132 = vpop.f32.mrf.mxu0
        %v4133 = vadd.f32 %v4044, %v4132
        %4134 = vmatmul.bf16.gmra.mxu0 %v2549
        %v4135 = vpop.f32.mrf.mxu0
        %v4136 = vadd.f32 %v4047, %v4135
        %v4137 = vpop.f32.mrf.mxu0
        %v4138 = vadd.f32 %v4049, %v4137
        %4139 = vmatmul.bf16.gmra.mxu0 %v2552
        %v4140 = vpop.f32.mrf.mxu0
        %v4141 = vadd.f32 %v4052, %v4140
        %v4142 = vpop.f32.mrf.mxu0
        %v4143 = vadd.f32 %v4054, %v4142
        %4144 = vmatmul.bf16.gmra.mxu0 %v2555
        %v4145 = vpop.f32.mrf.mxu0
        %v4146 = vadd.f32 %v4057, %v4145
        %v4147 = vpop.f32.mrf.mxu0
        %v4148 = vadd.f32 %v4059, %v4147
        %4149 = vdwg.mxu0
        %4150 = vmatpush.bf16.msra.mxu0 %v3527
        %4151 = vmatpush.bf16.msra.mxu0 %v3526
        %4152 = vmatpush.bf16.msra.mxu0 %v3525
        %4153 = vmatpush.bf16.msra.mxu0 %v3524
        %4154 = vmatpush.bf16.msra.mxu0 %v3523
        %4155 = vmatpush.bf16.msra.mxu0 %v3522
        %4156 = vmatpush.bf16.msra.mxu0 %v3521
        %4157 = vmatpush.bf16.msra.mxu0 %v3520
        %4158 = vmatmul.bf16.gmra.mxu0 %v2636
        %v4159 = vpop.f32.mrf.mxu0
        %v4160 = vadd.f32 %v4071, %v4159
        %v4161 = vpop.f32.mrf.mxu0
        %v4162 = vadd.f32 %v4073, %v4161
        %4163 = vmatmul.bf16.gmra.mxu0 %v2637
        %v4164 = vpop.f32.mrf.mxu0
        %v4165 = vadd.f32 %v4076, %v4164
        %v4166 = vpop.f32.mrf.mxu0
        %v4167 = vadd.f32 %v4078, %v4166
        %4168 = vmatmul.bf16.gmra.mxu0 %v2638
        %v4169 = vpop.f32.mrf.mxu0
        %v4170 = vadd.f32 %v4081, %v4169
        %v4171 = vpop.f32.mrf.mxu0
        %v4172 = vadd.f32 %v4083, %v4171
        %4173 = vmatmul.bf16.gmra.mxu0 %v2639
        %v4174 = vpop.f32.mrf.mxu0
        %v4175 = vadd.f32 %v4086, %v4174
        %v4176 = vpop.f32.mrf.mxu0
        %v4177 = vadd.f32 %v4088, %v4176
        %4178 = vmatmul.bf16.gmra.mxu0 %v2640
        %v4179 = vpop.f32.mrf.mxu0
        %v4180 = vadd.f32 %v4091, %v4179
        %v4181 = vpop.f32.mrf.mxu0
        %v4182 = vadd.f32 %v4093, %v4181
        %4183 = vmatmul.bf16.gmra.mxu0 %v2641
        %v4184 = vpop.f32.mrf.mxu0
        %v4185 = vadd.f32 %v4096, %v4184
        %v4186 = vpop.f32.mrf.mxu0
        %v4187 = vadd.f32 %v4098, %v4186
        %4188 = vmatmul.bf16.gmra.mxu0 %v2642
        %v4189 = vpop.f32.mrf.mxu0
        %v4190 = vadd.f32 %v4101, %v4189
        %v4191 = vpop.f32.mrf.mxu0
        %v4192 = vadd.f32 %v4103, %v4191
        %4193 = vmatmul.bf16.gmra.mxu0 %v2643
        %v4194 = vpop.f32.mrf.mxu0
        %v4195 = vadd.f32 %v4106, %v4194
        %v4196 = vpop.f32.mrf.mxu0
        %v4197 = vadd.f32 %v4108, %v4196
        %4198 = vmatmul.bf16.gmra.mxu0 %v2644
        %v4199 = vpop.f32.mrf.mxu0
        %v4200 = vadd.f32 %v4111, %v4199
        %v4201 = vpop.f32.mrf.mxu0
        %v4202 = vadd.f32 %v4113, %v4201
        %4203 = vmatmul.bf16.gmra.mxu0 %v2645
        %v4204 = vpop.f32.mrf.mxu0
        %v4205 = vadd.f32 %v4116, %v4204
        %v4206 = vpop.f32.mrf.mxu0
        %v4207 = vadd.f32 %v4118, %v4206
        %4208 = vmatmul.bf16.gmra.mxu0 %v2646
        %v4209 = vpop.f32.mrf.mxu0
        %v4210 = vadd.f32 %v4121, %v4209
        %v4211 = vpop.f32.mrf.mxu0
        %v4212 = vadd.f32 %v4123, %v4211
        %4213 = vmatmul.bf16.gmra.mxu0 %v2647
        %v4214 = vpop.f32.mrf.mxu0
        %v4215 = vadd.f32 %v4126, %v4214
        %v4216 = vpop.f32.mrf.mxu0
        %v4217 = vadd.f32 %v4128, %v4216
        %4218 = vmatmul.bf16.gmra.mxu0 %v2648
        %v4219 = vpop.f32.mrf.mxu0
        %v4220 = vadd.f32 %v4131, %v4219
        %v4221 = vpop.f32.mrf.mxu0
        %v4222 = vadd.f32 %v4133, %v4221
        %4223 = vmatmul.bf16.gmra.mxu0 %v2649
        %v4224 = vpop.f32.mrf.mxu0
        %v4225 = vadd.f32 %v4136, %v4224
        %v4226 = vpop.f32.mrf.mxu0
        %v4227 = vadd.f32 %v4138, %v4226
        %4228 = vmatmul.bf16.gmra.mxu0 %v2650
        %v4229 = vpop.f32.mrf.mxu0
        %v4230 = vadd.f32 %v4141, %v4229
        %v4231 = vpop.f32.mrf.mxu0
        %v4232 = vadd.f32 %v4143, %v4231
        %4233 = vmatmul.bf16.gmra.mxu0 %v2651
        %v4234 = vpop.f32.mrf.mxu0
        %v4235 = vadd.f32 %v4146, %v4234
        %v4236 = vpop.f32.mrf.mxu0
        %v4237 = vadd.f32 %v4148, %v4236
        %4238 = vdwg.mxu0
        %4239 = vmatpush.bf16.msra.mxu0 %v3535
        %4240 = vmatpush.bf16.msra.mxu0 %v3534
        %4241 = vmatpush.bf16.msra.mxu0 %v3533
        %4242 = vmatpush.bf16.msra.mxu0 %v3532
        %4243 = vmatpush.bf16.msra.mxu0 %v3531
        %4244 = vmatpush.bf16.msra.mxu0 %v3530
        %4245 = vmatpush.bf16.msra.mxu0 %v3529
        %4246 = vmatpush.bf16.msra.mxu0 %v3528
        %4247 = vmatmul.bf16.gmra.mxu0 %v2727
        %v4248 = vpop.f32.mrf.mxu0
        %v4249 = vadd.f32 %v4160, %v4248
        %v4250 = vpop.f32.mrf.mxu0
        %v4251 = vadd.f32 %v4162, %v4250
        %4252 = vmatmul.bf16.gmra.mxu0 %v2739
        %v4253 = vpop.f32.mrf.mxu0
        %v4254 = vadd.f32 %v4165, %v4253
        %v4255 = vpop.f32.mrf.mxu0
        %v4256 = vadd.f32 %v4167, %v4255
        %4257 = vmatmul.bf16.gmra.mxu0 %v2751
        %v4258 = vpop.f32.mrf.mxu0
        %v4259 = vadd.f32 %v4170, %v4258
        %v4260 = vpop.f32.mrf.mxu0
        %v4261 = vadd.f32 %v4172, %v4260
        %4262 = vmatmul.bf16.gmra.mxu0 %v2763
        %v4263 = vpop.f32.mrf.mxu0
        %v4264 = vadd.f32 %v4175, %v4263
        %v4265 = vpop.f32.mrf.mxu0
        %v4266 = vadd.f32 %v4177, %v4265
        %4267 = vmatmul.bf16.gmra.mxu0 %v2775
        %v4268 = vpop.f32.mrf.mxu0
        %v4269 = vadd.f32 %v4180, %v4268
        %v4270 = vpop.f32.mrf.mxu0
        %v4271 = vadd.f32 %v4182, %v4270
        %4272 = vmatmul.bf16.gmra.mxu0 %v2787
        %v4273 = vpop.f32.mrf.mxu0
        %v4274 = vadd.f32 %v4185, %v4273
        %v4275 = vpop.f32.mrf.mxu0
        %v4276 = vadd.f32 %v4187, %v4275
        %4277 = vmatmul.bf16.gmra.mxu0 %v2799
        %v4278 = vpop.f32.mrf.mxu0
        %v4279 = vadd.f32 %v4190, %v4278
        %v4280 = vpop.f32.mrf.mxu0
        %v4281 = vadd.f32 %v4192, %v4280
        %4282 = vmatmul.bf16.gmra.mxu0 %v2811
        %v4283 = vpop.f32.mrf.mxu0
        %v4284 = vadd.f32 %v4195, %v4283
        %v4285 = vpop.f32.mrf.mxu0
        %v4286 = vadd.f32 %v4197, %v4285
        %4287 = vmatmul.bf16.gmra.mxu0 %v2823
        %v4288 = vpop.f32.mrf.mxu0
        %v4289 = vadd.f32 %v4200, %v4288
        %v4290 = vpop.f32.mrf.mxu0
        %v4291 = vadd.f32 %v4202, %v4290
        %4292 = vmatmul.bf16.gmra.mxu0 %v2835
        %v4293 = vpop.f32.mrf.mxu0
        %v4294 = vadd.f32 %v4205, %v4293
        %v4295 = vpop.f32.mrf.mxu0
        %v4296 = vadd.f32 %v4207, %v4295
        %4297 = vmatmul.bf16.gmra.mxu0 %v2847
        %v4298 = vpop.f32.mrf.mxu0
        %v4299 = vadd.f32 %v4210, %v4298
        %v4300 = vpop.f32.mrf.mxu0
        %v4301 = vadd.f32 %v4212, %v4300
        %4302 = vmatmul.bf16.gmra.mxu0 %v2859
        %v4303 = vpop.f32.mrf.mxu0
        %v4304 = vadd.f32 %v4215, %v4303
        %v4305 = vpop.f32.mrf.mxu0
        %v4306 = vadd.f32 %v4217, %v4305
        %4307 = vmatmul.bf16.gmra.mxu0 %v2871
        %v4308 = vpop.f32.mrf.mxu0
        %v4309 = vadd.f32 %v4220, %v4308
        %v4310 = vpop.f32.mrf.mxu0
        %v4311 = vadd.f32 %v4222, %v4310
        %4312 = vmatmul.bf16.gmra.mxu0 %v2883
        %v4313 = vpop.f32.mrf.mxu0
        %v4314 = vadd.f32 %v4225, %v4313
        %v4315 = vpop.f32.mrf.mxu0
        %v4316 = vadd.f32 %v4227, %v4315
        %4317 = vmatmul.bf16.gmra.mxu0 %v2895
        %v4318 = vpop.f32.mrf.mxu0
        %v4319 = vadd.f32 %v4230, %v4318
        %v4320 = vpop.f32.mrf.mxu0
        %v4321 = vadd.f32 %v4232, %v4320
        %4322 = vmatmul.bf16.gmra.mxu0 %v2907
        %v4323 = vpop.f32.mrf.mxu0
        %v4324 = vadd.f32 %v4235, %v4323
        %v4325 = vpop.f32.mrf.mxu0
        %v4326 = vadd.f32 %v4237, %v4325
        %4327 = vdwg.mxu0
        %4328 = vmatpush.bf16.msra.mxu0 %v3543
        %4329 = vmatpush.bf16.msra.mxu0 %v3542
        %4330 = vmatpush.bf16.msra.mxu0 %v3541
        %4331 = vmatpush.bf16.msra.mxu0 %v3540
        %4332 = vmatpush.bf16.msra.mxu0 %v3539
        %4333 = vmatpush.bf16.msra.mxu0 %v3538
        %4334 = vmatpush.bf16.msra.mxu0 %v3537
        %4335 = vmatpush.bf16.msra.mxu0 %v3536
        %4336 = vmatmul.bf16.gmra.mxu0 %v2974
        %v4337 = vpop.f32.mrf.mxu0
        %v4338 = vadd.f32 %v4249, %v4337
        %v4339 = vpop.f32.mrf.mxu0
        %v4340 = vadd.f32 %v4251, %v4339
        %4341 = vmatmul.bf16.gmra.mxu0 %v2977
        %v4342 = vpop.f32.mrf.mxu0
        %v4343 = vadd.f32 %v4254, %v4342
        %v4344 = vpop.f32.mrf.mxu0
        %v4345 = vadd.f32 %v4256, %v4344
        %4346 = vmatmul.bf16.gmra.mxu0 %v2980
        %v4347 = vpop.f32.mrf.mxu0
        %v4348 = vadd.f32 %v4259, %v4347
        %v4349 = vpop.f32.mrf.mxu0
        %v4350 = vadd.f32 %v4261, %v4349
        %4351 = vmatmul.bf16.gmra.mxu0 %v2983
        %v4352 = vpop.f32.mrf.mxu0
        %v4353 = vadd.f32 %v4264, %v4352
        %v4354 = vpop.f32.mrf.mxu0
        %v4355 = vadd.f32 %v4266, %v4354
        %4356 = vmatmul.bf16.gmra.mxu0 %v2986
        %v4357 = vpop.f32.mrf.mxu0
        %v4358 = vadd.f32 %v4269, %v4357
        %v4359 = vpop.f32.mrf.mxu0
        %v4360 = vadd.f32 %v4271, %v4359
        %4361 = vmatmul.bf16.gmra.mxu0 %v2989
        %v4362 = vpop.f32.mrf.mxu0
        %v4363 = vadd.f32 %v4274, %v4362
        %v4364 = vpop.f32.mrf.mxu0
        %v4365 = vadd.f32 %v4276, %v4364
        %4366 = vmatmul.bf16.gmra.mxu0 %v2992
        %v4367 = vpop.f32.mrf.mxu0
        %v4368 = vadd.f32 %v4279, %v4367
        %v4369 = vpop.f32.mrf.mxu0
        %v4370 = vadd.f32 %v4281, %v4369
        %4371 = vmatmul.bf16.gmra.mxu0 %v2995
        %v4372 = vpop.f32.mrf.mxu0
        %v4373 = vadd.f32 %v4284, %v4372
        %v4374 = vpop.f32.mrf.mxu0
        %v4375 = vadd.f32 %v4286, %v4374
        %4376 = vmatmul.bf16.gmra.mxu0 %v2998
        %v4377 = vpop.f32.mrf.mxu0
        %v4378 = vadd.f32 %v4289, %v4377
        %v4379 = vpop.f32.mrf.mxu0
        %v4380 = vadd.f32 %v4291, %v4379
        %4381 = vmatmul.bf16.gmra.mxu0 %v3001
        %v4382 = vpop.f32.mrf.mxu0
        %v4383 = vadd.f32 %v4294, %v4382
        %v4384 = vpop.f32.mrf.mxu0
        %v4385 = vadd.f32 %v4296, %v4384
        %4386 = vmatmul.bf16.gmra.mxu0 %v3004
        %v4387 = vpop.f32.mrf.mxu0
        %v4388 = vadd.f32 %v4299, %v4387
        %v4389 = vpop.f32.mrf.mxu0
        %v4390 = vadd.f32 %v4301, %v4389
        %4391 = vmatmul.bf16.gmra.mxu0 %v3007
        %v4392 = vpop.f32.mrf.mxu0
        %v4393 = vadd.f32 %v4304, %v4392
        %v4394 = vpop.f32.mrf.mxu0
        %v4395 = vadd.f32 %v4306, %v4394
        %4396 = vmatmul.bf16.gmra.mxu0 %v3010
        %v4397 = vpop.f32.mrf.mxu0
        %v4398 = vadd.f32 %v4309, %v4397
        %v4399 = vpop.f32.mrf.mxu0
        %v4400 = vadd.f32 %v4311, %v4399
        %4401 = vmatmul.bf16.gmra.mxu0 %v3013
        %v4402 = vpop.f32.mrf.mxu0
        %v4403 = vadd.f32 %v4314, %v4402
        %v4404 = vpop.f32.mrf.mxu0
        %v4405 = vadd.f32 %v4316, %v4404
        %4406 = vmatmul.bf16.gmra.mxu0 %v3016
        %v4407 = vpop.f32.mrf.mxu0
        %v4408 = vadd.f32 %v4319, %v4407
        %v4409 = vpop.f32.mrf.mxu0
        %v4410 = vadd.f32 %v4321, %v4409
        %4411 = vmatmul.bf16.gmra.mxu0 %v3019
        %v4412 = vpop.f32.mrf.mxu0
        %v4413 = vadd.f32 %v4324, %v4412
        %v4414 = vpop.f32.mrf.mxu0
        %v4415 = vadd.f32 %v4326, %v4414
        %4416 = vdwg.mxu0
        %v4417 = vmax.f32 %v4338, 0.0
        %v4418 = vmax.f32 %v4340, 0.0
        %v4419 = vmax.f32 %v4343, 0.0
        %v4420 = vmax.f32 %v4345, 0.0
        %v4421 = vmax.f32 %v4348, 0.0
        %v4422 = vmax.f32 %v4350, 0.0
        %v4423 = vmax.f32 %v4353, 0.0
        %v4424 = vmax.f32 %v4355, 0.0
        %v4425 = vmax.f32 %v4358, 0.0
        %v4426 = vmax.f32 %v4360, 0.0
        %v4427 = vmax.f32 %v4363, 0.0
        %v4428 = vmax.f32 %v4365, 0.0
        %v4429 = vmax.f32 %v4368, 0.0
        %v4430 = vmax.f32 %v4370, 0.0
        %v4431 = vmax.f32 %v4373, 0.0
        %v4432 = vmax.f32 %v4375, 0.0
        %v4433 = vmax.f32 %v4378, 0.0
        %v4434 = vmax.f32 %v4380, 0.0
        %v4435 = vmax.f32 %v4383, 0.0
        %v4436 = vmax.f32 %v4385, 0.0
        %v4437 = vmax.f32 %v4388, 0.0
        %v4438 = vmax.f32 %v4390, 0.0
        %v4439 = vmax.f32 %v4393, 0.0
        %v4440 = vmax.f32 %v4395, 0.0
        %v4441 = vmax.f32 %v4398, 0.0
        %v4442 = vmax.f32 %v4400, 0.0
        %v4443 = vmax.f32 %v4403, 0.0
        %v4444 = vmax.f32 %v4405, 0.0
        %v4445 = vmax.f32 %v4408, 0.0
        %v4446 = vmax.f32 %v4410, 0.0
        %v4447 = vmax.f32 %v4413, 0.0
        %v4448 = vmax.f32 %v4415, 0.0
        %v4449 = vpack.c.bf16 %v4418, %v4417
        %v4450 = vpack.c.bf16 %v4420, %v4419
        %v4451 = vpack.c.bf16 %v4422, %v4421
        %v4452 = vpack.c.bf16 %v4424, %v4423
        %v4453 = vpack.c.bf16 %v4426, %v4425
        %v4454 = vpack.c.bf16 %v4428, %v4427
        %v4455 = vpack.c.bf16 %v4430, %v4429
        %v4456 = vpack.c.bf16 %v4432, %v4431
        %v4457 = vpack.c.bf16 %v4434, %v4433
        %v4458 = vpack.c.bf16 %v4436, %v4435
        %v4459 = vpack.c.bf16 %v4438, %v4437
        %v4460 = vpack.c.bf16 %v4440, %v4439
        %v4461 = vpack.c.bf16 %v4442, %v4441
        %v4462 = vpack.c.bf16 %v4444, %v4443
        %v4463 = vpack.c.bf16 %v4446, %v4445
        %v4464 = vpack.c.bf16 %v4448, %v4447
        %v4465 = vld [vmem:[%s7] sm:$0xf]
        %v4466 = vld [vmem:[%s7 + $0x4] sm:$0xf]
        %v4467 = vld [vmem:[%s7 + $0x8] sm:$0xf]
        %v4468 = vld [vmem:[%s7 + $0xc] sm:$0xf]
        %v4469 = vld [vmem:[%s7 + $0x10] sm:$0xf]
        %v4470 = vld [vmem:[%s7 + $0x14] sm:$0xf]
        %v4471 = vld [vmem:[%s7 + $0x18] sm:$0xf]
        %v4472 = vld [vmem:[%s7 + $0x1c] sm:$0xf]
        %v4481 = vunpack.c.l.b16 %v4465
        %v4482 = vunpack.c.l.b16 %v4466
        %v4483 = vunpack.c.l.b16 %v4467
        %v4484 = vunpack.c.l.b16 %v4468
        %v4485 = vunpack.c.l.b16 %v4469
        %v4486 = vunpack.c.l.b16 %v4470
        %v4487 = vunpack.c.l.b16 %v4471
        %v4488 = vunpack.c.l.b16 %v4472
        %v4489 = vpack.c.b16 %v4482, %v4481
        %v4490 = vpack.c.b16 %v4484, %v4483
        %v4491 = vpack.c.b16 %v4486, %v4485
        %v4492 = vpack.c.b16 %v4488, %v4487
        %v4498 = vsel %vm481, %v4449, 0
        %v4501 = vsel %vm481, %v4450, 0
        %v4504 = vsel %vm481, %v4451, 0
        %v4507 = vsel %vm481, %v4452, 0
        %v4510 = vsel %vm481, %v4453, 0
        %v4513 = vsel %vm481, %v4454, 0
        %v4516 = vsel %vm481, %v4455, 0
        %v4519 = vsel %vm481, %v4456, 0
        %v4522 = vsel %vm481, %v4457, 0
        %v4525 = vsel %vm481, %v4458, 0
        %v4528 = vsel %vm481, %v4459, 0
        %v4531 = vsel %vm481, %v4460, 0
        %v4534 = vsel %vm481, %v4461, 0
        %v4537 = vsel %vm481, %v4462, 0
        %v4540 = vsel %vm481, %v4463, 0
        %v4543 = vsel %vm481, %v4464, 0
        %4545 = vmatpush.bf16.msra.mxu0 0
        %4546 = vmatpush.bf16.msra.mxu0 0
        %4547 = vmatpush.bf16.msra.mxu0 0
        %4548 = vmatpush.bf16.msra.mxu0 0
        %4549 = vmatpush.bf16.msra.mxu0 %v4492
        %4550 = vmatpush.bf16.msra.mxu0 %v4491
        %4551 = vmatpush.bf16.msra.mxu0 %v4490
        %4552 = vmatpush.bf16.msra.mxu0 %v4489
        %4553 = vmatmul.bf16.gmra.mxu0 %v4498
        %v4554 = vpop.f32.mrf.mxu0
        %v4555 = vadd.f32 0.0, %v4554
        %v4556 = vpop.f32.mrf.mxu0
        %v4557 = vadd.f32 0.0, %v4556
        %4558 = vmatmul.bf16.gmra.mxu0 %v4501
        %v4559 = vpop.f32.mrf.mxu0
        %v4560 = vadd.f32 0.0, %v4559
        %v4561 = vpop.f32.mrf.mxu0
        %v4562 = vadd.f32 0.0, %v4561
        %4563 = vmatmul.bf16.gmra.mxu0 %v4504
        %v4564 = vpop.f32.mrf.mxu0
        %v4565 = vadd.f32 0.0, %v4564
        %v4566 = vpop.f32.mrf.mxu0
        %v4567 = vadd.f32 0.0, %v4566
        %4568 = vmatmul.bf16.gmra.mxu0 %v4507
        %v4569 = vpop.f32.mrf.mxu0
        %v4570 = vadd.f32 0.0, %v4569
        %v4571 = vpop.f32.mrf.mxu0
        %v4572 = vadd.f32 0.0, %v4571
        %4573 = vmatmul.bf16.gmra.mxu0 %v4510
        %v4574 = vpop.f32.mrf.mxu0
        %v4575 = vadd.f32 0.0, %v4574
        %v4576 = vpop.f32.mrf.mxu0
        %v4577 = vadd.f32 0.0, %v4576
        %4578 = vmatmul.bf16.gmra.mxu0 %v4513
        %v4579 = vpop.f32.mrf.mxu0
        %v4580 = vadd.f32 0.0, %v4579
        %v4581 = vpop.f32.mrf.mxu0
        %v4582 = vadd.f32 0.0, %v4581
        %4583 = vmatmul.bf16.gmra.mxu0 %v4516
        %v4584 = vpop.f32.mrf.mxu0
        %v4585 = vadd.f32 0.0, %v4584
        %v4586 = vpop.f32.mrf.mxu0
        %v4587 = vadd.f32 0.0, %v4586
        %4588 = vmatmul.bf16.gmra.mxu0 %v4519
        %v4589 = vpop.f32.mrf.mxu0
        %v4590 = vadd.f32 0.0, %v4589
        %v4591 = vpop.f32.mrf.mxu0
        %v4592 = vadd.f32 0.0, %v4591
        %4593 = vmatmul.bf16.gmra.mxu0 %v4522
        %v4594 = vpop.f32.mrf.mxu0
        %v4595 = vadd.f32 0.0, %v4594
        %v4596 = vpop.f32.mrf.mxu0
        %v4597 = vadd.f32 0.0, %v4596
        %4598 = vmatmul.bf16.gmra.mxu0 %v4525
        %v4599 = vpop.f32.mrf.mxu0
        %v4600 = vadd.f32 0.0, %v4599
        %v4601 = vpop.f32.mrf.mxu0
        %v4602 = vadd.f32 0.0, %v4601
        %4603 = vmatmul.bf16.gmra.mxu0 %v4528
        %v4604 = vpop.f32.mrf.mxu0
        %v4605 = vadd.f32 0.0, %v4604
        %v4606 = vpop.f32.mrf.mxu0
        %v4607 = vadd.f32 0.0, %v4606
        %4608 = vmatmul.bf16.gmra.mxu0 %v4531
        %v4609 = vpop.f32.mrf.mxu0
        %v4610 = vadd.f32 0.0, %v4609
        %v4611 = vpop.f32.mrf.mxu0
        %v4612 = vadd.f32 0.0, %v4611
        %4613 = vmatmul.bf16.gmra.mxu0 %v4534
        %v4614 = vpop.f32.mrf.mxu0
        %v4615 = vadd.f32 0.0, %v4614
        %v4616 = vpop.f32.mrf.mxu0
        %v4617 = vadd.f32 0.0, %v4616
        %4618 = vmatmul.bf16.gmra.mxu0 %v4537
        %v4619 = vpop.f32.mrf.mxu0
        %v4620 = vadd.f32 0.0, %v4619
        %v4621 = vpop.f32.mrf.mxu0
        %v4622 = vadd.f32 0.0, %v4621
        %4623 = vmatmul.bf16.gmra.mxu0 %v4540
        %v4624 = vpop.f32.mrf.mxu0
        %v4625 = vadd.f32 0.0, %v4624
        %v4626 = vpop.f32.mrf.mxu0
        %v4627 = vadd.f32 0.0, %v4626
        %4628 = vmatmul.bf16.gmra.mxu0 %v4543
        %v4629 = vpop.f32.mrf.mxu0
        %v4630 = vadd.f32 0.0, %v4629
        %v4631 = vpop.f32.mrf.mxu0
        %v4632 = vadd.f32 0.0, %v4631
        %4633 = vdwg.mxu0
        %v4634 = vadd.f32 %v636, %v4555
        %v4635 = vadd.f32 %v638, %v4557
        %v4636 = vadd.f32 %v641, %v4560
        %v4637 = vadd.f32 %v643, %v4562
        %v4638 = vadd.f32 %v646, %v4565
        %v4639 = vadd.f32 %v648, %v4567
        %v4640 = vadd.f32 %v651, %v4570
        %v4641 = vadd.f32 %v653, %v4572
        %v4642 = vadd.f32 %v656, %v4575
        %v4643 = vadd.f32 %v658, %v4577
        %v4644 = vadd.f32 %v661, %v4580
        %v4645 = vadd.f32 %v663, %v4582
        %v4646 = vadd.f32 %v666, %v4585
        %v4647 = vadd.f32 %v668, %v4587
        %v4648 = vadd.f32 %v671, %v4590
        %v4649 = vadd.f32 %v673, %v4592
        %v4650 = vadd.f32 %v676, %v4595
        %v4651 = vadd.f32 %v678, %v4597
        %v4652 = vadd.f32 %v681, %v4600
        %v4653 = vadd.f32 %v683, %v4602
        %v4654 = vadd.f32 %v686, %v4605
        %v4655 = vadd.f32 %v688, %v4607
        %v4656 = vadd.f32 %v691, %v4610
        %v4657 = vadd.f32 %v693, %v4612
        %v4658 = vadd.f32 %v696, %v4615
        %v4659 = vadd.f32 %v698, %v4617
        %v4660 = vadd.f32 %v701, %v4620
        %v4661 = vadd.f32 %v703, %v4622
        %v4662 = vadd.f32 %v706, %v4625
        %v4663 = vadd.f32 %v708, %v4627
        %v4664 = vadd.f32 %v711, %v4630
        %v4665 = vadd.f32 %v713, %v4632
        %4666 = vst [vmem:[%s326] sm:$0xff] %v4634
        %4667 = vst [vmem:[%s326 + $0x8] sm:$0xff] %v4635
        %4668 = vst [vmem:[%s326 + $0x10] sm:$0xff] %v4636
        %4669 = vst [vmem:[%s326 + $0x18] sm:$0xff] %v4637
        %4670 = vst [vmem:[%s326 + $0x20] sm:$0xff] %v4638
        %4671 = vst [vmem:[%s326 + $0x28] sm:$0xff] %v4639
        %4672 = vst [vmem:[%s326 + $0x30] sm:$0xff] %v4640
        %4673 = vst [vmem:[%s326 + $0x38] sm:$0xff] %v4641
        %4674 = vst [vmem:[%s326 + $0x40] sm:$0xff] %v4642
        %4675 = vst [vmem:[%s326 + $0x48] sm:$0xff] %v4643
        %4676 = vst [vmem:[%s326 + $0x50] sm:$0xff] %v4644
        %4677 = vst [vmem:[%s326 + $0x58] sm:$0xff] %v4645
        %4678 = vst [vmem:[%s326 + $0x60] sm:$0xff] %v4646
        %4679 = vst [vmem:[%s326 + $0x68] sm:$0xff] %v4647
        %4680 = vst [vmem:[%s326 + $0x70] sm:$0xff] %v4648
        %4681 = vst [vmem:[%s326 + $0x78] sm:$0xff] %v4649
        %4682 = vst [vmem:[%s326 + $0x80] sm:$0xff] %v4650
        %4683 = vst [vmem:[%s326 + $0x88] sm:$0xff] %v4651
        %4684 = vst [vmem:[%s326 + $0x90] sm:$0xff] %v4652
        %4685 = vst [vmem:[%s326 + $0x98] sm:$0xff] %v4653
        %4686 = vst [vmem:[%s326 + $0xa0] sm:$0xff] %v4654
        %4687 = vst [vmem:[%s326 + $0xa8] sm:$0xff] %v4655
        %4688 = vst [vmem:[%s326 + $0xb0] sm:$0xff] %v4656
        %4689 = vst [vmem:[%s326 + $0xb8] sm:$0xff] %v4657
        %4690 = vst [vmem:[%s326 + $0xc0] sm:$0xff] %v4658
        %4691 = vst [vmem:[%s326 + $0xc8] sm:$0xff] %v4659
        %4692 = vst [vmem:[%s326 + $0xd0] sm:$0xff] %v4660
        %4693 = vst [vmem:[%s326 + $0xd8] sm:$0xff] %v4661
        %4694 = vst [vmem:[%s326 + $0xe0] sm:$0xff] %v4662
        %4695 = vst [vmem:[%s326 + $0xe8] sm:$0xff] %v4663
        %4696 = vst [vmem:[%s326 + $0xf0] sm:$0xff] %v4664
        %4697 = vst [vmem:[%s326 + $0xf8] sm:$0xff] %v4665
        %s4698 = sand.u32 %s205, 1
        %s4699 = scalar_lea.sflag [#allocation4], %s4698
        %s4700 = sand.u32 %s205, 1
        %s4701 = smul.addr %s4700, 256
        %s4702 = scalar_lea.vmem [#allocation3], %s4701
        %p4703 = scmp.lt.s32.totalorder %s24, 1
        %s4704 = scalar_select %p4703, %s24, 1
        %s4705 = smul.addr %s4704, 32
        %s4706 = smul.addr %s4705, 8
        %s4707 = scalar_lea.vmem %s9, %s4706
        // Predicated region
        $region53: #{tpu_custom_call.1} parent=51 // pred_check
          %p4708 = pneg %p215
        $region54: #{tpu_custom_call.1} parent=51 // pred_check_branch
          %4710 = sbr.rel (%p4708) target = $region56
        $region55: #{tpu_custom_call.1} parent=51 // pred_region
          %4712 = vsyncadd %s4699, 0
          %s4713 = smul.addr %s24, 32
          %s4714 = smul.addr %s4713, 8
          %s4715 = scalar_lea.hbm %s8, %s4714
          %s4716 = sshll.u32 %s4702, 4
          %s4717 = int_to_ptr.vmem [resolvable:$true] %s4716
          %s4718 = sshll.u32 %s4715, 4
          %s4719 = int_to_ptr.hbm [resolvable:$true] %s4718
          %4724 = dma.vmem_to_hbm [thread:$0]  %s4717, 4096, %s4719, %s4699, 128, 128, 8
        $region56: #{tpu_custom_call.1} parent=51 // pred_fallthru
          _
        // Predicated region
        $region57: #{tpu_custom_call.1} parent=51 // pred_check
          %p4725 = pneg %p241
        $region58: #{tpu_custom_call.1} parent=51 // pred_check_branch
          %4727 = sbr.rel (%p4725) target = $region60
        $region59: #{tpu_custom_call.1} parent=51 // pred_region
          _
        $region60: #{tpu_custom_call.1} parent=51 // pred_fallthru
          _
      $region52: #{tpu_custom_call.1} parent=5 // pred_fallthru
        _
      %p4728 = scmp.le.s32.totalorder 2, %s19
      // Predicated region
      $region61: #{tpu_custom_call.1} parent=5 // pred_check
        %p4729 = pneg %p4728
      $region62: #{tpu_custom_call.1} parent=5 // pred_check_branch
        %4731 = sbr.rel (%p4729) target = $region64
      $region63: #{tpu_custom_call.1} parent=5 // pred_region
        %s4732 = ssub.s32 %s19, 2
        // Predicated region
        $region65: #{tpu_custom_call.1} parent=63 // pred_check
          %p4733 = pneg %p221
        $region66: #{tpu_custom_call.1} parent=63 // pred_check_branch
          %4735 = sbr.rel (%p4733) target = $region68
        $region67: #{tpu_custom_call.1} parent=63 // pred_region
          %s4736 = sand.u32 %s206, 1
          %s4737 = scalar_lea.sflag [#allocation4], %s4736
          %s4738 = sand.u32 %s206, 1
          %s4739 = smul.addr %s4738, 256
          %s4740 = scalar_lea.vmem [#allocation3], %s4739
          %4742 = dma.done %s4737, 4096
        $region68: #{tpu_custom_call.1} parent=63 // pred_fallthru
          _
        // Predicated region
        $region69: #{tpu_custom_call.1} parent=63 // pred_check
          %p4743 = pneg %p247
        $region70: #{tpu_custom_call.1} parent=63 // pred_check_branch
          %4745 = sbr.rel (%p4743) target = $region72
        $region71: #{tpu_custom_call.1} parent=63 // pred_region
          %p4746 = scmp.lt.s32.totalorder %s25, 1
          %s4747 = scalar_select %p4746, %s25, 1
          %s4748 = smul.addr %s4747, 32
          %s4749 = smul.addr %s4748, 8
          %s4750 = scalar_lea.vmem %s9, %s4749
        $region72: #{tpu_custom_call.1} parent=63 // pred_fallthru
          _
      $region64: #{tpu_custom_call.1} parent=5 // pred_fallthru
        _
    $region6: #{tpu_custom_call.1} parent=1 // loop_footer
      %s23 = sadd.s32 1, %s19
    $region7: #{tpu_custom_call.1} parent=1 // loop_footer_branch
      %18 = sbr.rel target = $region3
    $region8: #{tpu_custom_call.1} parent=1 // loop_exit
      _
    %4751 = vsyncpa [#allocation4], 1
    %s4752 = scalar_lea.sflag [#allocation4], 1
    %4753 = vsyncpa %s4752, 1

</llo_original>
